<compile_context>
chip_gen: v7x
topology: tpu7x:2x2x1
jax: 0.10.0
libtpu: 0.0.40
codegen_flags: <defaults>
</compile_context>

<pallas_src>
import functools

import jax
import jax.numpy as jnp
from jax import lax
from jax.experimental import pallas as pl
from jax.experimental.pallas import tpu as pltpu


# ----------------------------------------------------------------------------
# Fused kernel: qkv projection -> per-head attention -> output projection
# ----------------------------------------------------------------------------
def _fused_attention_kernel(xq_ref, xk_ref, xv_ref, wq_ref, wk_ref, wv_ref,
                            wo_ref, bo_ref, o_ref, acc_ref, *,
                            heads_per_block, dim_head, scale):
    """One (batch item, head tile) step of the whole CustomAttention forward.

    Blocks:
      xq/xk/xv : (1, N, dim)        activations for this batch item
      wq/wk/wv : (width, dim)       rows of W for the heads in this tile
      wo       : (dim, width)       columns of Wo for the heads in this tile
      bo       : (1, dim)           output bias (f32)
      o        : (1, N, dim)        final output (same block for every h tile)
      acc      : (N, dim) f32       VMEM accumulator across head tiles
    """
    h_idx = pl.program_id(1)

    @pl.when(h_idx == 0)
    def _init():
        acc_ref[...] = jnp.zeros_like(acc_ref)

    cd = xq_ref.dtype  # compute dtype (bf16): MXU inputs, f32 accumulation

    def proj(x_ref, w_ref):
        # x @ W^T with W consumed as stored (out, in): contract feature axes.
        return lax.dot_general(
            x_ref[0], w_ref[...],
            dimension_numbers=(((1,), (1,)), ((), ())),
            preferred_element_type=jnp.float32,
        )

    # Projections for the heads of this tile; fold the softmax scale into q
    # while still in f32 (exact for dim_head = power of 4, e.g. 1/8 here).
    q_all = (proj(xq_ref, wq_ref) * scale).astype(cd)        # (N, width)
    k_all = proj(xk_ref, wk_ref).astype(cd)                  # (N, width)
    v_all = proj(xv_ref, wv_ref).astype(cd)                  # (N, width)
    wo_all = wo_ref[...]                                     # (dim, width)

    out_partial = None
    for h in range(heads_per_block):                         # static unroll
        sl = slice(h * dim_head, (h + 1) * dim_head)
        qh, kh, vh = q_all[:, sl], k_all[:, sl], v_all[:, sl]

        # scores: contract last dims (nd,md->nm) -- no transposed copy of k.
        s = lax.dot_general(qh, kh, (((1,), (1,)), ((), ())),
                            preferred_element_type=jnp.float32)   # (N, N) f32
        s = s - jnp.max(s, axis=-1, keepdims=True)
        p = jnp.exp(s)
        p = p * pl.reciprocal(jnp.sum(p, axis=-1, keepdims=True), approx=True)

        oh = lax.dot_general(p.astype(cd), vh, (((1,), (0,)), ((), ())),
                             preferred_element_type=jnp.float32)  # (N, d) f32

        # Output projection for this head's slice of Wo, accumulated in f32.
        contrib = lax.dot_general(oh.astype(cd), wo_all[:, sl],
                                  (((1,), (1,)), ((), ())),
                                  preferred_element_type=jnp.float32)  # (N, dim)
        out_partial = contrib if out_partial is None else out_partial + contrib

    acc_ref[...] += out_partial

    @pl.when(h_idx == pl.num_programs(1) - 1)
    def _finalize():
        # Dropout(p=0.0) == identity.
        o_ref[0] = (acc_ref[...] + bo_ref[...]).astype(o_ref.dtype)


# ----------------------------------------------------------------------------
# Tiling helper
# ----------------------------------------------------------------------------
def _pick_heads_per_block(heads, dim_head, max_lanes=512):
    """Most heads per grid step such that the head-tile width is lane-dense
    (multiple of 128) and at most `max_lanes` wide; falls back to all heads
    (width == inner_dim == full array extent, which BlockSpec also accepts)."""
    best = None
    for h in range(1, heads + 1):
        if heads % h == 0 and (h * dim_head) % 128 == 0 and h * dim_head <= max_lanes:
            best = h
    return best if best is not None else heads


# ----------------------------------------------------------------------------
# CustomAttention forward
# ----------------------------------------------------------------------------
def custom_attention_forward(params, q_in, k_in, v_in, *, heads, dim_head,
                             compute_dtype=jnp.bfloat16):
    B, N, dim = q_in.shape
    inner_dim = heads * dim_head
    scale = dim_head ** (-0.5)
    cd = compute_dtype

    # Cast once outside the kernel: bf16 MXU inputs halve HBM/VMEM traffic on
    # v6e/v7x; bias and all softmax / accumulation math stay f32.
    xq = q_in.astype(cd)
    xk = k_in.astype(cd)
    xv = v_in.astype(cd)
    wq = params["Wq"].astype(cd)
    wk = params["Wk"].astype(cd)
    wv = params["Wv"].astype(cd)
    wo = params["Wo"].astype(cd)
    bo = params["bo"].reshape(1, dim).astype(jnp.float32)

    h_blk = _pick_heads_per_block(heads, dim_head)
    width = h_blk * dim_head
    n_htiles = heads // h_blk

    x_spec = pl.BlockSpec((1, N, dim), lambda b, h: (b, 0, 0))
    wqkv_spec = pl.BlockSpec((width, dim), lambda b, h: (h, 0))   # row slice
    wo_spec = pl.BlockSpec((dim, width), lambda b, h: (0, h))     # col slice
    bo_spec = pl.BlockSpec((1, dim), lambda b, h: (0, 0))

    kernel = functools.partial(
        _fused_attention_kernel,
        heads_per_block=h_blk, dim_head=dim_head, scale=scale)

    out = pl.pallas_call(
        kernel,
        out_shape=jax.ShapeDtypeStruct((B, N, dim), q_in.dtype),
        grid=(B, n_htiles),
        in_specs=[x_spec, x_spec, x_spec,
                  wqkv_spec, wqkv_spec, wqkv_spec,
                  wo_spec, bo_spec],
        out_specs=pl.BlockSpec((1, N, dim), lambda b, h: (b, 0, 0)),
        scratch_shapes=[pltpu.VMEM((N, dim), jnp.float32)],
        compiler_params=pltpu.CompilerParams(
            dimension_semantics=("parallel", "arbitrary")),
    )(xq, xk, xv, wq, wk, wv, wo, bo)
    return out


def reference_forward(params, q_in, k_in, v_in, *, heads, dim_head):
    """Pure-JAX f32 reference matching the PyTorch forward."""
    B, N, dim = q_in.shape
    scale = dim_head ** (-0.5)
    q = q_in @ params["Wq"].T
    k = k_in @ params["Wk"].T
    v = v_in @ params["Wv"].T

    def split(t):
        return jnp.transpose(t.reshape(B, N, heads, dim_head), (0, 2, 1, 3))

    q, k, v = split(q), split(k), split(v)
    dots = jnp.einsum("bhnd,bhmd->bhnm", q, k) * scale
    attn = jax.nn.softmax(dots, axis=-1)
    out = jnp.einsum("bhnm,bhmd->bhnd", attn, v)
    out = jnp.transpose(out, (0, 2, 1, 3)).reshape(B, N, heads * dim_head)
    return out @ params["Wo"].T + params["bo"]


# ----------------------------------------------------------------------------
if __name__ == "__main__":
    # Module hyper-params (consistent with __init__) at small demo shapes.
    dim, heads, dim_head = 32, 8, 64
    inner_dim = heads * dim_head        # 512
    B, N = 2, 8                         # batch, sequence length

    key = jax.random.PRNGKey(0)
    kq, kk, kv, k1, k2, k3, k4, k5 = jax.random.split(key, 8)

    # Linear weights stored PyTorch-style: (out_features, in_features).
    params = {
        "Wq": jax.random.normal(k1, (inner_dim, dim), jnp.float32) * 0.05,
        "Wk": jax.random.normal(k2, (inner_dim, dim), jnp.float32) * 0.05,
        "Wv": jax.random.normal(k3, (inner_dim, dim), jnp.float32) * 0.05,
        "Wo": jax.random.normal(k4, (dim, inner_dim), jnp.float32) * 0.05,
        "bo": jax.random.normal(k5, (dim,), jnp.float32) * 0.05,
    }

    q_in = jax.random.normal(kq, (B, N, dim), jnp.float32)
    k_in = jax.random.normal(kk, (B, N, dim), jnp.float32)
    v_in = jax.random.normal(kv, (B, N, dim), jnp.float32)

    fwd = jax.jit(functools.partial(custom_attention_forward,
                                    heads=heads, dim_head=dim_head))
    out = jax.block_until_ready(fwd(params, q_in, k_in, v_in))

    ref = reference_forward(params, q_in, k_in, v_in,
                            heads=heads, dim_head=dim_head)
    assert out.shape == (B, N, dim)
    # bf16 MXU inputs (f32 accumulation) vs the pure-f32 reference.
    assert jnp.allclose(out, ref, atol=2e-2, rtol=2e-2), "mismatch vs reference"

    print("KERNEL_OK")
</pallas_src>

<mosaic_0001>
module attributes {stable_mosaic.version = 11 : i64} {
  func.func @_fused_attention_kernel(%arg0: i32, %arg1: i32, %arg2: memref<1x8x32xbf16, #tpu.memory_space<vmem>>, %arg3: memref<1x8x32xbf16, #tpu.memory_space<vmem>>, %arg4: memref<1x8x32xbf16, #tpu.memory_space<vmem>>, %arg5: memref<512x32xbf16, #tpu.memory_space<vmem>>, %arg6: memref<512x32xbf16, #tpu.memory_space<vmem>>, %arg7: memref<512x32xbf16, #tpu.memory_space<vmem>>, %arg8: memref<32x512xbf16, #tpu.memory_space<vmem>>, %arg9: memref<1x32xf32, #tpu.memory_space<vmem>>, %arg10: memref<1x8x32xf32, #tpu.memory_space<vmem>>, %arg11: memref<8x32xf32, #tpu.memory_space<vmem>>) attributes {dimension_semantics = [#tpu.dimension_semantics<parallel>, #tpu.dimension_semantics<arbitrary>], iteration_bounds = array<i64: 2, 1>, scalar_prefetch = 0 : i64, scratch_operands = 1 : i64, tpu.core_type = #tpu.core_type<tc>, window_params = [{transform_indices = @transform_0, window_bounds = array<i64: 1, 8, 32>}, {transform_indices = @transform_1, window_bounds = array<i64: 1, 8, 32>}, {transform_indices = @transform_2, window_bounds = array<i64: 1, 8, 32>}, {transform_indices = @transform_3, window_bounds = array<i64: 512, 32>}, {transform_indices = @transform_4, window_bounds = array<i64: 512, 32>}, {transform_indices = @transform_5, window_bounds = array<i64: 512, 32>}, {transform_indices = @transform_6, window_bounds = array<i64: 32, 512>}, {pipeline_mode = #tpu.pipeline_mode<synchronous>, transform_indices = @transform_7, window_bounds = array<i64: 1, 32>}, {transform_indices = @transform_8, window_bounds = array<i64: 1, 8, 32>}]} {
    %c0_i32 = arith.constant 0 : i32
    %0 = arith.cmpi eq, %arg1, %c0_i32 : i32
    %1 = arith.extui %0 : i1 to i32
    %c0_i32_0 = arith.constant 0 : i32
    %2 = arith.cmpi ne, %1, %c0_i32_0 : i32
    scf.if %2 {
      %cst_66 = arith.constant 0.000000e+00 : f32
      %186 = vector.broadcast %cst_66 : f32 to vector<8x32xf32>
      %c0_67 = arith.constant 0 : index
      %c0_68 = arith.constant 0 : index
      %187 = vector.load %arg11[%c0_67, %c0_68] : memref<8x32xf32, #tpu.memory_space<vmem>>, vector<8x32xf32>
      tpu.vector_store %arg11[%c0_67, %c0_68], %186 {strides = array<i32>} : memref<8x32xf32, #tpu.memory_space<vmem>>, vector<8x32xf32>,
    } else {
    }
    %c0 = arith.constant 0 : index
    %c0_1 = arith.constant 0 : index
    %c0_2 = arith.constant 0 : index
    %3 = vector.load %arg2[%c0, %c0_1, %c0_2] : memref<1x8x32xbf16, #tpu.memory_space<vmem>>, vector<1x8x32xbf16>
    %4 = vector.shape_cast %3 : vector<1x8x32xbf16> to vector<8x32xbf16>
    %c0_3 = arith.constant 0 : index
    %c0_4 = arith.constant 0 : index
    %5 = vector.load %arg5[%c0_3, %c0_4] : memref<512x32xbf16, #tpu.memory_space<vmem>>, vector<512x32xbf16>
    %cst = arith.constant dense<0.000000e+00> : vector<8x512xf32>
    %6 = tpu.matmul %4, %5, %cst {dimension_numbers = #tpu.dot_dimension_numbers<[1], [1], [0], [0], [0, 0, 1, 0], [], []>} : vector<8x32xbf16>, vector<512x32xbf16>, vector<8x512xf32> -> vector<8x512xf32>
    %cst_5 = arith.constant 1.250000e-01 : f32
    %7 = vector.broadcast %cst_5 : f32 to vector<8x512xf32>
    %8 = arith.mulf %6, %7 : vector<8x512xf32>
    %9 = arith.truncf %8 : vector<8x512xf32> to vector<8x512xbf16>
    %c0_6 = arith.constant 0 : index
    %c0_7 = arith.constant 0 : index
    %c0_8 = arith.constant 0 : index
    %10 = vector.load %arg3[%c0_6, %c0_7, %c0_8] : memref<1x8x32xbf16, #tpu.memory_space<vmem>>, vector<1x8x32xbf16>
    %11 = vector.shape_cast %10 : vector<1x8x32xbf16> to vector<8x32xbf16>
    %c0_9 = arith.constant 0 : index
    %c0_10 = arith.constant 0 : index
    %12 = vector.load %arg6[%c0_9, %c0_10] : memref<512x32xbf16, #tpu.memory_space<vmem>>, vector<512x32xbf16>
    %cst_11 = arith.constant dense<0.000000e+00> : vector<8x512xf32>
    %13 = tpu.matmul %11, %12, %cst_11 {dimension_numbers = #tpu.dot_dimension_numbers<[1], [1], [0], [0], [0, 0, 1, 0], [], []>} : vector<8x32xbf16>, vector<512x32xbf16>, vector<8x512xf32> -> vector<8x512xf32>
    %14 = arith.truncf %13 : vector<8x512xf32> to vector<8x512xbf16>
    %c0_12 = arith.constant 0 : index
    %c0_13 = arith.constant 0 : index
    %c0_14 = arith.constant 0 : index
    %15 = vector.load %arg4[%c0_12, %c0_13, %c0_14] : memref<1x8x32xbf16, #tpu.memory_space<vmem>>, vector<1x8x32xbf16>
    %16 = vector.shape_cast %15 : vector<1x8x32xbf16> to vector<8x32xbf16>
    %c0_15 = arith.constant 0 : index
    %c0_16 = arith.constant 0 : index
    %17 = vector.load %arg7[%c0_15, %c0_16] : memref<512x32xbf16, #tpu.memory_space<vmem>>, vector<512x32xbf16>
    %cst_17 = arith.constant dense<0.000000e+00> : vector<8x512xf32>
    %18 = tpu.matmul %16, %17, %cst_17 {dimension_numbers = #tpu.dot_dimension_numbers<[1], [1], [0], [0], [0, 0, 1, 0], [], []>} : vector<8x32xbf16>, vector<512x32xbf16>, vector<8x512xf32> -> vector<8x512xf32>
    %19 = arith.truncf %18 : vector<8x512xf32> to vector<8x512xbf16>
    %c0_18 = arith.constant 0 : index
    %c0_19 = arith.constant 0 : index
    %20 = vector.load %arg8[%c0_18, %c0_19] : memref<32x512xbf16, #tpu.memory_space<vmem>>, vector<32x512xbf16>
    %21 = vector.extract_strided_slice %9 {offsets = [0, 0], sizes = [8, 64], strides = [1, 1]} : vector<8x512xbf16> to vector<8x64xbf16>
    %22 = vector.extract_strided_slice %14 {offsets = [0, 0], sizes = [8, 64], strides = [1, 1]} : vector<8x512xbf16> to vector<8x64xbf16>
    %23 = vector.extract_strided_slice %19 {offsets = [0, 0], sizes = [8, 64], strides = [1, 1]} : vector<8x512xbf16> to vector<8x64xbf16>
    %cst_20 = arith.constant dense<0.000000e+00> : vector<8x8xf32>
    %24 = tpu.matmul %21, %22, %cst_20 {dimension_numbers = #tpu.dot_dimension_numbers<[1], [1], [0], [0], [0, 0, 1, 0], [], []>} : vector<8x64xbf16>, vector<8x64xbf16>, vector<8x8xf32> -> vector<8x8xf32>
    %cst_21 = arith.constant dense<0xFF800000> : vector<8xf32>
    %25 = vector.multi_reduction <maximumf>, %24, %cst_21 [1] : vector<8x8xf32> to vector<8xf32>
    %26 = vector.shape_cast %25 : vector<8xf32> to vector<8x1xf32>
    %27 = vector.broadcast %26 : vector<8x1xf32> to vector<8x8xf32>
    %28 = arith.subf %24, %27 : vector<8x8xf32>
    %29 = math.exp %28 : vector<8x8xf32>
    %cst_22 = arith.constant dense<0.000000e+00> : vector<8xf32>
    %30 = vector.multi_reduction <add>, %29, %cst_22 [1] : vector<8x8xf32> to vector<8xf32>
    %31 = vector.shape_cast %30 : vector<8xf32> to vector<8x1xf32>
    %32 = tpu.reciprocal %31 {approx = true} : vector<8x1xf32> -> vector<8x1xf32>
    %33 = vector.broadcast %32 : vector<8x1xf32> to vector<8x8xf32>
    %34 = arith.mulf %29, %33 : vector<8x8xf32>
    %35 = arith.truncf %34 : vector<8x8xf32> to vector<8x8xbf16>
    %cst_23 = arith.constant dense<0.000000e+00> : vector<8x64xf32>
    %36 = tpu.matmul %35, %23, %cst_23 {dimension_numbers = #tpu.dot_dimension_numbers<[1], [0], [0], [1], [0, 0, 1, 1], [], []>} : vector<8x8xbf16>, vector<8x64xbf16>, vector<8x64xf32> -> vector<8x64xf32>
    %37 = arith.truncf %36 : vector<8x64xf32> to vector<8x64xbf16>
    %38 = vector.extract_strided_slice %20 {offsets = [0, 0], sizes = [32, 64], strides = [1, 1]} : vector<32x512xbf16> to vector<32x64xbf16>
    %cst_24 = arith.constant dense<0.000000e+00> : vector<8x32xf32>
    %39 = tpu.matmul %37, %38, %cst_24 {dimension_numbers = #tpu.dot_dimension_numbers<[1], [1], [0], [0], [0, 0, 1, 0], [], []>} : vector<8x64xbf16>, vector<32x64xbf16>, vector<8x32xf32> -> vector<8x32xf32>
    %40 = vector.extract_strided_slice %9 {offsets = [0, 64], sizes = [8, 64], strides = [1, 1]} : vector<8x512xbf16> to vector<8x64xbf16>
    %41 = vector.extract_strided_slice %14 {offsets = [0, 64], sizes = [8, 64], strides = [1, 1]} : vector<8x512xbf16> to vector<8x64xbf16>
    %42 = vector.extract_strided_slice %19 {offsets = [0, 64], sizes = [8, 64], strides = [1, 1]} : vector<8x512xbf16> to vector<8x64xbf16>
    %cst_25 = arith.constant dense<0.000000e+00> : vector<8x8xf32>
    %43 = tpu.matmul %40, %41, %cst_25 {dimension_numbers = #tpu.dot_dimension_numbers<[1], [1], [0], [0], [0, 0, 1, 0], [], []>} : vector<8x64xbf16>, vector<8x64xbf16>, vector<8x8xf32> -> vector<8x8xf32>
    %cst_26 = arith.constant dense<0xFF800000> : vector<8xf32>
    %44 = vector.multi_reduction <maximumf>, %43, %cst_26 [1] : vector<8x8xf32> to vector<8xf32>
    %45 = vector.shape_cast %44 : vector<8xf32> to vector<8x1xf32>
    %46 = vector.broadcast %45 : vector<8x1xf32> to vector<8x8xf32>
    %47 = arith.subf %43, %46 : vector<8x8xf32>
    %48 = math.exp %47 : vector<8x8xf32>
    %cst_27 = arith.constant dense<0.000000e+00> : vector<8xf32>
    %49 = vector.multi_reduction <add>, %48, %cst_27 [1] : vector<8x8xf32> to vector<8xf32>
    %50 = vector.shape_cast %49 : vector<8xf32> to vector<8x1xf32>
    %51 = tpu.reciprocal %50 {approx = true} : vector<8x1xf32> -> vector<8x1xf32>
    %52 = vector.broadcast %51 : vector<8x1xf32> to vector<8x8xf32>
    %53 = arith.mulf %48, %52 : vector<8x8xf32>
    %54 = arith.truncf %53 : vector<8x8xf32> to vector<8x8xbf16>
    %cst_28 = arith.constant dense<0.000000e+00> : vector<8x64xf32>
    %55 = tpu.matmul %54, %42, %cst_28 {dimension_numbers = #tpu.dot_dimension_numbers<[1], [0], [0], [1], [0, 0, 1, 1], [], []>} : vector<8x8xbf16>, vector<8x64xbf16>, vector<8x64xf32> -> vector<8x64xf32>
    %56 = arith.truncf %55 : vector<8x64xf32> to vector<8x64xbf16>
    %57 = vector.extract_strided_slice %20 {offsets = [0, 64], sizes = [32, 64], strides = [1, 1]} : vector<32x512xbf16> to vector<32x64xbf16>
    %cst_29 = arith.constant dense<0.000000e+00> : vector<8x32xf32>
    %58 = tpu.matmul %56, %57, %cst_29 {dimension_numbers = #tpu.dot_dimension_numbers<[1], [1], [0], [0], [0, 0, 1, 0], [], []>} : vector<8x64xbf16>, vector<32x64xbf16>, vector<8x32xf32> -> vector<8x32xf32>
    %59 = arith.addf %39, %58 : vector<8x32xf32>
    %60 = vector.extract_strided_slice %9 {offsets = [0, 128], sizes = [8, 64], strides = [1, 1]} : vector<8x512xbf16> to vector<8x64xbf16>
    %61 = vector.extract_strided_slice %14 {offsets = [0, 128], sizes = [8, 64], strides = [1, 1]} : vector<8x512xbf16> to vector<8x64xbf16>
    %62 = vector.extract_strided_slice %19 {offsets = [0, 128], sizes = [8, 64], strides = [1, 1]} : vector<8x512xbf16> to vector<8x64xbf16>
    %cst_30 = arith.constant dense<0.000000e+00> : vector<8x8xf32>
    %63 = tpu.matmul %60, %61, %cst_30 {dimension_numbers = #tpu.dot_dimension_numbers<[1], [1], [0], [0], [0, 0, 1, 0], [], []>} : vector<8x64xbf16>, vector<8x64xbf16>, vector<8x8xf32> -> vector<8x8xf32>
    %cst_31 = arith.constant dense<0xFF800000> : vector<8xf32>
    %64 = vector.multi_reduction <maximumf>, %63, %cst_31 [1] : vector<8x8xf32> to vector<8xf32>
    %65 = vector.shape_cast %64 : vector<8xf32> to vector<8x1xf32>
    %66 = vector.broadcast %65 : vector<8x1xf32> to vector<8x8xf32>
    %67 = arith.subf %63, %66 : vector<8x8xf32>
    %68 = math.exp %67 : vector<8x8xf32>
    %cst_32 = arith.constant dense<0.000000e+00> : vector<8xf32>
    %69 = vector.multi_reduction <add>, %68, %cst_32 [1] : vector<8x8xf32> to vector<8xf32>
    %70 = vector.shape_cast %69 : vector<8xf32> to vector<8x1xf32>
    %71 = tpu.reciprocal %70 {approx = true} : vector<8x1xf32> -> vector<8x1xf32>
    %72 = vector.broadcast %71 : vector<8x1xf32> to vector<8x8xf32>
    %73 = arith.mulf %68, %72 : vector<8x8xf32>
    %74 = arith.truncf %73 : vector<8x8xf32> to vector<8x8xbf16>
    %cst_33 = arith.constant dense<0.000000e+00> : vector<8x64xf32>
    %75 = tpu.matmul %74, %62, %cst_33 {dimension_numbers = #tpu.dot_dimension_numbers<[1], [0], [0], [1], [0, 0, 1, 1], [], []>} : vector<8x8xbf16>, vector<8x64xbf16>, vector<8x64xf32> -> vector<8x64xf32>
    %76 = arith.truncf %75 : vector<8x64xf32> to vector<8x64xbf16>
    %77 = vector.extract_strided_slice %20 {offsets = [0, 128], sizes = [32, 64], strides = [1, 1]} : vector<32x512xbf16> to vector<32x64xbf16>
    %cst_34 = arith.constant dense<0.000000e+00> : vector<8x32xf32>
    %78 = tpu.matmul %76, %77, %cst_34 {dimension_numbers = #tpu.dot_dimension_numbers<[1], [1], [0], [0], [0, 0, 1, 0], [], []>} : vector<8x64xbf16>, vector<32x64xbf16>, vector<8x32xf32> -> vector<8x32xf32>
    %79 = arith.addf %59, %78 : vector<8x32xf32>
    %80 = vector.extract_strided_slice %9 {offsets = [0, 192], sizes = [8, 64], strides = [1, 1]} : vector<8x512xbf16> to vector<8x64xbf16>
    %81 = vector.extract_strided_slice %14 {offsets = [0, 192], sizes = [8, 64], strides = [1, 1]} : vector<8x512xbf16> to vector<8x64xbf16>
    %82 = vector.extract_strided_slice %19 {offsets = [0, 192], sizes = [8, 64], strides = [1, 1]} : vector<8x512xbf16> to vector<8x64xbf16>
    %cst_35 = arith.constant dense<0.000000e+00> : vector<8x8xf32>
    %83 = tpu.matmul %80, %81, %cst_35 {dimension_numbers = #tpu.dot_dimension_numbers<[1], [1], [0], [0], [0, 0, 1, 0], [], []>} : vector<8x64xbf16>, vector<8x64xbf16>, vector<8x8xf32> -> vector<8x8xf32>
    %cst_36 = arith.constant dense<0xFF800000> : vector<8xf32>
    %84 = vector.multi_reduction <maximumf>, %83, %cst_36 [1] : vector<8x8xf32> to vector<8xf32>
    %85 = vector.shape_cast %84 : vector<8xf32> to vector<8x1xf32>
    %86 = vector.broadcast %85 : vector<8x1xf32> to vector<8x8xf32>
    %87 = arith.subf %83, %86 : vector<8x8xf32>
    %88 = math.exp %87 : vector<8x8xf32>
    %cst_37 = arith.constant dense<0.000000e+00> : vector<8xf32>
    %89 = vector.multi_reduction <add>, %88, %cst_37 [1] : vector<8x8xf32> to vector<8xf32>
    %90 = vector.shape_cast %89 : vector<8xf32> to vector<8x1xf32>
    %91 = tpu.reciprocal %90 {approx = true} : vector<8x1xf32> -> vector<8x1xf32>
    %92 = vector.broadcast %91 : vector<8x1xf32> to vector<8x8xf32>
    %93 = arith.mulf %88, %92 : vector<8x8xf32>
    %94 = arith.truncf %93 : vector<8x8xf32> to vector<8x8xbf16>
    %cst_38 = arith.constant dense<0.000000e+00> : vector<8x64xf32>
    %95 = tpu.matmul %94, %82, %cst_38 {dimension_numbers = #tpu.dot_dimension_numbers<[1], [0], [0], [1], [0, 0, 1, 1], [], []>} : vector<8x8xbf16>, vector<8x64xbf16>, vector<8x64xf32> -> vector<8x64xf32>
    %96 = arith.truncf %95 : vector<8x64xf32> to vector<8x64xbf16>
    %97 = vector.extract_strided_slice %20 {offsets = [0, 192], sizes = [32, 64], strides = [1, 1]} : vector<32x512xbf16> to vector<32x64xbf16>
    %cst_39 = arith.constant dense<0.000000e+00> : vector<8x32xf32>
    %98 = tpu.matmul %96, %97, %cst_39 {dimension_numbers = #tpu.dot_dimension_numbers<[1], [1], [0], [0], [0, 0, 1, 0], [], []>} : vector<8x64xbf16>, vector<32x64xbf16>, vector<8x32xf32> -> vector<8x32xf32>
    %99 = arith.addf %79, %98 : vector<8x32xf32>
    %100 = vector.extract_strided_slice %9 {offsets = [0, 256], sizes = [8, 64], strides = [1, 1]} : vector<8x512xbf16> to vector<8x64xbf16>
    %101 = vector.extract_strided_slice %14 {offsets = [0, 256], sizes = [8, 64], strides = [1, 1]} : vector<8x512xbf16> to vector<8x64xbf16>
    %102 = vector.extract_strided_slice %19 {offsets = [0, 256], sizes = [8, 64], strides = [1, 1]} : vector<8x512xbf16> to vector<8x64xbf16>
    %cst_40 = arith.constant dense<0.000000e+00> : vector<8x8xf32>
    %103 = tpu.matmul %100, %101, %cst_40 {dimension_numbers = #tpu.dot_dimension_numbers<[1], [1], [0], [0], [0, 0, 1, 0], [], []>} : vector<8x64xbf16>, vector<8x64xbf16>, vector<8x8xf32> -> vector<8x8xf32>
    %cst_41 = arith.constant dense<0xFF800000> : vector<8xf32>
    %104 = vector.multi_reduction <maximumf>, %103, %cst_41 [1] : vector<8x8xf32> to vector<8xf32>
    %105 = vector.shape_cast %104 : vector<8xf32> to vector<8x1xf32>
    %106 = vector.broadcast %105 : vector<8x1xf32> to vector<8x8xf32>
    %107 = arith.subf %103, %106 : vector<8x8xf32>
    %108 = math.exp %107 : vector<8x8xf32>
    %cst_42 = arith.constant dense<0.000000e+00> : vector<8xf32>
    %109 = vector.multi_reduction <add>, %108, %cst_42 [1] : vector<8x8xf32> to vector<8xf32>
    %110 = vector.shape_cast %109 : vector<8xf32> to vector<8x1xf32>
    %111 = tpu.reciprocal %110 {approx = true} : vector<8x1xf32> -> vector<8x1xf32>
    %112 = vector.broadcast %111 : vector<8x1xf32> to vector<8x8xf32>
    %113 = arith.mulf %108, %112 : vector<8x8xf32>
    %114 = arith.truncf %113 : vector<8x8xf32> to vector<8x8xbf16>
    %cst_43 = arith.constant dense<0.000000e+00> : vector<8x64xf32>
    %115 = tpu.matmul %114, %102, %cst_43 {dimension_numbers = #tpu.dot_dimension_numbers<[1], [0], [0], [1], [0, 0, 1, 1], [], []>} : vector<8x8xbf16>, vector<8x64xbf16>, vector<8x64xf32> -> vector<8x64xf32>
    %116 = arith.truncf %115 : vector<8x64xf32> to vector<8x64xbf16>
    %117 = vector.extract_strided_slice %20 {offsets = [0, 256], sizes = [32, 64], strides = [1, 1]} : vector<32x512xbf16> to vector<32x64xbf16>
    %cst_44 = arith.constant dense<0.000000e+00> : vector<8x32xf32>
    %118 = tpu.matmul %116, %117, %cst_44 {dimension_numbers = #tpu.dot_dimension_numbers<[1], [1], [0], [0], [0, 0, 1, 0], [], []>} : vector<8x64xbf16>, vector<32x64xbf16>, vector<8x32xf32> -> vector<8x32xf32>
    %119 = arith.addf %99, %118 : vector<8x32xf32>
    %120 = vector.extract_strided_slice %9 {offsets = [0, 320], sizes = [8, 64], strides = [1, 1]} : vector<8x512xbf16> to vector<8x64xbf16>
    %121 = vector.extract_strided_slice %14 {offsets = [0, 320], sizes = [8, 64], strides = [1, 1]} : vector<8x512xbf16> to vector<8x64xbf16>
    %122 = vector.extract_strided_slice %19 {offsets = [0, 320], sizes = [8, 64], strides = [1, 1]} : vector<8x512xbf16> to vector<8x64xbf16>
    %cst_45 = arith.constant dense<0.000000e+00> : vector<8x8xf32>
    %123 = tpu.matmul %120, %121, %cst_45 {dimension_numbers = #tpu.dot_dimension_numbers<[1], [1], [0], [0], [0, 0, 1, 0], [], []>} : vector<8x64xbf16>, vector<8x64xbf16>, vector<8x8xf32> -> vector<8x8xf32>
    %cst_46 = arith.constant dense<0xFF800000> : vector<8xf32>
    %124 = vector.multi_reduction <maximumf>, %123, %cst_46 [1] : vector<8x8xf32> to vector<8xf32>
    %125 = vector.shape_cast %124 : vector<8xf32> to vector<8x1xf32>
    %126 = vector.broadcast %125 : vector<8x1xf32> to vector<8x8xf32>
    %127 = arith.subf %123, %126 : vector<8x8xf32>
    %128 = math.exp %127 : vector<8x8xf32>
    %cst_47 = arith.constant dense<0.000000e+00> : vector<8xf32>
    %129 = vector.multi_reduction <add>, %128, %cst_47 [1] : vector<8x8xf32> to vector<8xf32>
    %130 = vector.shape_cast %129 : vector<8xf32> to vector<8x1xf32>
    %131 = tpu.reciprocal %130 {approx = true} : vector<8x1xf32> -> vector<8x1xf32>
    %132 = vector.broadcast %131 : vector<8x1xf32> to vector<8x8xf32>
    %133 = arith.mulf %128, %132 : vector<8x8xf32>
    %134 = arith.truncf %133 : vector<8x8xf32> to vector<8x8xbf16>
    %cst_48 = arith.constant dense<0.000000e+00> : vector<8x64xf32>
    %135 = tpu.matmul %134, %122, %cst_48 {dimension_numbers = #tpu.dot_dimension_numbers<[1], [0], [0], [1], [0, 0, 1, 1], [], []>} : vector<8x8xbf16>, vector<8x64xbf16>, vector<8x64xf32> -> vector<8x64xf32>
    %136 = arith.truncf %135 : vector<8x64xf32> to vector<8x64xbf16>
    %137 = vector.extract_strided_slice %20 {offsets = [0, 320], sizes = [32, 64], strides = [1, 1]} : vector<32x512xbf16> to vector<32x64xbf16>
    %cst_49 = arith.constant dense<0.000000e+00> : vector<8x32xf32>
    %138 = tpu.matmul %136, %137, %cst_49 {dimension_numbers = #tpu.dot_dimension_numbers<[1], [1], [0], [0], [0, 0, 1, 0], [], []>} : vector<8x64xbf16>, vector<32x64xbf16>, vector<8x32xf32> -> vector<8x32xf32>
    %139 = arith.addf %119, %138 : vector<8x32xf32>
    %140 = vector.extract_strided_slice %9 {offsets = [0, 384], sizes = [8, 64], strides = [1, 1]} : vector<8x512xbf16> to vector<8x64xbf16>
    %141 = vector.extract_strided_slice %14 {offsets = [0, 384], sizes = [8, 64], strides = [1, 1]} : vector<8x512xbf16> to vector<8x64xbf16>
    %142 = vector.extract_strided_slice %19 {offsets = [0, 384], sizes = [8, 64], strides = [1, 1]} : vector<8x512xbf16> to vector<8x64xbf16>
    %cst_50 = arith.constant dense<0.000000e+00> : vector<8x8xf32>
    %143 = tpu.matmul %140, %141, %cst_50 {dimension_numbers = #tpu.dot_dimension_numbers<[1], [1], [0], [0], [0, 0, 1, 0], [], []>} : vector<8x64xbf16>, vector<8x64xbf16>, vector<8x8xf32> -> vector<8x8xf32>
    %cst_51 = arith.constant dense<0xFF800000> : vector<8xf32>
    %144 = vector.multi_reduction <maximumf>, %143, %cst_51 [1] : vector<8x8xf32> to vector<8xf32>
    %145 = vector.shape_cast %144 : vector<8xf32> to vector<8x1xf32>
    %146 = vector.broadcast %145 : vector<8x1xf32> to vector<8x8xf32>
    %147 = arith.subf %143, %146 : vector<8x8xf32>
    %148 = math.exp %147 : vector<8x8xf32>
    %cst_52 = arith.constant dense<0.000000e+00> : vector<8xf32>
    %149 = vector.multi_reduction <add>, %148, %cst_52 [1] : vector<8x8xf32> to vector<8xf32>
    %150 = vector.shape_cast %149 : vector<8xf32> to vector<8x1xf32>
    %151 = tpu.reciprocal %150 {approx = true} : vector<8x1xf32> -> vector<8x1xf32>
    %152 = vector.broadcast %151 : vector<8x1xf32> to vector<8x8xf32>
    %153 = arith.mulf %148, %152 : vector<8x8xf32>
    %154 = arith.truncf %153 : vector<8x8xf32> to vector<8x8xbf16>
    %cst_53 = arith.constant dense<0.000000e+00> : vector<8x64xf32>
    %155 = tpu.matmul %154, %142, %cst_53 {dimension_numbers = #tpu.dot_dimension_numbers<[1], [0], [0], [1], [0, 0, 1, 1], [], []>} : vector<8x8xbf16>, vector<8x64xbf16>, vector<8x64xf32> -> vector<8x64xf32>
    %156 = arith.truncf %155 : vector<8x64xf32> to vector<8x64xbf16>
    %157 = vector.extract_strided_slice %20 {offsets = [0, 384], sizes = [32, 64], strides = [1, 1]} : vector<32x512xbf16> to vector<32x64xbf16>
    %cst_54 = arith.constant dense<0.000000e+00> : vector<8x32xf32>
    %158 = tpu.matmul %156, %157, %cst_54 {dimension_numbers = #tpu.dot_dimension_numbers<[1], [1], [0], [0], [0, 0, 1, 0], [], []>} : vector<8x64xbf16>, vector<32x64xbf16>, vector<8x32xf32> -> vector<8x32xf32>
    %159 = arith.addf %139, %158 : vector<8x32xf32>
    %160 = vector.extract_strided_slice %9 {offsets = [0, 448], sizes = [8, 64], strides = [1, 1]} : vector<8x512xbf16> to vector<8x64xbf16>
    %161 = vector.extract_strided_slice %14 {offsets = [0, 448], sizes = [8, 64], strides = [1, 1]} : vector<8x512xbf16> to vector<8x64xbf16>
    %162 = vector.extract_strided_slice %19 {offsets = [0, 448], sizes = [8, 64], strides = [1, 1]} : vector<8x512xbf16> to vector<8x64xbf16>
    %cst_55 = arith.constant dense<0.000000e+00> : vector<8x8xf32>
    %163 = tpu.matmul %160, %161, %cst_55 {dimension_numbers = #tpu.dot_dimension_numbers<[1], [1], [0], [0], [0, 0, 1, 0], [], []>} : vector<8x64xbf16>, vector<8x64xbf16>, vector<8x8xf32> -> vector<8x8xf32>
    %cst_56 = arith.constant dense<0xFF800000> : vector<8xf32>
    %164 = vector.multi_reduction <maximumf>, %163, %cst_56 [1] : vector<8x8xf32> to vector<8xf32>
    %165 = vector.shape_cast %164 : vector<8xf32> to vector<8x1xf32>
    %166 = vector.broadcast %165 : vector<8x1xf32> to vector<8x8xf32>
    %167 = arith.subf %163, %166 : vector<8x8xf32>
    %168 = math.exp %167 : vector<8x8xf32>
    %cst_57 = arith.constant dense<0.000000e+00> : vector<8xf32>
    %169 = vector.multi_reduction <add>, %168, %cst_57 [1] : vector<8x8xf32> to vector<8xf32>
    %170 = vector.shape_cast %169 : vector<8xf32> to vector<8x1xf32>
    %171 = tpu.reciprocal %170 {approx = true} : vector<8x1xf32> -> vector<8x1xf32>
    %172 = vector.broadcast %171 : vector<8x1xf32> to vector<8x8xf32>
    %173 = arith.mulf %168, %172 : vector<8x8xf32>
    %174 = arith.truncf %173 : vector<8x8xf32> to vector<8x8xbf16>
    %cst_58 = arith.constant dense<0.000000e+00> : vector<8x64xf32>
    %175 = tpu.matmul %174, %162, %cst_58 {dimension_numbers = #tpu.dot_dimension_numbers<[1], [0], [0], [1], [0, 0, 1, 1], [], []>} : vector<8x8xbf16>, vector<8x64xbf16>, vector<8x64xf32> -> vector<8x64xf32>
    %176 = arith.truncf %175 : vector<8x64xf32> to vector<8x64xbf16>
    %177 = vector.extract_strided_slice %20 {offsets = [0, 448], sizes = [32, 64], strides = [1, 1]} : vector<32x512xbf16> to vector<32x64xbf16>
    %cst_59 = arith.constant dense<0.000000e+00> : vector<8x32xf32>
    %178 = tpu.matmul %176, %177, %cst_59 {dimension_numbers = #tpu.dot_dimension_numbers<[1], [1], [0], [0], [0, 0, 1, 0], [], []>} : vector<8x64xbf16>, vector<32x64xbf16>, vector<8x32xf32> -> vector<8x32xf32>
    %179 = arith.addf %159, %178 : vector<8x32xf32>
    %c0_60 = arith.constant 0 : index
    %c0_61 = arith.constant 0 : index
    %180 = vector.load %arg11[%c0_60, %c0_61] : memref<8x32xf32, #tpu.memory_space<vmem>>, vector<8x32xf32>
    %181 = arith.addf %180, %179 : vector<8x32xf32>
    %c0_62 = arith.constant 0 : index
    %c0_63 = arith.constant 0 : index
    %182 = vector.load %arg11[%c0_62, %c0_63] : memref<8x32xf32, #tpu.memory_space<vmem>>, vector<8x32xf32>
    tpu.vector_store %arg11[%c0_62, %c0_63], %181 {strides = array<i32>} : memref<8x32xf32, #tpu.memory_space<vmem>>, vector<8x32xf32>,
    %c0_i32_64 = arith.constant 0 : i32
    %183 = arith.cmpi eq, %arg1, %c0_i32_64 : i32
    %184 = arith.extui %183 : i1 to i32
    %c0_i32_65 = arith.constant 0 : i32
    %185 = arith.cmpi ne, %184, %c0_i32_65 : i32
    scf.if %185 {
      %c0_66 = arith.constant 0 : index
      %c0_67 = arith.constant 0 : index
      %186 = vector.load %arg11[%c0_66, %c0_67] : memref<8x32xf32, #tpu.memory_space<vmem>>, vector<8x32xf32>
      %c0_68 = arith.constant 0 : index
      %c0_69 = arith.constant 0 : index
      %187 = vector.load %arg9[%c0_68, %c0_69] : memref<1x32xf32, #tpu.memory_space<vmem>>, vector<1x32xf32>
      %188 = vector.broadcast %187 : vector<1x32xf32> to vector<8x32xf32>
      %189 = arith.addf %186, %188 : vector<8x32xf32>
      %c0_70 = arith.constant 0 : index
      %c0_71 = arith.constant 0 : index
      %c0_72 = arith.constant 0 : index
      %190 = vector.load %arg10[%c0_70, %c0_71, %c0_72] : memref<1x8x32xf32, #tpu.memory_space<vmem>>, vector<1x8x32xf32>
      %191 = vector.shape_cast %190 : vector<1x8x32xf32> to vector<8x32xf32>
      %192 = vector.shape_cast %189 : vector<8x32xf32> to vector<1x8x32xf32>
      tpu.vector_store %arg10[%c0_70, %c0_71, %c0_72], %192 {strides = array<i32>} : memref<1x8x32xf32, #tpu.memory_space<vmem>>, vector<1x8x32xf32>,
    } else {
    }
    return
  }
  func.func @transform_0(%arg0: i32, %arg1: i32) -> (i32, i32, i32) {
    %c0_i32 = arith.constant 0 : i32
    %c0_i32_0 = arith.constant 0 : i32
    %c0_i32_1 = arith.constant 0 : i32
    return %arg0, %c0_i32, %c0_i32_0 : i32, i32, i32
  }
  func.func @transform_1(%arg0: i32, %arg1: i32) -> (i32, i32, i32) {
    %c0_i32 = arith.constant 0 : i32
    %c0_i32_0 = arith.constant 0 : i32
    %c0_i32_1 = arith.constant 0 : i32
    return %arg0, %c0_i32, %c0_i32_0 : i32, i32, i32
  }
  func.func @transform_2(%arg0: i32, %arg1: i32) -> (i32, i32, i32) {
    %c0_i32 = arith.constant 0 : i32
    %c0_i32_0 = arith.constant 0 : i32
    %c0_i32_1 = arith.constant 0 : i32
    return %arg0, %c0_i32, %c0_i32_0 : i32, i32, i32
  }
  func.func @transform_3(%arg0: i32, %arg1: i32) -> (i32, i32) {
    %c0_i32 = arith.constant 0 : i32
    %c0_i32_0 = arith.constant 0 : i32
    return %arg1, %c0_i32 : i32, i32
  }
  func.func @transform_4(%arg0: i32, %arg1: i32) -> (i32, i32) {
    %c0_i32 = arith.constant 0 : i32
    %c0_i32_0 = arith.constant 0 : i32
    return %arg1, %c0_i32 : i32, i32
  }
  func.func @transform_5(%arg0: i32, %arg1: i32) -> (i32, i32) {
    %c0_i32 = arith.constant 0 : i32
    %c0_i32_0 = arith.constant 0 : i32
    return %arg1, %c0_i32 : i32, i32
  }
  func.func @transform_6(%arg0: i32, %arg1: i32) -> (i32, i32) {
    %c0_i32 = arith.constant 0 : i32
    %c0_i32_0 = arith.constant 0 : i32
    return %c0_i32, %arg1 : i32, i32
  }
  func.func @transform_7(%arg0: i32, %arg1: i32) -> (i32, i32) {
    %c0_i32 = arith.constant 0 : i32
    %c0_i32_0 = arith.constant 0 : i32
    %c0_i32_1 = arith.constant 0 : i32
    return %c0_i32, %c0_i32_0 : i32, i32
  }
  func.func @transform_8(%arg0: i32, %arg1: i32) -> (i32, i32, i32) {
    %c0_i32 = arith.constant 0 : i32
    %c0_i32_0 = arith.constant 0 : i32
    %c0_i32_1 = arith.constant 0 : i32
    return %arg0, %c0_i32, %c0_i32_0 : i32, i32, i32
  }
}

</mosaic_0001>

<llo_original>
// kernel: custom_attention_forward.1
$region0: #{custom_attention_forward.1}
  #allocation0 [shape = 'u32[]', space=smem, size = 0x4, offset = 0x4, fixed_abs, tag = 'smem constant byte address 0x4 - core index']
  #allocation1 [shape = 'u32[144,128]{1,0:T(1,128)}', space=vmem, size = 0x12000, scoped, tag = 'internal scratch']
  #allocation2 [shape = 'f32[8,32]{1,0:T(8,128)}', space=vmem, size = 0x1000, scoped, tag = 'scratch operand']
  %s0 = inlined_call_operand.vmem [shape: bf16[2,8,32], index: 0, kind: input, shape index: {}]
  %s1 = inlined_call_operand.vmem [shape: bf16[2,8,32], index: 1, kind: input, shape index: {}]
  %s2 = inlined_call_operand.vmem [shape: bf16[2,8,32], index: 2, kind: input, shape index: {}]
  %s3 = inlined_call_operand.vmem [shape: bf16[512,32], index: 3, kind: input, shape index: {}]
  %s4 = inlined_call_operand.vmem [shape: bf16[512,32], index: 4, kind: input, shape index: {}]
  %s5 = inlined_call_operand.vmem [shape: bf16[512,32], index: 5, kind: input, shape index: {}]
  %s6 = inlined_call_operand.vmem [shape: bf16[32,512], index: 6, kind: input, shape index: {}]
  %s7 = inlined_call_operand.vmem [shape: f32[1,32], index: 7, kind: input, shape index: {}]
  %s8 = inlined_call_operand.hbm [shape: f32[2,8,32], index: 8, kind: output, shape index: {}]
  %s9 = sld [smem:[#allocation0]]
  $region73: #{custom_attention_forward.1} parent=0
    _
  %s11 = ssub.s32 1, %s9
  %s12 = scalar_select 0, %s11, %s9
  $region1: #{custom_attention_forward.1} parent=0
    #allocation3 [shape = 'u8[8192]{0}', space=vmem, size = 0x2000, scoped, tag = 'output window, operand 0']
    #allocation4 [shape = 's32[2]{0}', space=sflag, size = 0x8, scoped, tag = 'scoped memory for custom_attention_forward.1']
    %13 = vsyncpa [#allocation4], 0
    %s14 = scalar_lea.sflag [#allocation4], 1
    %15 = vsyncpa %s14, 0
    loop: start=0, step=1, limit=4
    $region2: #{custom_attention_forward.1} parent=1 // loop_pre_header
      _
    $region3: #{custom_attention_forward.1} parent=1 // loop_header
      %s17 = sphi 0, %s21
      %p18 = scmp.ge.s32.totalorder %s17, 4
      %s24 = sphi 0, %s36
      %s25 = sphi 0, %s32
      %s26 = sphi 0, %s24
      %s27 = sphi 0, %s25
      %s28 = sphi 0, %s26
      %s29 = sphi 0, %s27
      %s39 = sphi 0, %s41
      %s42 = sphi 0, %s39
      %s43 = sphi 0, %s42
      %s59 = sphi 0, %s43
      %s65 = sphi 0, %s67
      %s68 = sphi 0, %s65
      %s69 = sphi 0, %s68
      %s85 = sphi 0, %s69
      %s91 = sphi 0, %s93
      %s94 = sphi 0, %s91
      %s95 = sphi 0, %s94
      %s111 = sphi 0, %s95
      %s117 = sphi 0, %s119
      %s120 = sphi 0, %s117
      %s121 = sphi 0, %s120
      %s137 = sphi 0, %s121
      %s143 = sphi 0, %s145
      %s146 = sphi 0, %s143
      %s147 = sphi 0, %s146
      %s163 = sphi 0, %s147
      %s169 = sphi 0, %s171
      %s172 = sphi 0, %s169
      %s173 = sphi 0, %s172
      %s189 = sphi 0, %s173
      %s195 = sphi 0, %s197
      %s198 = sphi 0, %s195
      %s199 = sphi 0, %s198
      %s215 = sphi 0, %s199
      %s219 = sphi 0, %s219
      %s221 = sphi 0, %s219
      %s222 = sphi 0, %s221
      %s236 = sphi 0, %s222
      %s242 = sphi 0, %s244
      %s245 = sphi 0, %s242
      %s246 = sphi 0, %s245
      %s262 = sphi 0, %s246
    $region4: #{custom_attention_forward.1} parent=1 // loop_header_branch
      %20 = sbr.rel (%p18) target = $region8
    $region5: #{custom_attention_forward.1} parent=1 // loop_body
      %s22 = ssub.s32 %s17, 1
      %s23 = ssub.s32 %s17, 2
      %s30 = sadd.s32 1, %s25
      %p31 = scmp.ge.s32.totalorder %s30, 1
      %s32 = scalar_select %p31, 0, %s30
      %s33 = sadd.s32 1, %s24
      %s34 = scalar_select %p31, %s33, %s24
      %p35 = scmp.ge.s32.totalorder %s34, 2
      %s36 = scalar_select %p35, 0, %s34
      %s37 = ssub.s32 %s24, %s36
      %p38 = scmp.eq.s32.totalorder %s37, 0
      %s40 = sadd.s32 %s39, 1
      %s41 = scalar_select %p38, %s39, %s40
      %p44 = pneg %p38
      %p45 = scmp.eq.s32.totalorder %s17, 1
      %p46 = por %p44, %p45
      %p47 = scmp.ne.s32.totalorder %s39, %s42
      %p48 = scmp.eq.s32.totalorder %s17, 0
      %p49 = por %p47, %p48
      %p50 = scmp.ne.s32.totalorder %s39, %s42
      %p51 = scmp.eq.s32.totalorder %s22, 1
      %p52 = por %p50, %p51
      %p53 = scmp.ne.s32.totalorder %s42, %s43
      %p54 = scmp.eq.s32.totalorder %s22, 0
      %p55 = por %p53, %p54
      %p56 = scmp.ne.s32.totalorder %s42, %s43
      %p57 = scmp.eq.s32.totalorder %s23, 1
      %p58 = por %p56, %p57
      %p60 = scmp.ne.s32.totalorder %s43, %s59
      %p61 = scmp.eq.s32.totalorder %s23, 0
      %p62 = por %p60, %p61
      %s63 = ssub.s32 %s24, %s36
      %p64 = scmp.eq.s32.totalorder %s63, 0
      %s66 = sadd.s32 %s65, 1
      %s67 = scalar_select %p64, %s65, %s66
      %p70 = pneg %p64
      %p71 = scmp.eq.s32.totalorder %s17, 1
      %p72 = por %p70, %p71
      %p73 = scmp.ne.s32.totalorder %s65, %s68
      %p74 = scmp.eq.s32.totalorder %s17, 0
      %p75 = por %p73, %p74
      %p76 = scmp.ne.s32.totalorder %s65, %s68
      %p77 = scmp.eq.s32.totalorder %s22, 1
      %p78 = por %p76, %p77
      %p79 = scmp.ne.s32.totalorder %s68, %s69
      %p80 = scmp.eq.s32.totalorder %s22, 0
      %p81 = por %p79, %p80
      %p82 = scmp.ne.s32.totalorder %s68, %s69
      %p83 = scmp.eq.s32.totalorder %s23, 1
      %p84 = por %p82, %p83
      %p86 = scmp.ne.s32.totalorder %s69, %s85
      %p87 = scmp.eq.s32.totalorder %s23, 0
      %p88 = por %p86, %p87
      %s89 = ssub.s32 %s24, %s36
      %p90 = scmp.eq.s32.totalorder %s89, 0
      %s92 = sadd.s32 %s91, 1
      %s93 = scalar_select %p90, %s91, %s92
      %p96 = pneg %p90
      %p97 = scmp.eq.s32.totalorder %s17, 1
      %p98 = por %p96, %p97
      %p99 = scmp.ne.s32.totalorder %s91, %s94
      %p100 = scmp.eq.s32.totalorder %s17, 0
      %p101 = por %p99, %p100
      %p102 = scmp.ne.s32.totalorder %s91, %s94
      %p103 = scmp.eq.s32.totalorder %s22, 1
      %p104 = por %p102, %p103
      %p105 = scmp.ne.s32.totalorder %s94, %s95
      %p106 = scmp.eq.s32.totalorder %s22, 0
      %p107 = por %p105, %p106
      %p108 = scmp.ne.s32.totalorder %s94, %s95
      %p109 = scmp.eq.s32.totalorder %s23, 1
      %p110 = por %p108, %p109
      %p112 = scmp.ne.s32.totalorder %s95, %s111
      %p113 = scmp.eq.s32.totalorder %s23, 0
      %p114 = por %p112, %p113
      %s115 = ssub.s32 %s25, %s32
      %p116 = scmp.eq.s32.totalorder %s115, 0
      %s118 = sadd.s32 %s117, 1
      %s119 = scalar_select %p116, %s117, %s118
      %p122 = pneg %p116
      %p123 = scmp.eq.s32.totalorder %s17, 1
      %p124 = por %p122, %p123
      %p125 = scmp.ne.s32.totalorder %s117, %s120
      %p126 = scmp.eq.s32.totalorder %s17, 0
      %p127 = por %p125, %p126
      %p128 = scmp.ne.s32.totalorder %s117, %s120
      %p129 = scmp.eq.s32.totalorder %s22, 1
      %p130 = por %p128, %p129
      %p131 = scmp.ne.s32.totalorder %s120, %s121
      %p132 = scmp.eq.s32.totalorder %s22, 0
      %p133 = por %p131, %p132
      %p134 = scmp.ne.s32.totalorder %s120, %s121
      %p135 = scmp.eq.s32.totalorder %s23, 1
      %p136 = por %p134, %p135
      %p138 = scmp.ne.s32.totalorder %s121, %s137
      %p139 = scmp.eq.s32.totalorder %s23, 0
      %p140 = por %p138, %p139
      %s141 = ssub.s32 %s25, %s32
      %p142 = scmp.eq.s32.totalorder %s141, 0
      %s144 = sadd.s32 %s143, 1
      %s145 = scalar_select %p142, %s143, %s144
      %p148 = pneg %p142
      %p149 = scmp.eq.s32.totalorder %s17, 1
      %p150 = por %p148, %p149
      %p151 = scmp.ne.s32.totalorder %s143, %s146
      %p152 = scmp.eq.s32.totalorder %s17, 0
      %p153 = por %p151, %p152
      %p154 = scmp.ne.s32.totalorder %s143, %s146
      %p155 = scmp.eq.s32.totalorder %s22, 1
      %p156 = por %p154, %p155
      %p157 = scmp.ne.s32.totalorder %s146, %s147
      %p158 = scmp.eq.s32.totalorder %s22, 0
      %p159 = por %p157, %p158
      %p160 = scmp.ne.s32.totalorder %s146, %s147
      %p161 = scmp.eq.s32.totalorder %s23, 1
      %p162 = por %p160, %p161
      %p164 = scmp.ne.s32.totalorder %s147, %s163
      %p165 = scmp.eq.s32.totalorder %s23, 0
      %p166 = por %p164, %p165
      %s167 = ssub.s32 %s25, %s32
      %p168 = scmp.eq.s32.totalorder %s167, 0
      %s170 = sadd.s32 %s169, 1
      %s171 = scalar_select %p168, %s169, %s170
      %p174 = pneg %p168
      %p175 = scmp.eq.s32.totalorder %s17, 1
      %p176 = por %p174, %p175
      %p177 = scmp.ne.s32.totalorder %s169, %s172
      %p178 = scmp.eq.s32.totalorder %s17, 0
      %p179 = por %p177, %p178
      %p180 = scmp.ne.s32.totalorder %s169, %s172
      %p181 = scmp.eq.s32.totalorder %s22, 1
      %p182 = por %p180, %p181
      %p183 = scmp.ne.s32.totalorder %s172, %s173
      %p184 = scmp.eq.s32.totalorder %s22, 0
      %p185 = por %p183, %p184
      %p186 = scmp.ne.s32.totalorder %s172, %s173
      %p187 = scmp.eq.s32.totalorder %s23, 1
      %p188 = por %p186, %p187
      %p190 = scmp.ne.s32.totalorder %s173, %s189
      %p191 = scmp.eq.s32.totalorder %s23, 0
      %p192 = por %p190, %p191
      %s193 = ssub.s32 %s25, %s32
      %p194 = scmp.eq.s32.totalorder %s193, 0
      %s196 = sadd.s32 %s195, 1
      %s197 = scalar_select %p194, %s195, %s196
      %p200 = pneg %p194
      %p201 = scmp.eq.s32.totalorder %s17, 1
      %p202 = por %p200, %p201
      %p203 = scmp.ne.s32.totalorder %s195, %s198
      %p204 = scmp.eq.s32.totalorder %s17, 0
      %p205 = por %p203, %p204
      %p206 = scmp.ne.s32.totalorder %s195, %s198
      %p207 = scmp.eq.s32.totalorder %s22, 1
      %p208 = por %p206, %p207
      %p209 = scmp.ne.s32.totalorder %s198, %s199
      %p210 = scmp.eq.s32.totalorder %s22, 0
      %p211 = por %p209, %p210
      %p212 = scmp.ne.s32.totalorder %s198, %s199
      %p213 = scmp.eq.s32.totalorder %s23, 1
      %p214 = por %p212, %p213
      %p216 = scmp.ne.s32.totalorder %s199, %s215
      %p217 = scmp.eq.s32.totalorder %s23, 0
      %p218 = por %p216, %p217
      %s220 = sadd.s32 %s219, 1
      %p223 = scmp.eq.s32.totalorder %s17, 1
      %p224 = scmp.ne.s32.totalorder %s219, %s221
      %p225 = scmp.eq.s32.totalorder %s17, 0
      %p226 = por %p224, %p225
      %p227 = scmp.ne.s32.totalorder %s219, %s221
      %p228 = scmp.eq.s32.totalorder %s22, 1
      %p229 = por %p227, %p228
      %p230 = scmp.ne.s32.totalorder %s221, %s222
      %p231 = scmp.eq.s32.totalorder %s22, 0
      %p232 = por %p230, %p231
      %p233 = scmp.ne.s32.totalorder %s221, %s222
      %p234 = scmp.eq.s32.totalorder %s23, 1
      %p235 = por %p233, %p234
      %p237 = scmp.ne.s32.totalorder %s222, %s236
      %p238 = scmp.eq.s32.totalorder %s23, 0
      %p239 = por %p237, %p238
      %s240 = ssub.s32 %s24, %s36
      %p241 = scmp.eq.s32.totalorder %s240, 0
      %s243 = sadd.s32 %s242, 1
      %s244 = scalar_select %p241, %s242, %s243
      %p247 = pneg %p241
      %p248 = scmp.eq.s32.totalorder %s17, 1
      %p249 = por %p247, %p248
      %p250 = scmp.ne.s32.totalorder %s242, %s245
      %p251 = scmp.eq.s32.totalorder %s17, 0
      %p252 = por %p250, %p251
      %p253 = scmp.ne.s32.totalorder %s242, %s245
      %p254 = scmp.eq.s32.totalorder %s22, 1
      %p255 = por %p253, %p254
      %p256 = scmp.ne.s32.totalorder %s245, %s246
      %p257 = scmp.eq.s32.totalorder %s22, 0
      %p258 = por %p256, %p257
      %p259 = scmp.ne.s32.totalorder %s245, %s246
      %p260 = scmp.eq.s32.totalorder %s23, 1
      %p261 = por %p259, %p260
      %p263 = scmp.ne.s32.totalorder %s246, %s262
      %p264 = scmp.eq.s32.totalorder %s23, 0
      %p265 = por %p263, %p264
      %p266 = scmp.le.s32.totalorder 1, %s17
      %p267 = scmp.lt.s32.totalorder %s17, 3
      %p268 = pnand %p266, %p267
      %p269 = pneg %p268
      // Predicated region
      $region9: #{custom_attention_forward.1} parent=5 // pred_check
        _
      $region10: #{custom_attention_forward.1} parent=5 // pred_check_branch
        %271 = sbr.rel (%p268) target = $region12
      $region11: #{custom_attention_forward.1} parent=5 // pred_region
        %s272 = ssub.s32 %s17, 1
        // Predicated region
        $region13: #{custom_attention_forward.1} parent=11 // pred_check
          %p273 = pneg %p133
        $region14: #{custom_attention_forward.1} parent=11 // pred_check_branch
          %275 = sbr.rel (%p273) target = $region16
        $region15: #{custom_attention_forward.1} parent=11 // pred_region
          %s276 = smul.u32 64, %s27
          %p277 = scmp.lt.s32.totalorder %s276, 63
          %s278 = scalar_select %p277, %s276, 63
          %s279 = smul.addr %s278, 4
          %s280 = scalar_lea.vmem %s3, %s279
          %s281 = smul.u32 64, %s27
        $region16: #{custom_attention_forward.1} parent=11 // pred_fallthru
          _
        // Predicated region
        $region17: #{custom_attention_forward.1} parent=11 // pred_check
          %p282 = pneg %p159
        $region18: #{custom_attention_forward.1} parent=11 // pred_check_branch
          %284 = sbr.rel (%p282) target = $region20
        $region19: #{custom_attention_forward.1} parent=11 // pred_region
          %s285 = smul.u32 64, %s27
          %p286 = scmp.lt.s32.totalorder %s285, 63
          %s287 = scalar_select %p286, %s285, 63
          %s288 = smul.addr %s287, 4
          %s289 = scalar_lea.vmem %s4, %s288
          %s290 = smul.u32 64, %s27
        $region20: #{custom_attention_forward.1} parent=11 // pred_fallthru
          _
        // Predicated region
        $region21: #{custom_attention_forward.1} parent=11 // pred_check
          %p291 = pneg %p185
        $region22: #{custom_attention_forward.1} parent=11 // pred_check_branch
          %293 = sbr.rel (%p291) target = $region24
        $region23: #{custom_attention_forward.1} parent=11 // pred_region
          %s294 = smul.u32 64, %s27
          %p295 = scmp.lt.s32.totalorder %s294, 63
          %s296 = scalar_select %p295, %s294, 63
          %s297 = smul.addr %s296, 4
          %s298 = scalar_lea.vmem %s5, %s297
          %s299 = smul.u32 64, %s27
        $region24: #{custom_attention_forward.1} parent=11 // pred_fallthru
          _
        // Predicated region
        $region25: #{custom_attention_forward.1} parent=11 // pred_check
          %p300 = pneg %p211
        $region26: #{custom_attention_forward.1} parent=11 // pred_check_branch
          %302 = sbr.rel (%p300) target = $region28
        $region27: #{custom_attention_forward.1} parent=11 // pred_region
          %s303 = smul.u32 4, %s27
          %p304 = scmp.lt.s32.totalorder %s303, 3
          %s305 = scalar_select %p304, %s303, 3
          %s306 = smul.addr %s305, 4
          %s307 = scalar_lea.vmem %s6, %s306
          %s308 = smul.u32 4, %s27
        $region28: #{custom_attention_forward.1} parent=11 // pred_fallthru
          _
        // Predicated region
        $region29: #{custom_attention_forward.1} parent=11 // pred_check
          %p309 = pneg %p232
        $region30: #{custom_attention_forward.1} parent=11 // pred_check_branch
          %311 = sbr.rel (%p309) target = $region32
        $region31: #{custom_attention_forward.1} parent=11 // pred_region
          _
        $region32: #{custom_attention_forward.1} parent=11 // pred_fallthru
          _
      $region12: #{custom_attention_forward.1} parent=5 // pred_fallthru
        _
      %p312 = scmp.lt.s32.totalorder %s17, 2
      // Predicated region
      $region33: #{custom_attention_forward.1} parent=5 // pred_check
        %p313 = pneg %p312
      $region34: #{custom_attention_forward.1} parent=5 // pred_check_branch
        %315 = sbr.rel (%p313) target = $region36
      $region35: #{custom_attention_forward.1} parent=5 // pred_region
        // Predicated region
        $region37: #{custom_attention_forward.1} parent=35 // pred_check
          %p316 = pneg %p49
        $region38: #{custom_attention_forward.1} parent=35 // pred_check_branch
          %318 = sbr.rel (%p316) target = $region40
        $region39: #{custom_attention_forward.1} parent=35 // pred_region
          %p319 = scmp.lt.s32.totalorder %s24, 1
          %s320 = scalar_select %p319, %s24, 1
          %s321 = smul.addr %s320, 4
          %s322 = scalar_lea.vmem %s0, %s321
        $region40: #{custom_attention_forward.1} parent=35 // pred_fallthru
          _
        // Predicated region
        $region41: #{custom_attention_forward.1} parent=35 // pred_check
          %p323 = pneg %p75
        $region42: #{custom_attention_forward.1} parent=35 // pred_check_branch
          %325 = sbr.rel (%p323) target = $region44
        $region43: #{custom_attention_forward.1} parent=35 // pred_region
          %p326 = scmp.lt.s32.totalorder %s24, 1
          %s327 = scalar_select %p326, %s24, 1
          %s328 = smul.addr %s327, 4
          %s329 = scalar_lea.vmem %s1, %s328
        $region44: #{custom_attention_forward.1} parent=35 // pred_fallthru
          _
        // Predicated region
        $region45: #{custom_attention_forward.1} parent=35 // pred_check
          %p330 = pneg %p101
        $region46: #{custom_attention_forward.1} parent=35 // pred_check_branch
          %332 = sbr.rel (%p330) target = $region48
        $region47: #{custom_attention_forward.1} parent=35 // pred_region
          %p333 = scmp.lt.s32.totalorder %s24, 1
          %s334 = scalar_select %p333, %s24, 1
          %s335 = smul.addr %s334, 4
          %s336 = scalar_lea.vmem %s2, %s335
        $region48: #{custom_attention_forward.1} parent=35 // pred_fallthru
          _
      $region36: #{custom_attention_forward.1} parent=5 // pred_fallthru
        _
      %p337 = scmp.le.s32.totalorder 1, %s17
      %p338 = scmp.lt.s32.totalorder %s17, 3
      %p339 = pnand %p337, %p338
      %p340 = pneg %p339
      // Predicated region
      $region49: #{custom_attention_forward.1} parent=5 // pred_check
        _
      $region50: #{custom_attention_forward.1} parent=5 // pred_check_branch
        %342 = sbr.rel (%p339) target = $region52
      $region51: #{custom_attention_forward.1} parent=5 // pred_region
        %s343 = ssub.s32 %s17, 1
        %p344 = scmp.lt.s32.totalorder %s26, 1
        %s345 = scalar_select %p344, %s26, 1
        %s346 = smul.addr %s345, 4
        %s347 = scalar_lea.vmem %s0, %s346
        %p348 = pneg %p55
        %p349 = pneg %p52
        %p350 = scmp.lt.s32.totalorder %s26, 1
        %s351 = scalar_select %p350, %s26, 1
        %s352 = smul.addr %s351, 4
        %s353 = scalar_lea.vmem %s1, %s352
        %p354 = pneg %p81
        %p355 = pneg %p78
        %p356 = scmp.lt.s32.totalorder %s26, 1
        %s357 = scalar_select %p356, %s26, 1
        %s358 = smul.addr %s357, 4
        %s359 = scalar_lea.vmem %s2, %s358
        %p360 = pneg %p107
        %p361 = pneg %p104
        %s362 = smul.u32 64, %s27
        %p363 = scmp.lt.s32.totalorder %s362, 63
        %s364 = scalar_select %p363, %s362, 63
        %s365 = smul.addr %s364, 4
        %s366 = scalar_lea.vmem %s3, %s365
        %p367 = pneg %p133
        %p368 = pneg %p130
        %s369 = smul.u32 64, %s27
        %p370 = scmp.lt.s32.totalorder %s369, 63
        %s371 = scalar_select %p370, %s369, 63
        %s372 = smul.addr %s371, 4
        %s373 = scalar_lea.vmem %s4, %s372
        %p374 = pneg %p159
        %p375 = pneg %p156
        %s376 = smul.u32 64, %s27
        %p377 = scmp.lt.s32.totalorder %s376, 63
        %s378 = scalar_select %p377, %s376, 63
        %s379 = smul.addr %s378, 4
        %s380 = scalar_lea.vmem %s5, %s379
        %p381 = pneg %p185
        %p382 = pneg %p182
        %s383 = smul.u32 4, %s27
        %p384 = scmp.lt.s32.totalorder %s383, 3
        %s385 = scalar_select %p384, %s383, 3
        %s386 = smul.addr %s385, 4
        %s387 = scalar_lea.vmem %s6, %s386
        %p388 = pneg %p211
        %p389 = pneg %p208
        %p390 = pneg %p232
        %p391 = pneg %p229
        %p392 = pneg %p258
        %p393 = pneg %p255
        %s394 = sand.u32 %s245, 1
        %s395 = scalar_lea.sflag [#allocation4], %s394
        %s396 = sand.u32 %s245, 1
        %s397 = smul.addr %s396, 8
        %s398 = scalar_lea.vmem [#allocation3], %s397
        %p399 = scmp.lt.s32.totalorder %s26, 1
        %s400 = scalar_select %p399, %s26, 1
        %s401 = smul.addr %s400, 4
        %s402 = scalar_lea.vmem %s0, %s401
        %p403 = scmp.lt.s32.totalorder %s26, 1
        %s404 = scalar_select %p403, %s26, 1
        %s405 = smul.addr %s404, 4
        %s406 = scalar_lea.vmem %s1, %s405
        %p407 = scmp.lt.s32.totalorder %s26, 1
        %s408 = scalar_select %p407, %s26, 1
        %s409 = smul.addr %s408, 4
        %s410 = scalar_lea.vmem %s2, %s409
        %s411 = smul.u32 64, %s27
        %p412 = scmp.lt.s32.totalorder %s411, 63
        %s413 = scalar_select %p412, %s411, 63
        %s414 = smul.addr %s413, 4
        %s415 = scalar_lea.vmem %s3, %s414
        %s416 = smul.u32 64, %s27
        %s417 = smul.u32 64, %s27
        %p418 = scmp.lt.s32.totalorder %s417, 63
        %s419 = scalar_select %p418, %s417, 63
        %s420 = smul.addr %s419, 4
        %s421 = scalar_lea.vmem %s4, %s420
        %s422 = smul.u32 64, %s27
        %s423 = smul.u32 64, %s27
        %p424 = scmp.lt.s32.totalorder %s423, 63
        %s425 = scalar_select %p424, %s423, 63
        %s426 = smul.addr %s425, 4
        %s427 = scalar_lea.vmem %s5, %s426
        %s428 = smul.u32 64, %s27
        %s429 = smul.u32 4, %s27
        %p430 = scmp.lt.s32.totalorder %s429, 3
        %s431 = scalar_select %p430, %s429, 3
        %s432 = smul.addr %s431, 4
        %s433 = scalar_lea.vmem %s6, %s432
        %s434 = smul.u32 4, %s27
        %p436 = scmp.eq.s32.totalorder %s27, 0
        // Predicated region
        $region53: #{custom_attention_forward.1} parent=51 // pred_check
          %p437 = pneg %p436
        $region54: #{custom_attention_forward.1} parent=51 // pred_check_branch
          %439 = sbr.rel (%p437) target = $region56
        $region55: #{custom_attention_forward.1} parent=51 // pred_region
          %vm440 = vcmask 261120
          %441 = vst.msk [vmem:[#allocation2] sm:$0xff] %vm440, 0.0
        $region56: #{custom_attention_forward.1} parent=51 // pred_fallthru
          _
        %v442 = vld [vmem:[%s402] sm:$0xf]
        %v443 = vld [vmem:[%s415] sm:$0xf]
        %v444 = vld [vmem:[%s415 + $0x4] sm:$0xf]
        %v445 = vld [vmem:[%s415 + $0x8] sm:$0xf]
        %v446 = vld [vmem:[%s415 + $0xc] sm:$0xf]
        %v447 = vld [vmem:[%s415 + $0x10] sm:$0xf]
        %v448 = vld [vmem:[%s415 + $0x14] sm:$0xf]
        %v449 = vld [vmem:[%s415 + $0x18] sm:$0xf]
        %v450 = vld [vmem:[%s415 + $0x1c] sm:$0xf]
        %v451 = vld [vmem:[%s415 + $0x20] sm:$0xf]
        %v452 = vld [vmem:[%s415 + $0x24] sm:$0xf]
        %v453 = vld [vmem:[%s415 + $0x28] sm:$0xf]
        %v454 = vld [vmem:[%s415 + $0x2c] sm:$0xf]
        %v455 = vld [vmem:[%s415 + $0x30] sm:$0xf]
        %v456 = vld [vmem:[%s415 + $0x34] sm:$0xf]
        %v457 = vld [vmem:[%s415 + $0x38] sm:$0xf]
        %v458 = vld [vmem:[%s415 + $0x3c] sm:$0xf]
        %v459 = vld [vmem:[%s415 + $0x40] sm:$0xf]
        %v460 = vld [vmem:[%s415 + $0x44] sm:$0xf]
        %v461 = vld [vmem:[%s415 + $0x48] sm:$0xf]
        %v462 = vld [vmem:[%s415 + $0x4c] sm:$0xf]
        %v463 = vld [vmem:[%s415 + $0x50] sm:$0xf]
        %v464 = vld [vmem:[%s415 + $0x54] sm:$0xf]
        %v465 = vld [vmem:[%s415 + $0x58] sm:$0xf]
        %v466 = vld [vmem:[%s415 + $0x5c] sm:$0xf]
        %v467 = vld [vmem:[%s415 + $0x60] sm:$0xf]
        %v468 = vld [vmem:[%s415 + $0x64] sm:$0xf]
        %v469 = vld [vmem:[%s415 + $0x68] sm:$0xf]
        %v470 = vld [vmem:[%s415 + $0x6c] sm:$0xf]
        %v471 = vld [vmem:[%s415 + $0x70] sm:$0xf]
        %v472 = vld [vmem:[%s415 + $0x74] sm:$0xf]
        %v473 = vld [vmem:[%s415 + $0x78] sm:$0xf]
        %v474 = vld [vmem:[%s415 + $0x7c] sm:$0xf]
        %v475 = vld [vmem:[%s415 + $0x80] sm:$0xf]
        %v476 = vld [vmem:[%s415 + $0x84] sm:$0xf]
        %v477 = vld [vmem:[%s415 + $0x88] sm:$0xf]
        %v478 = vld [vmem:[%s415 + $0x8c] sm:$0xf]
        %v479 = vld [vmem:[%s415 + $0x90] sm:$0xf]
        %v480 = vld [vmem:[%s415 + $0x94] sm:$0xf]
        %v481 = vld [vmem:[%s415 + $0x98] sm:$0xf]
        %v482 = vld [vmem:[%s415 + $0x9c] sm:$0xf]
        %v483 = vld [vmem:[%s415 + $0xa0] sm:$0xf]
        %v484 = vld [vmem:[%s415 + $0xa4] sm:$0xf]
        %v485 = vld [vmem:[%s415 + $0xa8] sm:$0xf]
        %v486 = vld [vmem:[%s415 + $0xac] sm:$0xf]
        %v487 = vld [vmem:[%s415 + $0xb0] sm:$0xf]
        %v488 = vld [vmem:[%s415 + $0xb4] sm:$0xf]
        %v489 = vld [vmem:[%s415 + $0xb8] sm:$0xf]
        %v490 = vld [vmem:[%s415 + $0xbc] sm:$0xf]
        %v491 = vld [vmem:[%s415 + $0xc0] sm:$0xf]
        %v492 = vld [vmem:[%s415 + $0xc4] sm:$0xf]
        %v493 = vld [vmem:[%s415 + $0xc8] sm:$0xf]
        %v494 = vld [vmem:[%s415 + $0xcc] sm:$0xf]
        %v495 = vld [vmem:[%s415 + $0xd0] sm:$0xf]
        %v496 = vld [vmem:[%s415 + $0xd4] sm:$0xf]
        %v497 = vld [vmem:[%s415 + $0xd8] sm:$0xf]
        %v498 = vld [vmem:[%s415 + $0xdc] sm:$0xf]
        %v499 = vld [vmem:[%s415 + $0xe0] sm:$0xf]
        %v500 = vld [vmem:[%s415 + $0xe4] sm:$0xf]
        %v501 = vld [vmem:[%s415 + $0xe8] sm:$0xf]
        %v502 = vld [vmem:[%s415 + $0xec] sm:$0xf]
        %v503 = vld [vmem:[%s415 + $0xf0] sm:$0xf]
        %v504 = vld [vmem:[%s415 + $0xf4] sm:$0xf]
        %v505 = vld [vmem:[%s415 + $0xf8] sm:$0xf]
        %v506 = vld [vmem:[%s415 + $0xfc] sm:$0xf]
        %v571 = vunpack.c.l.b16 %v443
        %v572 = vunpack.c.l.b16 %v444
        %v573 = vunpack.c.l.b16 %v445
        %v574 = vunpack.c.l.b16 %v446
        %v575 = vunpack.c.l.b16 %v447
        %v576 = vunpack.c.l.b16 %v448
        %v577 = vunpack.c.l.b16 %v449
        %v578 = vunpack.c.l.b16 %v450
        %v579 = vunpack.c.l.b16 %v451
        %v580 = vunpack.c.l.b16 %v452
        %v581 = vunpack.c.l.b16 %v453
        %v582 = vunpack.c.l.b16 %v454
        %v583 = vunpack.c.l.b16 %v455
        %v584 = vunpack.c.l.b16 %v456
        %v585 = vunpack.c.l.b16 %v457
        %v586 = vunpack.c.l.b16 %v458
        %v587 = vunpack.c.l.b16 %v459
        %v588 = vunpack.c.l.b16 %v460
        %v589 = vunpack.c.l.b16 %v461
        %v590 = vunpack.c.l.b16 %v462
        %v591 = vunpack.c.l.b16 %v463
        %v592 = vunpack.c.l.b16 %v464
        %v593 = vunpack.c.l.b16 %v465
        %v594 = vunpack.c.l.b16 %v466
        %v595 = vunpack.c.l.b16 %v467
        %v596 = vunpack.c.l.b16 %v468
        %v597 = vunpack.c.l.b16 %v469
        %v598 = vunpack.c.l.b16 %v470
        %v599 = vunpack.c.l.b16 %v471
        %v600 = vunpack.c.l.b16 %v472
        %v601 = vunpack.c.l.b16 %v473
        %v602 = vunpack.c.l.b16 %v474
        %v603 = vunpack.c.l.b16 %v475
        %v604 = vunpack.c.l.b16 %v476
        %v605 = vunpack.c.l.b16 %v477
        %v606 = vunpack.c.l.b16 %v478
        %v607 = vunpack.c.l.b16 %v479
        %v608 = vunpack.c.l.b16 %v480
        %v609 = vunpack.c.l.b16 %v481
        %v610 = vunpack.c.l.b16 %v482
        %v611 = vunpack.c.l.b16 %v483
        %v612 = vunpack.c.l.b16 %v484
        %v613 = vunpack.c.l.b16 %v485
        %v614 = vunpack.c.l.b16 %v486
        %v615 = vunpack.c.l.b16 %v487
        %v616 = vunpack.c.l.b16 %v488
        %v617 = vunpack.c.l.b16 %v489
        %v618 = vunpack.c.l.b16 %v490
        %v619 = vunpack.c.l.b16 %v491
        %v620 = vunpack.c.l.b16 %v492
        %v621 = vunpack.c.l.b16 %v493
        %v622 = vunpack.c.l.b16 %v494
        %v623 = vunpack.c.l.b16 %v495
        %v624 = vunpack.c.l.b16 %v496
        %v625 = vunpack.c.l.b16 %v497
        %v626 = vunpack.c.l.b16 %v498
        %v627 = vunpack.c.l.b16 %v499
        %v628 = vunpack.c.l.b16 %v500
        %v629 = vunpack.c.l.b16 %v501
        %v630 = vunpack.c.l.b16 %v502
        %v631 = vunpack.c.l.b16 %v503
        %v632 = vunpack.c.l.b16 %v504
        %v633 = vunpack.c.l.b16 %v505
        %v634 = vunpack.c.l.b16 %v506
        %v635 = vpack.c.b16 %v572, %v571
        %v636 = vpack.c.b16 %v574, %v573
        %v637 = vpack.c.b16 %v576, %v575
        %v638 = vpack.c.b16 %v578, %v577
        %v639 = vpack.c.b16 %v580, %v579
        %v640 = vpack.c.b16 %v582, %v581
        %v641 = vpack.c.b16 %v584, %v583
        %v642 = vpack.c.b16 %v586, %v585
        %v643 = vpack.c.b16 %v588, %v587
        %v644 = vpack.c.b16 %v590, %v589
        %v645 = vpack.c.b16 %v592, %v591
        %v646 = vpack.c.b16 %v594, %v593
        %v647 = vpack.c.b16 %v596, %v595
        %v648 = vpack.c.b16 %v598, %v597
        %v649 = vpack.c.b16 %v600, %v599
        %v650 = vpack.c.b16 %v602, %v601
        %v651 = vpack.c.b16 %v604, %v603
        %v652 = vpack.c.b16 %v606, %v605
        %v653 = vpack.c.b16 %v608, %v607
        %v654 = vpack.c.b16 %v610, %v609
        %v655 = vpack.c.b16 %v612, %v611
        %v656 = vpack.c.b16 %v614, %v613
        %v657 = vpack.c.b16 %v616, %v615
        %v658 = vpack.c.b16 %v618, %v617
        %v659 = vpack.c.b16 %v620, %v619
        %v660 = vpack.c.b16 %v622, %v621
        %v661 = vpack.c.b16 %v624, %v623
        %v662 = vpack.c.b16 %v626, %v625
        %v663 = vpack.c.b16 %v628, %v627
        %v664 = vpack.c.b16 %v630, %v629
        %v665 = vpack.c.b16 %v632, %v631
        %v666 = vpack.c.b16 %v634, %v633
        %vm667 = vcmask 261120
        %v669 = vsel %vm667, %v442, 0
        %v672 = vsel %vm667, %v635, 0
        %v675 = vsel %vm667, %v636, 0
        %v678 = vsel %vm667, %v637, 0
        %v681 = vsel %vm667, %v638, 0
        %v684 = vsel %vm667, %v639, 0
        %v687 = vsel %vm667, %v640, 0
        %v690 = vsel %vm667, %v641, 0
        %v693 = vsel %vm667, %v642, 0
        %v696 = vsel %vm667, %v643, 0
        %v699 = vsel %vm667, %v644, 0
        %v702 = vsel %vm667, %v645, 0
        %v705 = vsel %vm667, %v646, 0
        %v708 = vsel %vm667, %v647, 0
        %v711 = vsel %vm667, %v648, 0
        %v714 = vsel %vm667, %v649, 0
        %v717 = vsel %vm667, %v650, 0
        %v720 = vsel %vm667, %v651, 0
        %v723 = vsel %vm667, %v652, 0
        %v726 = vsel %vm667, %v653, 0
        %v729 = vsel %vm667, %v654, 0
        %v732 = vsel %vm667, %v655, 0
        %v735 = vsel %vm667, %v656, 0
        %v738 = vsel %vm667, %v657, 0
        %v741 = vsel %vm667, %v658, 0
        %v744 = vsel %vm667, %v659, 0
        %v747 = vsel %vm667, %v660, 0
        %v750 = vsel %vm667, %v661, 0
        %v753 = vsel %vm667, %v662, 0
        %v756 = vsel %vm667, %v663, 0
        %v759 = vsel %vm667, %v664, 0
        %v762 = vsel %vm667, %v665, 0
        %v765 = vsel %vm667, %v666, 0
        %767 = vmatprep.subr.bf16.mxu0 0
        %768 = vmatpush1.bf16.xpose.msra.mxu0 %v672
        %769 = vmatprep.subr.bf16.mxu0 0
        %770 = vmatpush1.bf16.xpose.msra.mxu0 %v675
        %771 = vmatprep.subr.bf16.mxu0 0
        %772 = vmatpush1.bf16.xpose.msra.mxu0 %v678
        %773 = vmatprep.subr.bf16.mxu0 0
        %774 = vmatpush1.bf16.xpose.msra.mxu0 %v681
        %775 = vmatprep.subr.bf16.mxu0 0
        %776 = vmatpush1.bf16.xpose.msra.mxu0 %v684
        %777 = vmatprep.subr.bf16.mxu0 0
        %778 = vmatpush1.bf16.xpose.msra.mxu0 %v687
        %779 = vmatprep.subr.bf16.mxu0 0
        %780 = vmatpush1.bf16.xpose.msra.mxu0 %v690
        %781 = vmatprep.subr.bf16.mxu0 0
        %782 = vmatpush1.bf16.xpose.msra.mxu0 %v693
        %783 = vmatprep.subr.bf16.mxu0 0
        %784 = vmatpush1.bf16.xpose.msra.mxu0 %v696
        %785 = vmatprep.subr.bf16.mxu0 0
        %786 = vmatpush1.bf16.xpose.msra.mxu0 %v699
        %787 = vmatprep.subr.bf16.mxu0 0
        %788 = vmatpush1.bf16.xpose.msra.mxu0 %v702
        %789 = vmatprep.subr.bf16.mxu0 0
        %790 = vmatpush1.bf16.xpose.msra.mxu0 %v705
        %791 = vmatprep.subr.bf16.mxu0 0
        %792 = vmatpush1.bf16.xpose.msra.mxu0 %v708
        %793 = vmatprep.subr.bf16.mxu0 0
        %794 = vmatpush1.bf16.xpose.msra.mxu0 %v711
        %795 = vmatprep.subr.bf16.mxu0 0
        %796 = vmatpush1.bf16.xpose.msra.mxu0 %v714
        %797 = vmatprep.subr.bf16.mxu0 0
        %798 = vmatpush1.bf16.xpose.msra.mxu0 %v717
        %799 = vmatprep.mubr.bf16.mxu0 0
        %800 = vmatmul.mubr.bf16.gmra.mrb[0].mxu0 %v669
        %v801 = vpop.f32.mrb[0].mxu0
        %v802 = vadd.f32 0.0, %v801
        %v803 = vpop.f32.mrb[0].mxu0
        %v804 = vadd.f32 0.0, %v803
        %v805 = vpop.f32.mrb[0].mxu0
        %v806 = vpop.f32.mrb[0].mxu0
        %807 = vdwg.mxu0
        %808 = vmatprep.subr.bf16.mxu0 0
        %809 = vmatpush1.bf16.xpose.msra.mxu0 %v720
        %810 = vmatprep.subr.bf16.mxu0 0
        %811 = vmatpush1.bf16.xpose.msra.mxu0 %v723
        %812 = vmatprep.subr.bf16.mxu0 0
        %813 = vmatpush1.bf16.xpose.msra.mxu0 %v726
        %814 = vmatprep.subr.bf16.mxu0 0
        %815 = vmatpush1.bf16.xpose.msra.mxu0 %v729
        %816 = vmatprep.subr.bf16.mxu0 0
        %817 = vmatpush1.bf16.xpose.msra.mxu0 %v732
        %818 = vmatprep.subr.bf16.mxu0 0
        %819 = vmatpush1.bf16.xpose.msra.mxu0 %v735
        %820 = vmatprep.subr.bf16.mxu0 0
        %821 = vmatpush1.bf16.xpose.msra.mxu0 %v738
        %822 = vmatprep.subr.bf16.mxu0 0
        %823 = vmatpush1.bf16.xpose.msra.mxu0 %v741
        %824 = vmatprep.subr.bf16.mxu0 0
        %825 = vmatpush1.bf16.xpose.msra.mxu0 %v744
        %826 = vmatprep.subr.bf16.mxu0 0
        %827 = vmatpush1.bf16.xpose.msra.mxu0 %v747
        %828 = vmatprep.subr.bf16.mxu0 0
        %829 = vmatpush1.bf16.xpose.msra.mxu0 %v750
        %830 = vmatprep.subr.bf16.mxu0 0
        %831 = vmatpush1.bf16.xpose.msra.mxu0 %v753
        %832 = vmatprep.subr.bf16.mxu0 0
        %833 = vmatpush1.bf16.xpose.msra.mxu0 %v756
        %834 = vmatprep.subr.bf16.mxu0 0
        %835 = vmatpush1.bf16.xpose.msra.mxu0 %v759
        %836 = vmatprep.subr.bf16.mxu0 0
        %837 = vmatpush1.bf16.xpose.msra.mxu0 %v762
        %838 = vmatprep.subr.bf16.mxu0 0
        %839 = vmatpush1.bf16.xpose.msra.mxu0 %v765
        %840 = vmatprep.mubr.bf16.mxu0 0
        %841 = vmatmul.mubr.bf16.gmra.mrb[0].mxu0 %v669
        %v842 = vpop.f32.mrb[0].mxu0
        %v843 = vadd.f32 0.0, %v842
        %v844 = vpop.f32.mrb[0].mxu0
        %v845 = vadd.f32 0.0, %v844
        %v846 = vpop.f32.mrb[0].mxu0
        %v847 = vpop.f32.mrb[0].mxu0
        %848 = vdwg.mxu0
        %v849 = vmul.f32 %v802, 0.125
        %v850 = vmul.f32 %v804, 0.125
        %v851 = vmul.f32 %v843, 0.125
        %v852 = vmul.f32 %v845, 0.125
        %v853 = vpack.c.bf16 %v849, %v849
        %v854 = vpack.c.bf16 %v850, %v850
        %v855 = vpack.c.bf16 %v851, %v851
        %v856 = vpack.c.bf16 %v852, %v852
        %v857 = vld [vmem:[%s406] sm:$0xf]
        %v858 = vld [vmem:[%s421] sm:$0xf]
        %v859 = vld [vmem:[%s421 + $0x4] sm:$0xf]
        %v860 = vld [vmem:[%s421 + $0x8] sm:$0xf]
        %v861 = vld [vmem:[%s421 + $0xc] sm:$0xf]
        %v862 = vld [vmem:[%s421 + $0x10] sm:$0xf]
        %v863 = vld [vmem:[%s421 + $0x14] sm:$0xf]
        %v864 = vld [vmem:[%s421 + $0x18] sm:$0xf]
        %v865 = vld [vmem:[%s421 + $0x1c] sm:$0xf]
        %v866 = vld [vmem:[%s421 + $0x20] sm:$0xf]
        %v867 = vld [vmem:[%s421 + $0x24] sm:$0xf]
        %v868 = vld [vmem:[%s421 + $0x28] sm:$0xf]
        %v869 = vld [vmem:[%s421 + $0x2c] sm:$0xf]
        %v870 = vld [vmem:[%s421 + $0x30] sm:$0xf]
        %v871 = vld [vmem:[%s421 + $0x34] sm:$0xf]
        %v872 = vld [vmem:[%s421 + $0x38] sm:$0xf]
        %v873 = vld [vmem:[%s421 + $0x3c] sm:$0xf]
        %v874 = vld [vmem:[%s421 + $0x40] sm:$0xf]
        %v875 = vld [vmem:[%s421 + $0x44] sm:$0xf]
        %v876 = vld [vmem:[%s421 + $0x48] sm:$0xf]
        %v877 = vld [vmem:[%s421 + $0x4c] sm:$0xf]
        %v878 = vld [vmem:[%s421 + $0x50] sm:$0xf]
        %v879 = vld [vmem:[%s421 + $0x54] sm:$0xf]
        %v880 = vld [vmem:[%s421 + $0x58] sm:$0xf]
        %v881 = vld [vmem:[%s421 + $0x5c] sm:$0xf]
        %v882 = vld [vmem:[%s421 + $0x60] sm:$0xf]
        %v883 = vld [vmem:[%s421 + $0x64] sm:$0xf]
        %v884 = vld [vmem:[%s421 + $0x68] sm:$0xf]
        %v885 = vld [vmem:[%s421 + $0x6c] sm:$0xf]
        %v886 = vld [vmem:[%s421 + $0x70] sm:$0xf]
        %v887 = vld [vmem:[%s421 + $0x74] sm:$0xf]
        %v888 = vld [vmem:[%s421 + $0x78] sm:$0xf]
        %v889 = vld [vmem:[%s421 + $0x7c] sm:$0xf]
        %v890 = vld [vmem:[%s421 + $0x80] sm:$0xf]
        %v891 = vld [vmem:[%s421 + $0x84] sm:$0xf]
        %v892 = vld [vmem:[%s421 + $0x88] sm:$0xf]
        %v893 = vld [vmem:[%s421 + $0x8c] sm:$0xf]
        %v894 = vld [vmem:[%s421 + $0x90] sm:$0xf]
        %v895 = vld [vmem:[%s421 + $0x94] sm:$0xf]
        %v896 = vld [vmem:[%s421 + $0x98] sm:$0xf]
        %v897 = vld [vmem:[%s421 + $0x9c] sm:$0xf]
        %v898 = vld [vmem:[%s421 + $0xa0] sm:$0xf]
        %v899 = vld [vmem:[%s421 + $0xa4] sm:$0xf]
        %v900 = vld [vmem:[%s421 + $0xa8] sm:$0xf]
        %v901 = vld [vmem:[%s421 + $0xac] sm:$0xf]
        %v902 = vld [vmem:[%s421 + $0xb0] sm:$0xf]
        %v903 = vld [vmem:[%s421 + $0xb4] sm:$0xf]
        %v904 = vld [vmem:[%s421 + $0xb8] sm:$0xf]
        %v905 = vld [vmem:[%s421 + $0xbc] sm:$0xf]
        %v906 = vld [vmem:[%s421 + $0xc0] sm:$0xf]
        %v907 = vld [vmem:[%s421 + $0xc4] sm:$0xf]
        %v908 = vld [vmem:[%s421 + $0xc8] sm:$0xf]
        %v909 = vld [vmem:[%s421 + $0xcc] sm:$0xf]
        %v910 = vld [vmem:[%s421 + $0xd0] sm:$0xf]
        %v911 = vld [vmem:[%s421 + $0xd4] sm:$0xf]
        %v912 = vld [vmem:[%s421 + $0xd8] sm:$0xf]
        %v913 = vld [vmem:[%s421 + $0xdc] sm:$0xf]
        %v914 = vld [vmem:[%s421 + $0xe0] sm:$0xf]
        %v915 = vld [vmem:[%s421 + $0xe4] sm:$0xf]
        %v916 = vld [vmem:[%s421 + $0xe8] sm:$0xf]
        %v917 = vld [vmem:[%s421 + $0xec] sm:$0xf]
        %v918 = vld [vmem:[%s421 + $0xf0] sm:$0xf]
        %v919 = vld [vmem:[%s421 + $0xf4] sm:$0xf]
        %v920 = vld [vmem:[%s421 + $0xf8] sm:$0xf]
        %v921 = vld [vmem:[%s421 + $0xfc] sm:$0xf]
        %v986 = vunpack.c.l.b16 %v858
        %v987 = vunpack.c.l.b16 %v859
        %v988 = vunpack.c.l.b16 %v860
        %v989 = vunpack.c.l.b16 %v861
        %v990 = vunpack.c.l.b16 %v862
        %v991 = vunpack.c.l.b16 %v863
        %v992 = vunpack.c.l.b16 %v864
        %v993 = vunpack.c.l.b16 %v865
        %v994 = vunpack.c.l.b16 %v866
        %v995 = vunpack.c.l.b16 %v867
        %v996 = vunpack.c.l.b16 %v868
        %v997 = vunpack.c.l.b16 %v869
        %v998 = vunpack.c.l.b16 %v870
        %v999 = vunpack.c.l.b16 %v871
        %v1000 = vunpack.c.l.b16 %v872
        %v1001 = vunpack.c.l.b16 %v873
        %v1002 = vunpack.c.l.b16 %v874
        %v1003 = vunpack.c.l.b16 %v875
        %v1004 = vunpack.c.l.b16 %v876
        %v1005 = vunpack.c.l.b16 %v877
        %v1006 = vunpack.c.l.b16 %v878
        %v1007 = vunpack.c.l.b16 %v879
        %v1008 = vunpack.c.l.b16 %v880
        %v1009 = vunpack.c.l.b16 %v881
        %v1010 = vunpack.c.l.b16 %v882
        %v1011 = vunpack.c.l.b16 %v883
        %v1012 = vunpack.c.l.b16 %v884
        %v1013 = vunpack.c.l.b16 %v885
        %v1014 = vunpack.c.l.b16 %v886
        %v1015 = vunpack.c.l.b16 %v887
        %v1016 = vunpack.c.l.b16 %v888
        %v1017 = vunpack.c.l.b16 %v889
        %v1018 = vunpack.c.l.b16 %v890
        %v1019 = vunpack.c.l.b16 %v891
        %v1020 = vunpack.c.l.b16 %v892
        %v1021 = vunpack.c.l.b16 %v893
        %v1022 = vunpack.c.l.b16 %v894
        %v1023 = vunpack.c.l.b16 %v895
        %v1024 = vunpack.c.l.b16 %v896
        %v1025 = vunpack.c.l.b16 %v897
        %v1026 = vunpack.c.l.b16 %v898
        %v1027 = vunpack.c.l.b16 %v899
        %v1028 = vunpack.c.l.b16 %v900
        %v1029 = vunpack.c.l.b16 %v901
        %v1030 = vunpack.c.l.b16 %v902
        %v1031 = vunpack.c.l.b16 %v903
        %v1032 = vunpack.c.l.b16 %v904
        %v1033 = vunpack.c.l.b16 %v905
        %v1034 = vunpack.c.l.b16 %v906
        %v1035 = vunpack.c.l.b16 %v907
        %v1036 = vunpack.c.l.b16 %v908
        %v1037 = vunpack.c.l.b16 %v909
        %v1038 = vunpack.c.l.b16 %v910
        %v1039 = vunpack.c.l.b16 %v911
        %v1040 = vunpack.c.l.b16 %v912
        %v1041 = vunpack.c.l.b16 %v913
        %v1042 = vunpack.c.l.b16 %v914
        %v1043 = vunpack.c.l.b16 %v915
        %v1044 = vunpack.c.l.b16 %v916
        %v1045 = vunpack.c.l.b16 %v917
        %v1046 = vunpack.c.l.b16 %v918
        %v1047 = vunpack.c.l.b16 %v919
        %v1048 = vunpack.c.l.b16 %v920
        %v1049 = vunpack.c.l.b16 %v921
        %v1050 = vpack.c.b16 %v987, %v986
        %v1051 = vpack.c.b16 %v989, %v988
        %v1052 = vpack.c.b16 %v991, %v990
        %v1053 = vpack.c.b16 %v993, %v992
        %v1054 = vpack.c.b16 %v995, %v994
        %v1055 = vpack.c.b16 %v997, %v996
        %v1056 = vpack.c.b16 %v999, %v998
        %v1057 = vpack.c.b16 %v1001, %v1000
        %v1058 = vpack.c.b16 %v1003, %v1002
        %v1059 = vpack.c.b16 %v1005, %v1004
        %v1060 = vpack.c.b16 %v1007, %v1006
        %v1061 = vpack.c.b16 %v1009, %v1008
        %v1062 = vpack.c.b16 %v1011, %v1010
        %v1063 = vpack.c.b16 %v1013, %v1012
        %v1064 = vpack.c.b16 %v1015, %v1014
        %v1065 = vpack.c.b16 %v1017, %v1016
        %v1066 = vpack.c.b16 %v1019, %v1018
        %v1067 = vpack.c.b16 %v1021, %v1020
        %v1068 = vpack.c.b16 %v1023, %v1022
        %v1069 = vpack.c.b16 %v1025, %v1024
        %v1070 = vpack.c.b16 %v1027, %v1026
        %v1071 = vpack.c.b16 %v1029, %v1028
        %v1072 = vpack.c.b16 %v1031, %v1030
        %v1073 = vpack.c.b16 %v1033, %v1032
        %v1074 = vpack.c.b16 %v1035, %v1034
        %v1075 = vpack.c.b16 %v1037, %v1036
        %v1076 = vpack.c.b16 %v1039, %v1038
        %v1077 = vpack.c.b16 %v1041, %v1040
        %v1078 = vpack.c.b16 %v1043, %v1042
        %v1079 = vpack.c.b16 %v1045, %v1044
        %v1080 = vpack.c.b16 %v1047, %v1046
        %v1081 = vpack.c.b16 %v1049, %v1048
        %v1083 = vsel %vm667, %v857, 0
        %v1086 = vsel %vm667, %v1050, 0
        %v1089 = vsel %vm667, %v1051, 0
        %v1092 = vsel %vm667, %v1052, 0
        %v1095 = vsel %vm667, %v1053, 0
        %v1098 = vsel %vm667, %v1054, 0
        %v1101 = vsel %vm667, %v1055, 0
        %v1104 = vsel %vm667, %v1056, 0
        %v1107 = vsel %vm667, %v1057, 0
        %v1110 = vsel %vm667, %v1058, 0
        %v1113 = vsel %vm667, %v1059, 0
        %v1116 = vsel %vm667, %v1060, 0
        %v1119 = vsel %vm667, %v1061, 0
        %v1122 = vsel %vm667, %v1062, 0
        %v1125 = vsel %vm667, %v1063, 0
        %v1128 = vsel %vm667, %v1064, 0
        %v1131 = vsel %vm667, %v1065, 0
        %v1134 = vsel %vm667, %v1066, 0
        %v1137 = vsel %vm667, %v1067, 0
        %v1140 = vsel %vm667, %v1068, 0
        %v1143 = vsel %vm667, %v1069, 0
        %v1146 = vsel %vm667, %v1070, 0
        %v1149 = vsel %vm667, %v1071, 0
        %v1152 = vsel %vm667, %v1072, 0
        %v1155 = vsel %vm667, %v1073, 0
        %v1158 = vsel %vm667, %v1074, 0
        %v1161 = vsel %vm667, %v1075, 0
        %v1164 = vsel %vm667, %v1076, 0
        %v1167 = vsel %vm667, %v1077, 0
        %v1170 = vsel %vm667, %v1078, 0
        %v1173 = vsel %vm667, %v1079, 0
        %v1176 = vsel %vm667, %v1080, 0
        %v1179 = vsel %vm667, %v1081, 0
        %1181 = vmatprep.subr.bf16.mxu0 0
        %1182 = vmatpush1.bf16.xpose.msra.mxu0 %v1086
        %1183 = vmatprep.subr.bf16.mxu0 0
        %1184 = vmatpush1.bf16.xpose.msra.mxu0 %v1089
        %1185 = vmatprep.subr.bf16.mxu0 0
        %1186 = vmatpush1.bf16.xpose.msra.mxu0 %v1092
        %1187 = vmatprep.subr.bf16.mxu0 0
        %1188 = vmatpush1.bf16.xpose.msra.mxu0 %v1095
        %1189 = vmatprep.subr.bf16.mxu0 0
        %1190 = vmatpush1.bf16.xpose.msra.mxu0 %v1098
        %1191 = vmatprep.subr.bf16.mxu0 0
        %1192 = vmatpush1.bf16.xpose.msra.mxu0 %v1101
        %1193 = vmatprep.subr.bf16.mxu0 0
        %1194 = vmatpush1.bf16.xpose.msra.mxu0 %v1104
        %1195 = vmatprep.subr.bf16.mxu0 0
        %1196 = vmatpush1.bf16.xpose.msra.mxu0 %v1107
        %1197 = vmatprep.subr.bf16.mxu0 0
        %1198 = vmatpush1.bf16.xpose.msra.mxu0 %v1110
        %1199 = vmatprep.subr.bf16.mxu0 0
        %1200 = vmatpush1.bf16.xpose.msra.mxu0 %v1113
        %1201 = vmatprep.subr.bf16.mxu0 0
        %1202 = vmatpush1.bf16.xpose.msra.mxu0 %v1116
        %1203 = vmatprep.subr.bf16.mxu0 0
        %1204 = vmatpush1.bf16.xpose.msra.mxu0 %v1119
        %1205 = vmatprep.subr.bf16.mxu0 0
        %1206 = vmatpush1.bf16.xpose.msra.mxu0 %v1122
        %1207 = vmatprep.subr.bf16.mxu0 0
        %1208 = vmatpush1.bf16.xpose.msra.mxu0 %v1125
        %1209 = vmatprep.subr.bf16.mxu0 0
        %1210 = vmatpush1.bf16.xpose.msra.mxu0 %v1128
        %1211 = vmatprep.subr.bf16.mxu0 0
        %1212 = vmatpush1.bf16.xpose.msra.mxu0 %v1131
        %1213 = vmatprep.mubr.bf16.mxu0 0
        %1214 = vmatmul.mubr.bf16.gmra.mrb[0].mxu0 %v1083
        %v1215 = vpop.f32.mrb[0].mxu0
        %v1216 = vadd.f32 0.0, %v1215
        %v1217 = vpop.f32.mrb[0].mxu0
        %v1218 = vadd.f32 0.0, %v1217
        %v1219 = vpop.f32.mrb[0].mxu0
        %v1220 = vpop.f32.mrb[0].mxu0
        %1221 = vdwg.mxu0
        %1222 = vmatprep.subr.bf16.mxu0 0
        %1223 = vmatpush1.bf16.xpose.msra.mxu0 %v1134
        %1224 = vmatprep.subr.bf16.mxu0 0
        %1225 = vmatpush1.bf16.xpose.msra.mxu0 %v1137
        %1226 = vmatprep.subr.bf16.mxu0 0
        %1227 = vmatpush1.bf16.xpose.msra.mxu0 %v1140
        %1228 = vmatprep.subr.bf16.mxu0 0
        %1229 = vmatpush1.bf16.xpose.msra.mxu0 %v1143
        %1230 = vmatprep.subr.bf16.mxu0 0
        %1231 = vmatpush1.bf16.xpose.msra.mxu0 %v1146
        %1232 = vmatprep.subr.bf16.mxu0 0
        %1233 = vmatpush1.bf16.xpose.msra.mxu0 %v1149
        %1234 = vmatprep.subr.bf16.mxu0 0
        %1235 = vmatpush1.bf16.xpose.msra.mxu0 %v1152
        %1236 = vmatprep.subr.bf16.mxu0 0
        %1237 = vmatpush1.bf16.xpose.msra.mxu0 %v1155
        %1238 = vmatprep.subr.bf16.mxu0 0
        %1239 = vmatpush1.bf16.xpose.msra.mxu0 %v1158
        %1240 = vmatprep.subr.bf16.mxu0 0
        %1241 = vmatpush1.bf16.xpose.msra.mxu0 %v1161
        %1242 = vmatprep.subr.bf16.mxu0 0
        %1243 = vmatpush1.bf16.xpose.msra.mxu0 %v1164
        %1244 = vmatprep.subr.bf16.mxu0 0
        %1245 = vmatpush1.bf16.xpose.msra.mxu0 %v1167
        %1246 = vmatprep.subr.bf16.mxu0 0
        %1247 = vmatpush1.bf16.xpose.msra.mxu0 %v1170
        %1248 = vmatprep.subr.bf16.mxu0 0
        %1249 = vmatpush1.bf16.xpose.msra.mxu0 %v1173
        %1250 = vmatprep.subr.bf16.mxu0 0
        %1251 = vmatpush1.bf16.xpose.msra.mxu0 %v1176
        %1252 = vmatprep.subr.bf16.mxu0 0
        %1253 = vmatpush1.bf16.xpose.msra.mxu0 %v1179
        %1254 = vmatprep.mubr.bf16.mxu0 0
        %1255 = vmatmul.mubr.bf16.gmra.mrb[0].mxu0 %v1083
        %v1256 = vpop.f32.mrb[0].mxu0
        %v1257 = vadd.f32 0.0, %v1256
        %v1258 = vpop.f32.mrb[0].mxu0
        %v1259 = vadd.f32 0.0, %v1258
        %v1260 = vpop.f32.mrb[0].mxu0
        %v1261 = vpop.f32.mrb[0].mxu0
        %1262 = vdwg.mxu0
        %v1263 = vpack.c.bf16 %v1216, %v1216
        %v1264 = vpack.c.bf16 %v1218, %v1218
        %v1265 = vpack.c.bf16 %v1257, %v1257
        %v1266 = vpack.c.bf16 %v1259, %v1259
        %v1267 = vld [vmem:[%s410] sm:$0xf]
        %v1268 = vld [vmem:[%s427] sm:$0xf]
        %v1269 = vld [vmem:[%s427 + $0x4] sm:$0xf]
        %v1270 = vld [vmem:[%s427 + $0x8] sm:$0xf]
        %v1271 = vld [vmem:[%s427 + $0xc] sm:$0xf]
        %v1272 = vld [vmem:[%s427 + $0x10] sm:$0xf]
        %v1273 = vld [vmem:[%s427 + $0x14] sm:$0xf]
        %v1274 = vld [vmem:[%s427 + $0x18] sm:$0xf]
        %v1275 = vld [vmem:[%s427 + $0x1c] sm:$0xf]
        %v1276 = vld [vmem:[%s427 + $0x20] sm:$0xf]
        %v1277 = vld [vmem:[%s427 + $0x24] sm:$0xf]
        %v1278 = vld [vmem:[%s427 + $0x28] sm:$0xf]
        %v1279 = vld [vmem:[%s427 + $0x2c] sm:$0xf]
        %v1280 = vld [vmem:[%s427 + $0x30] sm:$0xf]
        %v1281 = vld [vmem:[%s427 + $0x34] sm:$0xf]
        %v1282 = vld [vmem:[%s427 + $0x38] sm:$0xf]
        %v1283 = vld [vmem:[%s427 + $0x3c] sm:$0xf]
        %v1284 = vld [vmem:[%s427 + $0x40] sm:$0xf]
        %v1285 = vld [vmem:[%s427 + $0x44] sm:$0xf]
        %v1286 = vld [vmem:[%s427 + $0x48] sm:$0xf]
        %v1287 = vld [vmem:[%s427 + $0x4c] sm:$0xf]
        %v1288 = vld [vmem:[%s427 + $0x50] sm:$0xf]
        %v1289 = vld [vmem:[%s427 + $0x54] sm:$0xf]
        %v1290 = vld [vmem:[%s427 + $0x58] sm:$0xf]
        %v1291 = vld [vmem:[%s427 + $0x5c] sm:$0xf]
        %v1292 = vld [vmem:[%s427 + $0x60] sm:$0xf]
        %v1293 = vld [vmem:[%s427 + $0x64] sm:$0xf]
        %v1294 = vld [vmem:[%s427 + $0x68] sm:$0xf]
        %v1295 = vld [vmem:[%s427 + $0x6c] sm:$0xf]
        %v1296 = vld [vmem:[%s427 + $0x70] sm:$0xf]
        %v1297 = vld [vmem:[%s427 + $0x74] sm:$0xf]
        %v1298 = vld [vmem:[%s427 + $0x78] sm:$0xf]
        %v1299 = vld [vmem:[%s427 + $0x7c] sm:$0xf]
        %v1300 = vld [vmem:[%s427 + $0x80] sm:$0xf]
        %v1301 = vld [vmem:[%s427 + $0x84] sm:$0xf]
        %v1302 = vld [vmem:[%s427 + $0x88] sm:$0xf]
        %v1303 = vld [vmem:[%s427 + $0x8c] sm:$0xf]
        %v1304 = vld [vmem:[%s427 + $0x90] sm:$0xf]
        %v1305 = vld [vmem:[%s427 + $0x94] sm:$0xf]
        %v1306 = vld [vmem:[%s427 + $0x98] sm:$0xf]
        %v1307 = vld [vmem:[%s427 + $0x9c] sm:$0xf]
        %v1308 = vld [vmem:[%s427 + $0xa0] sm:$0xf]
        %v1309 = vld [vmem:[%s427 + $0xa4] sm:$0xf]
        %v1310 = vld [vmem:[%s427 + $0xa8] sm:$0xf]
        %v1311 = vld [vmem:[%s427 + $0xac] sm:$0xf]
        %v1312 = vld [vmem:[%s427 + $0xb0] sm:$0xf]
        %v1313 = vld [vmem:[%s427 + $0xb4] sm:$0xf]
        %v1314 = vld [vmem:[%s427 + $0xb8] sm:$0xf]
        %v1315 = vld [vmem:[%s427 + $0xbc] sm:$0xf]
        %v1316 = vld [vmem:[%s427 + $0xc0] sm:$0xf]
        %v1317 = vld [vmem:[%s427 + $0xc4] sm:$0xf]
        %v1318 = vld [vmem:[%s427 + $0xc8] sm:$0xf]
        %v1319 = vld [vmem:[%s427 + $0xcc] sm:$0xf]
        %v1320 = vld [vmem:[%s427 + $0xd0] sm:$0xf]
        %v1321 = vld [vmem:[%s427 + $0xd4] sm:$0xf]
        %v1322 = vld [vmem:[%s427 + $0xd8] sm:$0xf]
        %v1323 = vld [vmem:[%s427 + $0xdc] sm:$0xf]
        %v1324 = vld [vmem:[%s427 + $0xe0] sm:$0xf]
        %v1325 = vld [vmem:[%s427 + $0xe4] sm:$0xf]
        %v1326 = vld [vmem:[%s427 + $0xe8] sm:$0xf]
        %v1327 = vld [vmem:[%s427 + $0xec] sm:$0xf]
        %v1328 = vld [vmem:[%s427 + $0xf0] sm:$0xf]
        %v1329 = vld [vmem:[%s427 + $0xf4] sm:$0xf]
        %v1330 = vld [vmem:[%s427 + $0xf8] sm:$0xf]
        %v1331 = vld [vmem:[%s427 + $0xfc] sm:$0xf]
        %v1396 = vunpack.c.l.b16 %v1268
        %v1397 = vunpack.c.l.b16 %v1269
        %v1398 = vunpack.c.l.b16 %v1270
        %v1399 = vunpack.c.l.b16 %v1271
        %v1400 = vunpack.c.l.b16 %v1272
        %v1401 = vunpack.c.l.b16 %v1273
        %v1402 = vunpack.c.l.b16 %v1274
        %v1403 = vunpack.c.l.b16 %v1275
        %v1404 = vunpack.c.l.b16 %v1276
        %v1405 = vunpack.c.l.b16 %v1277
        %v1406 = vunpack.c.l.b16 %v1278
        %v1407 = vunpack.c.l.b16 %v1279
        %v1408 = vunpack.c.l.b16 %v1280
        %v1409 = vunpack.c.l.b16 %v1281
        %v1410 = vunpack.c.l.b16 %v1282
        %v1411 = vunpack.c.l.b16 %v1283
        %v1412 = vunpack.c.l.b16 %v1284
        %v1413 = vunpack.c.l.b16 %v1285
        %v1414 = vunpack.c.l.b16 %v1286
        %v1415 = vunpack.c.l.b16 %v1287
        %v1416 = vunpack.c.l.b16 %v1288
        %v1417 = vunpack.c.l.b16 %v1289
        %v1418 = vunpack.c.l.b16 %v1290
        %v1419 = vunpack.c.l.b16 %v1291
        %v1420 = vunpack.c.l.b16 %v1292
        %v1421 = vunpack.c.l.b16 %v1293
        %v1422 = vunpack.c.l.b16 %v1294
        %v1423 = vunpack.c.l.b16 %v1295
        %v1424 = vunpack.c.l.b16 %v1296
        %v1425 = vunpack.c.l.b16 %v1297
        %v1426 = vunpack.c.l.b16 %v1298
        %v1427 = vunpack.c.l.b16 %v1299
        %v1428 = vunpack.c.l.b16 %v1300
        %v1429 = vunpack.c.l.b16 %v1301
        %v1430 = vunpack.c.l.b16 %v1302
        %v1431 = vunpack.c.l.b16 %v1303
        %v1432 = vunpack.c.l.b16 %v1304
        %v1433 = vunpack.c.l.b16 %v1305
        %v1434 = vunpack.c.l.b16 %v1306
        %v1435 = vunpack.c.l.b16 %v1307
        %v1436 = vunpack.c.l.b16 %v1308
        %v1437 = vunpack.c.l.b16 %v1309
        %v1438 = vunpack.c.l.b16 %v1310
        %v1439 = vunpack.c.l.b16 %v1311
        %v1440 = vunpack.c.l.b16 %v1312
        %v1441 = vunpack.c.l.b16 %v1313
        %v1442 = vunpack.c.l.b16 %v1314
        %v1443 = vunpack.c.l.b16 %v1315
        %v1444 = vunpack.c.l.b16 %v1316
        %v1445 = vunpack.c.l.b16 %v1317
        %v1446 = vunpack.c.l.b16 %v1318
        %v1447 = vunpack.c.l.b16 %v1319
        %v1448 = vunpack.c.l.b16 %v1320
        %v1449 = vunpack.c.l.b16 %v1321
        %v1450 = vunpack.c.l.b16 %v1322
        %v1451 = vunpack.c.l.b16 %v1323
        %v1452 = vunpack.c.l.b16 %v1324
        %v1453 = vunpack.c.l.b16 %v1325
        %v1454 = vunpack.c.l.b16 %v1326
        %v1455 = vunpack.c.l.b16 %v1327
        %v1456 = vunpack.c.l.b16 %v1328
        %v1457 = vunpack.c.l.b16 %v1329
        %v1458 = vunpack.c.l.b16 %v1330
        %v1459 = vunpack.c.l.b16 %v1331
        %v1460 = vpack.c.b16 %v1397, %v1396
        %v1461 = vpack.c.b16 %v1399, %v1398
        %v1462 = vpack.c.b16 %v1401, %v1400
        %v1463 = vpack.c.b16 %v1403, %v1402
        %v1464 = vpack.c.b16 %v1405, %v1404
        %v1465 = vpack.c.b16 %v1407, %v1406
        %v1466 = vpack.c.b16 %v1409, %v1408
        %v1467 = vpack.c.b16 %v1411, %v1410
        %v1468 = vpack.c.b16 %v1413, %v1412
        %v1469 = vpack.c.b16 %v1415, %v1414
        %v1470 = vpack.c.b16 %v1417, %v1416
        %v1471 = vpack.c.b16 %v1419, %v1418
        %v1472 = vpack.c.b16 %v1421, %v1420
        %v1473 = vpack.c.b16 %v1423, %v1422
        %v1474 = vpack.c.b16 %v1425, %v1424
        %v1475 = vpack.c.b16 %v1427, %v1426
        %v1476 = vpack.c.b16 %v1429, %v1428
        %v1477 = vpack.c.b16 %v1431, %v1430
        %v1478 = vpack.c.b16 %v1433, %v1432
        %v1479 = vpack.c.b16 %v1435, %v1434
        %v1480 = vpack.c.b16 %v1437, %v1436
        %v1481 = vpack.c.b16 %v1439, %v1438
        %v1482 = vpack.c.b16 %v1441, %v1440
        %v1483 = vpack.c.b16 %v1443, %v1442
        %v1484 = vpack.c.b16 %v1445, %v1444
        %v1485 = vpack.c.b16 %v1447, %v1446
        %v1486 = vpack.c.b16 %v1449, %v1448
        %v1487 = vpack.c.b16 %v1451, %v1450
        %v1488 = vpack.c.b16 %v1453, %v1452
        %v1489 = vpack.c.b16 %v1455, %v1454
        %v1490 = vpack.c.b16 %v1457, %v1456
        %v1491 = vpack.c.b16 %v1459, %v1458
        %v1493 = vsel %vm667, %v1267, 0
        %v1496 = vsel %vm667, %v1460, 0
        %v1499 = vsel %vm667, %v1461, 0
        %v1502 = vsel %vm667, %v1462, 0
        %v1505 = vsel %vm667, %v1463, 0
        %v1508 = vsel %vm667, %v1464, 0
        %v1511 = vsel %vm667, %v1465, 0
        %v1514 = vsel %vm667, %v1466, 0
        %v1517 = vsel %vm667, %v1467, 0
        %v1520 = vsel %vm667, %v1468, 0
        %v1523 = vsel %vm667, %v1469, 0
        %v1526 = vsel %vm667, %v1470, 0
        %v1529 = vsel %vm667, %v1471, 0
        %v1532 = vsel %vm667, %v1472, 0
        %v1535 = vsel %vm667, %v1473, 0
        %v1538 = vsel %vm667, %v1474, 0
        %v1541 = vsel %vm667, %v1475, 0
        %v1544 = vsel %vm667, %v1476, 0
        %v1547 = vsel %vm667, %v1477, 0
        %v1550 = vsel %vm667, %v1478, 0
        %v1553 = vsel %vm667, %v1479, 0
        %v1556 = vsel %vm667, %v1480, 0
        %v1559 = vsel %vm667, %v1481, 0
        %v1562 = vsel %vm667, %v1482, 0
        %v1565 = vsel %vm667, %v1483, 0
        %v1568 = vsel %vm667, %v1484, 0
        %v1571 = vsel %vm667, %v1485, 0
        %v1574 = vsel %vm667, %v1486, 0
        %v1577 = vsel %vm667, %v1487, 0
        %v1580 = vsel %vm667, %v1488, 0
        %v1583 = vsel %vm667, %v1489, 0
        %v1586 = vsel %vm667, %v1490, 0
        %v1589 = vsel %vm667, %v1491, 0
        %1591 = vmatprep.subr.bf16.mxu0 0
        %1592 = vmatpush1.bf16.xpose.msra.mxu0 %v1496
        %1593 = vmatprep.subr.bf16.mxu0 0
        %1594 = vmatpush1.bf16.xpose.msra.mxu0 %v1499
        %1595 = vmatprep.subr.bf16.mxu0 0
        %1596 = vmatpush1.bf16.xpose.msra.mxu0 %v1502
        %1597 = vmatprep.subr.bf16.mxu0 0
        %1598 = vmatpush1.bf16.xpose.msra.mxu0 %v1505
        %1599 = vmatprep.subr.bf16.mxu0 0
        %1600 = vmatpush1.bf16.xpose.msra.mxu0 %v1508
        %1601 = vmatprep.subr.bf16.mxu0 0
        %1602 = vmatpush1.bf16.xpose.msra.mxu0 %v1511
        %1603 = vmatprep.subr.bf16.mxu0 0
        %1604 = vmatpush1.bf16.xpose.msra.mxu0 %v1514
        %1605 = vmatprep.subr.bf16.mxu0 0
        %1606 = vmatpush1.bf16.xpose.msra.mxu0 %v1517
        %1607 = vmatprep.subr.bf16.mxu0 0
        %1608 = vmatpush1.bf16.xpose.msra.mxu0 %v1520
        %1609 = vmatprep.subr.bf16.mxu0 0
        %1610 = vmatpush1.bf16.xpose.msra.mxu0 %v1523
        %1611 = vmatprep.subr.bf16.mxu0 0
        %1612 = vmatpush1.bf16.xpose.msra.mxu0 %v1526
        %1613 = vmatprep.subr.bf16.mxu0 0
        %1614 = vmatpush1.bf16.xpose.msra.mxu0 %v1529
        %1615 = vmatprep.subr.bf16.mxu0 0
        %1616 = vmatpush1.bf16.xpose.msra.mxu0 %v1532
        %1617 = vmatprep.subr.bf16.mxu0 0
        %1618 = vmatpush1.bf16.xpose.msra.mxu0 %v1535
        %1619 = vmatprep.subr.bf16.mxu0 0
        %1620 = vmatpush1.bf16.xpose.msra.mxu0 %v1538
        %1621 = vmatprep.subr.bf16.mxu0 0
        %1622 = vmatpush1.bf16.xpose.msra.mxu0 %v1541
        %1623 = vmatprep.mubr.bf16.mxu0 0
        %1624 = vmatmul.mubr.bf16.gmra.mrb[0].mxu0 %v1493
        %v1625 = vpop.f32.mrb[0].mxu0
        %v1626 = vadd.f32 0.0, %v1625
        %v1627 = vpop.f32.mrb[0].mxu0
        %v1628 = vadd.f32 0.0, %v1627
        %v1629 = vpop.f32.mrb[0].mxu0
        %v1630 = vpop.f32.mrb[0].mxu0
        %1631 = vdwg.mxu0
        %1632 = vmatprep.subr.bf16.mxu0 0
        %1633 = vmatpush1.bf16.xpose.msra.mxu0 %v1544
        %1634 = vmatprep.subr.bf16.mxu0 0
        %1635 = vmatpush1.bf16.xpose.msra.mxu0 %v1547
        %1636 = vmatprep.subr.bf16.mxu0 0
        %1637 = vmatpush1.bf16.xpose.msra.mxu0 %v1550
        %1638 = vmatprep.subr.bf16.mxu0 0
        %1639 = vmatpush1.bf16.xpose.msra.mxu0 %v1553
        %1640 = vmatprep.subr.bf16.mxu0 0
        %1641 = vmatpush1.bf16.xpose.msra.mxu0 %v1556
        %1642 = vmatprep.subr.bf16.mxu0 0
        %1643 = vmatpush1.bf16.xpose.msra.mxu0 %v1559
        %1644 = vmatprep.subr.bf16.mxu0 0
        %1645 = vmatpush1.bf16.xpose.msra.mxu0 %v1562
        %1646 = vmatprep.subr.bf16.mxu0 0
        %1647 = vmatpush1.bf16.xpose.msra.mxu0 %v1565
        %1648 = vmatprep.subr.bf16.mxu0 0
        %1649 = vmatpush1.bf16.xpose.msra.mxu0 %v1568
        %1650 = vmatprep.subr.bf16.mxu0 0
        %1651 = vmatpush1.bf16.xpose.msra.mxu0 %v1571
        %1652 = vmatprep.subr.bf16.mxu0 0
        %1653 = vmatpush1.bf16.xpose.msra.mxu0 %v1574
        %1654 = vmatprep.subr.bf16.mxu0 0
        %1655 = vmatpush1.bf16.xpose.msra.mxu0 %v1577
        %1656 = vmatprep.subr.bf16.mxu0 0
        %1657 = vmatpush1.bf16.xpose.msra.mxu0 %v1580
        %1658 = vmatprep.subr.bf16.mxu0 0
        %1659 = vmatpush1.bf16.xpose.msra.mxu0 %v1583
        %1660 = vmatprep.subr.bf16.mxu0 0
        %1661 = vmatpush1.bf16.xpose.msra.mxu0 %v1586
        %1662 = vmatprep.subr.bf16.mxu0 0
        %1663 = vmatpush1.bf16.xpose.msra.mxu0 %v1589
        %1664 = vmatprep.mubr.bf16.mxu0 0
        %1665 = vmatmul.mubr.bf16.gmra.mrb[0].mxu0 %v1493
        %v1666 = vpop.f32.mrb[0].mxu0
        %v1667 = vadd.f32 0.0, %v1666
        %v1668 = vpop.f32.mrb[0].mxu0
        %v1669 = vadd.f32 0.0, %v1668
        %v1670 = vpop.f32.mrb[0].mxu0
        %v1671 = vpop.f32.mrb[0].mxu0
        %1672 = vdwg.mxu0
        %v1673 = vpack.c.bf16 %v1626, %v1626
        %v1674 = vpack.c.bf16 %v1628, %v1628
        %v1675 = vpack.c.bf16 %v1667, %v1667
        %v1676 = vpack.c.bf16 %v1669, %v1669
        %v1677 = vld [vmem:[%s433] sm:$0xff]
        %v1678 = vld [vmem:[%s433 + $0x8] sm:$0xff]
        %v1679 = vld [vmem:[%s433 + $0x10] sm:$0xff]
        %v1680 = vld [vmem:[%s433 + $0x18] sm:$0xff]
        %v1681 = vld [vmem:[%s433 + $0x20] sm:$0xff]
        %v1682 = vld [vmem:[%s433 + $0x28] sm:$0xff]
        %v1683 = vld [vmem:[%s433 + $0x30] sm:$0xff]
        %v1684 = vld [vmem:[%s433 + $0x38] sm:$0xff]
        %vm1685 = vcmask 523264
        %v1687 = vsel %vm1685, %v853, 0
        %v1690 = vsel %vm1685, %v1263, 0
        %1692 = vmatprep.subr.bf16.mxu0 0
        %1693 = vmatpush1.bf16.xpose.msra.mxu0 %v1690
        %1694 = vmatprep.subr.bf16.mxu0 0
        %1695 = vmatpush1.bf16.xpose.msra.mxu0 0
        %1696 = vmatprep.subr.bf16.mxu0 0
        %1697 = vmatpush1.bf16.xpose.msra.mxu0 0
        %1698 = vmatprep.subr.bf16.mxu0 0
        %1699 = vmatpush1.bf16.xpose.msra.mxu0 0
        %1700 = vmatprep.subr.bf16.mxu0 0
        %1701 = vmatpush1.bf16.xpose.msra.mxu0 0
        %1702 = vmatprep.subr.bf16.mxu0 0
        %1703 = vmatpush1.bf16.xpose.msra.mxu0 0
        %1704 = vmatprep.subr.bf16.mxu0 0
        %1705 = vmatpush1.bf16.xpose.msra.mxu0 0
        %1706 = vmatprep.subr.bf16.mxu0 0
        %1707 = vmatpush1.bf16.xpose.msra.mxu0 0
        %1708 = vmatprep.subr.bf16.mxu0 0
        %1709 = vmatpush1.bf16.xpose.msra.mxu0 0
        %1710 = vmatprep.subr.bf16.mxu0 0
        %1711 = vmatpush1.bf16.xpose.msra.mxu0 0
        %1712 = vmatprep.subr.bf16.mxu0 0
        %1713 = vmatpush1.bf16.xpose.msra.mxu0 0
        %1714 = vmatprep.subr.bf16.mxu0 0
        %1715 = vmatpush1.bf16.xpose.msra.mxu0 0
        %1716 = vmatprep.subr.bf16.mxu0 0
        %1717 = vmatpush1.bf16.xpose.msra.mxu0 0
        %1718 = vmatprep.subr.bf16.mxu0 0
        %1719 = vmatpush1.bf16.xpose.msra.mxu0 0
        %1720 = vmatprep.subr.bf16.mxu0 0
        %1721 = vmatpush1.bf16.xpose.msra.mxu0 0
        %1722 = vmatprep.subr.bf16.mxu0 0
        %1723 = vmatpush1.bf16.xpose.msra.mxu0 0
        %1724 = vmatprep.mubr.bf16.mxu0 0
        %1725 = vmatmul.mubr.bf16.gmra.mrb[0].mxu0 %v1687
        %v1726 = vpop.f32.mrb[0].mxu0
        %v1727 = vadd.f32 0.0, %v1726
        %v1728 = vpop.f32.mrb[0].mxu0
        %v1729 = vpop.f32.mrb[0].mxu0
        %v1730 = vpop.f32.mrb[0].mxu0
        %1731 = vdwg.mxu0
        %vm1732 = vcmask 64512
        %v1733 = vsel %vm1732, %v1727, -inf
        %1734 = vmax.xlane.f32.xlu0 %v1733
        %v1735 = vpop.xlane.xlu0 %1734
        %v1736 = vsub.f32 %v1727, %v1735
        %v1737 = vmul.f32 %v1736, 1.442695
        %v1738 = vpow.pop %v1737
        %v1739 = vsel %vm1732, %v1738, 0.0
        %1740 = vadd.xlane.f32.xlu0 %v1739
        %v1741 = vpop.xlane.xlu0 %1740
        %v1742 = vrcp.pop %v1741
        %v1743 = vmul.f32 %v1738, %v1742
        %v1744 = vpack.c.bf16 %v1743, %v1743
        %v1746 = vsel %vm1732, %v1744, 0
        %vm1748 = vcmask 1043456
        %v1750 = vsel %vm1748, %v1673, 0
        %1752 = vmatprep.subr.bf16.mxu0 0
        %1753 = vmatpush1.bf16.msra.mxu0 %v1750
        %1754 = vmatprep.subr.bf16.mxu0 0
        %1755 = vmatpush1.bf16.msra.mxu0 0
        %1756 = vmatprep.subr.bf16.mxu0 0
        %1757 = vmatpush1.bf16.msra.mxu0 0
        %1758 = vmatprep.subr.bf16.mxu0 0
        %1759 = vmatpush1.bf16.msra.mxu0 0
        %1760 = vmatprep.subr.bf16.mxu0 0
        %1761 = vmatpush1.bf16.msra.mxu0 0
        %1762 = vmatprep.subr.bf16.mxu0 0
        %1763 = vmatpush1.bf16.msra.mxu0 0
        %1764 = vmatprep.subr.bf16.mxu0 0
        %1765 = vmatpush1.bf16.msra.mxu0 0
        %1766 = vmatprep.subr.bf16.mxu0 0
        %1767 = vmatpush1.bf16.msra.mxu0 0
        %1768 = vmatprep.subr.bf16.mxu0 0
        %1769 = vmatpush1.bf16.msra.mxu0 0
        %1770 = vmatprep.subr.bf16.mxu0 0
        %1771 = vmatpush1.bf16.msra.mxu0 0
        %1772 = vmatprep.subr.bf16.mxu0 0
        %1773 = vmatpush1.bf16.msra.mxu0 0
        %1774 = vmatprep.subr.bf16.mxu0 0
        %1775 = vmatpush1.bf16.msra.mxu0 0
        %1776 = vmatprep.subr.bf16.mxu0 0
        %1777 = vmatpush1.bf16.msra.mxu0 0
        %1778 = vmatprep.subr.bf16.mxu0 0
        %1779 = vmatpush1.bf16.msra.mxu0 0
        %1780 = vmatprep.subr.bf16.mxu0 0
        %1781 = vmatpush1.bf16.msra.mxu0 0
        %1782 = vmatprep.subr.bf16.mxu0 0
        %1783 = vmatpush1.bf16.msra.mxu0 0
        %1784 = vmatprep.mubr.bf16.mxu0 0
        %1785 = vmatmul.mubr.bf16.gmra.mrb[0].mxu0 %v1746
        %v1786 = vpop.f32.mrb[0].mxu0
        %v1787 = vadd.f32 0.0, %v1786
        %v1788 = vpop.f32.mrb[0].mxu0
        %v1789 = vpop.f32.mrb[0].mxu0
        %v1790 = vpop.f32.mrb[0].mxu0
        %1791 = vdwg.mxu0
        %v1792 = vpack.c.bf16 %v1787, %v1787
        %1794 = vrot.lane.b32.xlu0 %v853, 64
        %v1795 = vpop.permute.xlu0 %1794
        %1797 = vrot.lane.b32.xlu0 %v1263, 64
        %v1798 = vpop.permute.xlu0 %1797
        %v1800 = vsel %vm1685, %v1795, 0
        %v1803 = vsel %vm1685, %v1798, 0
        %1805 = vmatprep.subr.bf16.mxu0 0
        %1806 = vmatpush1.bf16.xpose.msra.mxu0 %v1803
        %1807 = vmatprep.subr.bf16.mxu0 0
        %1808 = vmatpush1.bf16.xpose.msra.mxu0 0
        %1809 = vmatprep.subr.bf16.mxu0 0
        %1810 = vmatpush1.bf16.xpose.msra.mxu0 0
        %1811 = vmatprep.subr.bf16.mxu0 0
        %1812 = vmatpush1.bf16.xpose.msra.mxu0 0
        %1813 = vmatprep.subr.bf16.mxu0 0
        %1814 = vmatpush1.bf16.xpose.msra.mxu0 0
        %1815 = vmatprep.subr.bf16.mxu0 0
        %1816 = vmatpush1.bf16.xpose.msra.mxu0 0
        %1817 = vmatprep.subr.bf16.mxu0 0
        %1818 = vmatpush1.bf16.xpose.msra.mxu0 0
        %1819 = vmatprep.subr.bf16.mxu0 0
        %1820 = vmatpush1.bf16.xpose.msra.mxu0 0
        %1821 = vmatprep.subr.bf16.mxu0 0
        %1822 = vmatpush1.bf16.xpose.msra.mxu0 0
        %1823 = vmatprep.subr.bf16.mxu0 0
        %1824 = vmatpush1.bf16.xpose.msra.mxu0 0
        %1825 = vmatprep.subr.bf16.mxu0 0
        %1826 = vmatpush1.bf16.xpose.msra.mxu0 0
        %1827 = vmatprep.subr.bf16.mxu0 0
        %1828 = vmatpush1.bf16.xpose.msra.mxu0 0
        %1829 = vmatprep.subr.bf16.mxu0 0
        %1830 = vmatpush1.bf16.xpose.msra.mxu0 0
        %1831 = vmatprep.subr.bf16.mxu0 0
        %1832 = vmatpush1.bf16.xpose.msra.mxu0 0
        %1833 = vmatprep.subr.bf16.mxu0 0
        %1834 = vmatpush1.bf16.xpose.msra.mxu0 0
        %1835 = vmatprep.subr.bf16.mxu0 0
        %1836 = vmatpush1.bf16.xpose.msra.mxu0 0
        %1837 = vmatprep.mubr.bf16.mxu0 0
        %1838 = vmatmul.mubr.bf16.gmra.mrb[0].mxu0 %v1800
        %v1839 = vpop.f32.mrb[0].mxu0
        %v1840 = vadd.f32 0.0, %v1839
        %v1841 = vpop.f32.mrb[0].mxu0
        %v1842 = vpop.f32.mrb[0].mxu0
        %v1843 = vpop.f32.mrb[0].mxu0
        %1844 = vdwg.mxu0
        %v1845 = vsel %vm1732, %v1840, -inf
        %1846 = vmax.xlane.f32.xlu0 %v1845
        %v1847 = vpop.xlane.xlu0 %1846
        %v1848 = vsub.f32 %v1840, %v1847
        %v1849 = vmul.f32 %v1848, 1.442695
        %v1850 = vpow.pop %v1849
        %v1851 = vsel %vm1732, %v1850, 0.0
        %1852 = vadd.xlane.f32.xlu0 %v1851
        %v1853 = vpop.xlane.xlu0 %1852
        %v1854 = vrcp.pop %v1853
        %v1855 = vmul.f32 %v1850, %v1854
        %v1856 = vpack.c.bf16 %v1855, %v1855
        %1858 = vrot.lane.b32.xlu0 %v1673, 64
        %v1859 = vpop.permute.xlu0 %1858
        %v1861 = vsel %vm1732, %v1856, 0
        %v1864 = vsel %vm1748, %v1859, 0
        %1866 = vmatprep.subr.bf16.mxu0 0
        %1867 = vmatpush1.bf16.msra.mxu0 %v1864
        %1868 = vmatprep.subr.bf16.mxu0 0
        %1869 = vmatpush1.bf16.msra.mxu0 0
        %1870 = vmatprep.subr.bf16.mxu0 0
        %1871 = vmatpush1.bf16.msra.mxu0 0
        %1872 = vmatprep.subr.bf16.mxu0 0
        %1873 = vmatpush1.bf16.msra.mxu0 0
        %1874 = vmatprep.subr.bf16.mxu0 0
        %1875 = vmatpush1.bf16.msra.mxu0 0
        %1876 = vmatprep.subr.bf16.mxu0 0
        %1877 = vmatpush1.bf16.msra.mxu0 0
        %1878 = vmatprep.subr.bf16.mxu0 0
        %1879 = vmatpush1.bf16.msra.mxu0 0
        %1880 = vmatprep.subr.bf16.mxu0 0
        %1881 = vmatpush1.bf16.msra.mxu0 0
        %1882 = vmatprep.subr.bf16.mxu0 0
        %1883 = vmatpush1.bf16.msra.mxu0 0
        %1884 = vmatprep.subr.bf16.mxu0 0
        %1885 = vmatpush1.bf16.msra.mxu0 0
        %1886 = vmatprep.subr.bf16.mxu0 0
        %1887 = vmatpush1.bf16.msra.mxu0 0
        %1888 = vmatprep.subr.bf16.mxu0 0
        %1889 = vmatpush1.bf16.msra.mxu0 0
        %1890 = vmatprep.subr.bf16.mxu0 0
        %1891 = vmatpush1.bf16.msra.mxu0 0
        %1892 = vmatprep.subr.bf16.mxu0 0
        %1893 = vmatpush1.bf16.msra.mxu0 0
        %1894 = vmatprep.subr.bf16.mxu0 0
        %1895 = vmatpush1.bf16.msra.mxu0 0
        %1896 = vmatprep.subr.bf16.mxu0 0
        %1897 = vmatpush1.bf16.msra.mxu0 0
        %1898 = vmatprep.mubr.bf16.mxu0 0
        %1899 = vmatmul.mubr.bf16.gmra.mrb[0].mxu0 %v1861
        %v1900 = vpop.f32.mrb[0].mxu0
        %v1901 = vadd.f32 0.0, %v1900
        %v1902 = vpop.f32.mrb[0].mxu0
        %v1903 = vpop.f32.mrb[0].mxu0
        %v1904 = vpop.f32.mrb[0].mxu0
        %1905 = vdwg.mxu0
        %v1906 = vpack.c.bf16 %v1901, %v1901
        %v1911 = vunpack.c.l.b16 %v1677
        %v1912 = vunpack.c.l.b16 %v1679
        %v1913 = vunpack.c.l.b16 %v1681
        %v1914 = vunpack.c.l.b16 %v1683
        %v1915 = vpack.c.b16 %v1912, %v1911
        %v1916 = vpack.c.b16 %v1914, %v1913
        %1917 = vrot.lane.b32.xlu0 %v1915, 64
        %v1918 = vpop.permute.xlu0 %1917
        %1919 = vrot.lane.b32.xlu0 %v1916, 64
        %v1920 = vpop.permute.xlu0 %1919
        %v1922 = vsel %vm1685, %v1906, 0
        %v1925 = vsel %vm1685, %v1918, 0
        %v1928 = vsel %vm1685, %v1920, 0
        %1930 = vmatprep.subr.bf16.mxu0 0
        %1931 = vmatpush1.bf16.xpose.msra.mxu0 %v1925
        %1932 = vmatprep.subr.bf16.mxu0 0
        %1933 = vmatpush1.bf16.xpose.msra.mxu0 %v1928
        %1934 = vmatprep.subr.bf16.mxu0 0
        %1935 = vmatpush1.bf16.xpose.msra.mxu0 0
        %1936 = vmatprep.subr.bf16.mxu0 0
        %1937 = vmatpush1.bf16.xpose.msra.mxu0 0
        %1938 = vmatprep.subr.bf16.mxu0 0
        %1939 = vmatpush1.bf16.xpose.msra.mxu0 0
        %1940 = vmatprep.subr.bf16.mxu0 0
        %1941 = vmatpush1.bf16.xpose.msra.mxu0 0
        %1942 = vmatprep.subr.bf16.mxu0 0
        %1943 = vmatpush1.bf16.xpose.msra.mxu0 0
        %1944 = vmatprep.subr.bf16.mxu0 0
        %1945 = vmatpush1.bf16.xpose.msra.mxu0 0
        %1946 = vmatprep.subr.bf16.mxu0 0
        %1947 = vmatpush1.bf16.xpose.msra.mxu0 0
        %1948 = vmatprep.subr.bf16.mxu0 0
        %1949 = vmatpush1.bf16.xpose.msra.mxu0 0
        %1950 = vmatprep.subr.bf16.mxu0 0
        %1951 = vmatpush1.bf16.xpose.msra.mxu0 0
        %1952 = vmatprep.subr.bf16.mxu0 0
        %1953 = vmatpush1.bf16.xpose.msra.mxu0 0
        %1954 = vmatprep.subr.bf16.mxu0 0
        %1955 = vmatpush1.bf16.xpose.msra.mxu0 0
        %1956 = vmatprep.subr.bf16.mxu0 0
        %1957 = vmatpush1.bf16.xpose.msra.mxu0 0
        %1958 = vmatprep.subr.bf16.mxu0 0
        %1959 = vmatpush1.bf16.xpose.msra.mxu0 0
        %1960 = vmatprep.subr.bf16.mxu0 0
        %1961 = vmatpush1.bf16.xpose.msra.mxu0 0
        %1962 = vmatprep.mubr.bf16.mxu0 0
        %1963 = vmatmul.mubr.bf16.gmra.mrb[0].mxu0 %v1922
        %v1964 = vpop.f32.mrb[0].mxu0
        %v1965 = vadd.f32 0.0, %v1964
        %v1966 = vpop.f32.mrb[0].mxu0
        %v1967 = vpop.f32.mrb[0].mxu0
        %v1968 = vpop.f32.mrb[0].mxu0
        %1969 = vdwg.mxu0
        %v1971 = vsel %vm1685, %v1792, 0
        %v1974 = vsel %vm1685, %v1915, 0
        %v1977 = vsel %vm1685, %v1916, 0
        %1979 = vmatprep.subr.bf16.mxu0 0
        %1980 = vmatpush1.bf16.xpose.msra.mxu0 %v1974
        %1981 = vmatprep.subr.bf16.mxu0 0
        %1982 = vmatpush1.bf16.xpose.msra.mxu0 %v1977
        %1983 = vmatprep.subr.bf16.mxu0 0
        %1984 = vmatpush1.bf16.xpose.msra.mxu0 0
        %1985 = vmatprep.subr.bf16.mxu0 0
        %1986 = vmatpush1.bf16.xpose.msra.mxu0 0
        %1987 = vmatprep.subr.bf16.mxu0 0
        %1988 = vmatpush1.bf16.xpose.msra.mxu0 0
        %1989 = vmatprep.subr.bf16.mxu0 0
        %1990 = vmatpush1.bf16.xpose.msra.mxu0 0
        %1991 = vmatprep.subr.bf16.mxu0 0
        %1992 = vmatpush1.bf16.xpose.msra.mxu0 0
        %1993 = vmatprep.subr.bf16.mxu0 0
        %1994 = vmatpush1.bf16.xpose.msra.mxu0 0
        %1995 = vmatprep.subr.bf16.mxu0 0
        %1996 = vmatpush1.bf16.xpose.msra.mxu0 0
        %1997 = vmatprep.subr.bf16.mxu0 0
        %1998 = vmatpush1.bf16.xpose.msra.mxu0 0
        %1999 = vmatprep.subr.bf16.mxu0 0
        %2000 = vmatpush1.bf16.xpose.msra.mxu0 0
        %2001 = vmatprep.subr.bf16.mxu0 0
        %2002 = vmatpush1.bf16.xpose.msra.mxu0 0
        %2003 = vmatprep.subr.bf16.mxu0 0
        %2004 = vmatpush1.bf16.xpose.msra.mxu0 0
        %2005 = vmatprep.subr.bf16.mxu0 0
        %2006 = vmatpush1.bf16.xpose.msra.mxu0 0
        %2007 = vmatprep.subr.bf16.mxu0 0
        %2008 = vmatpush1.bf16.xpose.msra.mxu0 0
        %2009 = vmatprep.subr.bf16.mxu0 0
        %2010 = vmatpush1.bf16.xpose.msra.mxu0 0
        %2011 = vmatprep.mubr.bf16.mxu0 0
        %2012 = vmatmul.mubr.bf16.gmra.mrb[0].mxu0 %v1971
        %v2013 = vpop.f32.mrb[0].mxu0
        %v2014 = vadd.f32 %v1965, %v2013
        %v2015 = vpop.f32.mrb[0].mxu0
        %v2016 = vpop.f32.mrb[0].mxu0
        %v2017 = vpop.f32.mrb[0].mxu0
        %2018 = vdwg.mxu0
        %v2020 = vsel %vm1685, %v854, 0
        %v2023 = vsel %vm1685, %v1264, 0
        %2025 = vmatprep.subr.bf16.mxu0 0
        %2026 = vmatpush1.bf16.xpose.msra.mxu0 %v2023
        %2027 = vmatprep.subr.bf16.mxu0 0
        %2028 = vmatpush1.bf16.xpose.msra.mxu0 0
        %2029 = vmatprep.subr.bf16.mxu0 0
        %2030 = vmatpush1.bf16.xpose.msra.mxu0 0
        %2031 = vmatprep.subr.bf16.mxu0 0
        %2032 = vmatpush1.bf16.xpose.msra.mxu0 0
        %2033 = vmatprep.subr.bf16.mxu0 0
        %2034 = vmatpush1.bf16.xpose.msra.mxu0 0
        %2035 = vmatprep.subr.bf16.mxu0 0
        %2036 = vmatpush1.bf16.xpose.msra.mxu0 0
        %2037 = vmatprep.subr.bf16.mxu0 0
        %2038 = vmatpush1.bf16.xpose.msra.mxu0 0
        %2039 = vmatprep.subr.bf16.mxu0 0
        %2040 = vmatpush1.bf16.xpose.msra.mxu0 0
        %2041 = vmatprep.subr.bf16.mxu0 0
        %2042 = vmatpush1.bf16.xpose.msra.mxu0 0
        %2043 = vmatprep.subr.bf16.mxu0 0
        %2044 = vmatpush1.bf16.xpose.msra.mxu0 0
        %2045 = vmatprep.subr.bf16.mxu0 0
        %2046 = vmatpush1.bf16.xpose.msra.mxu0 0
        %2047 = vmatprep.subr.bf16.mxu0 0
        %2048 = vmatpush1.bf16.xpose.msra.mxu0 0
        %2049 = vmatprep.subr.bf16.mxu0 0
        %2050 = vmatpush1.bf16.xpose.msra.mxu0 0
        %2051 = vmatprep.subr.bf16.mxu0 0
        %2052 = vmatpush1.bf16.xpose.msra.mxu0 0
        %2053 = vmatprep.subr.bf16.mxu0 0
        %2054 = vmatpush1.bf16.xpose.msra.mxu0 0
        %2055 = vmatprep.subr.bf16.mxu0 0
        %2056 = vmatpush1.bf16.xpose.msra.mxu0 0
        %2057 = vmatprep.mubr.bf16.mxu0 0
        %2058 = vmatmul.mubr.bf16.gmra.mrb[0].mxu0 %v2020
        %v2059 = vpop.f32.mrb[0].mxu0
        %v2060 = vadd.f32 0.0, %v2059
        %v2061 = vpop.f32.mrb[0].mxu0
        %v2062 = vpop.f32.mrb[0].mxu0
        %v2063 = vpop.f32.mrb[0].mxu0
        %2064 = vdwg.mxu0
        %v2065 = vsel %vm1732, %v2060, -inf
        %2066 = vmax.xlane.f32.xlu0 %v2065
        %v2067 = vpop.xlane.xlu0 %2066
        %v2068 = vsub.f32 %v2060, %v2067
        %v2069 = vmul.f32 %v2068, 1.442695
        %v2070 = vpow.pop %v2069
        %v2071 = vsel %vm1732, %v2070, 0.0
        %2072 = vadd.xlane.f32.xlu0 %v2071
        %v2073 = vpop.xlane.xlu0 %2072
        %v2074 = vrcp.pop %v2073
        %v2075 = vmul.f32 %v2070, %v2074
        %v2076 = vpack.c.bf16 %v2075, %v2075
        %v2078 = vsel %vm1732, %v2076, 0
        %v2081 = vsel %vm1748, %v1674, 0
        %2083 = vmatprep.subr.bf16.mxu0 0
        %2084 = vmatpush1.bf16.msra.mxu0 %v2081
        %2085 = vmatprep.subr.bf16.mxu0 0
        %2086 = vmatpush1.bf16.msra.mxu0 0
        %2087 = vmatprep.subr.bf16.mxu0 0
        %2088 = vmatpush1.bf16.msra.mxu0 0
        %2089 = vmatprep.subr.bf16.mxu0 0
        %2090 = vmatpush1.bf16.msra.mxu0 0
        %2091 = vmatprep.subr.bf16.mxu0 0
        %2092 = vmatpush1.bf16.msra.mxu0 0
        %2093 = vmatprep.subr.bf16.mxu0 0
        %2094 = vmatpush1.bf16.msra.mxu0 0
        %2095 = vmatprep.subr.bf16.mxu0 0
        %2096 = vmatpush1.bf16.msra.mxu0 0
        %2097 = vmatprep.subr.bf16.mxu0 0
        %2098 = vmatpush1.bf16.msra.mxu0 0
        %2099 = vmatprep.subr.bf16.mxu0 0
        %2100 = vmatpush1.bf16.msra.mxu0 0
        %2101 = vmatprep.subr.bf16.mxu0 0
        %2102 = vmatpush1.bf16.msra.mxu0 0
        %2103 = vmatprep.subr.bf16.mxu0 0
        %2104 = vmatpush1.bf16.msra.mxu0 0
        %2105 = vmatprep.subr.bf16.mxu0 0
        %2106 = vmatpush1.bf16.msra.mxu0 0
        %2107 = vmatprep.subr.bf16.mxu0 0
        %2108 = vmatpush1.bf16.msra.mxu0 0
        %2109 = vmatprep.subr.bf16.mxu0 0
        %2110 = vmatpush1.bf16.msra.mxu0 0
        %2111 = vmatprep.subr.bf16.mxu0 0
        %2112 = vmatpush1.bf16.msra.mxu0 0
        %2113 = vmatprep.subr.bf16.mxu0 0
        %2114 = vmatpush1.bf16.msra.mxu0 0
        %2115 = vmatprep.mubr.bf16.mxu0 0
        %2116 = vmatmul.mubr.bf16.gmra.mrb[0].mxu0 %v2078
        %v2117 = vpop.f32.mrb[0].mxu0
        %v2118 = vadd.f32 0.0, %v2117
        %v2119 = vpop.f32.mrb[0].mxu0
        %v2120 = vpop.f32.mrb[0].mxu0
        %v2121 = vpop.f32.mrb[0].mxu0
        %2122 = vdwg.mxu0
        %v2123 = vpack.c.bf16 %v2118, %v2118
        %v2124 = vunpack.c.h.b16 %v1677
        %v2125 = vunpack.c.h.b16 %v1679
        %v2126 = vunpack.c.h.b16 %v1681
        %v2127 = vunpack.c.h.b16 %v1683
        %v2128 = vpack.c.b16 %v2125, %v2124
        %v2129 = vpack.c.b16 %v2127, %v2126
        %v2131 = vsel %vm1685, %v2123, 0
        %v2134 = vsel %vm1685, %v2128, 0
        %v2137 = vsel %vm1685, %v2129, 0
        %2139 = vmatprep.subr.bf16.mxu0 0
        %2140 = vmatpush1.bf16.xpose.msra.mxu0 %v2134
        %2141 = vmatprep.subr.bf16.mxu0 0
        %2142 = vmatpush1.bf16.xpose.msra.mxu0 %v2137
        %2143 = vmatprep.subr.bf16.mxu0 0
        %2144 = vmatpush1.bf16.xpose.msra.mxu0 0
        %2145 = vmatprep.subr.bf16.mxu0 0
        %2146 = vmatpush1.bf16.xpose.msra.mxu0 0
        %2147 = vmatprep.subr.bf16.mxu0 0
        %2148 = vmatpush1.bf16.xpose.msra.mxu0 0
        %2149 = vmatprep.subr.bf16.mxu0 0
        %2150 = vmatpush1.bf16.xpose.msra.mxu0 0
        %2151 = vmatprep.subr.bf16.mxu0 0
        %2152 = vmatpush1.bf16.xpose.msra.mxu0 0
        %2153 = vmatprep.subr.bf16.mxu0 0
        %2154 = vmatpush1.bf16.xpose.msra.mxu0 0
        %2155 = vmatprep.subr.bf16.mxu0 0
        %2156 = vmatpush1.bf16.xpose.msra.mxu0 0
        %2157 = vmatprep.subr.bf16.mxu0 0
        %2158 = vmatpush1.bf16.xpose.msra.mxu0 0
        %2159 = vmatprep.subr.bf16.mxu0 0
        %2160 = vmatpush1.bf16.xpose.msra.mxu0 0
        %2161 = vmatprep.subr.bf16.mxu0 0
        %2162 = vmatpush1.bf16.xpose.msra.mxu0 0
        %2163 = vmatprep.subr.bf16.mxu0 0
        %2164 = vmatpush1.bf16.xpose.msra.mxu0 0
        %2165 = vmatprep.subr.bf16.mxu0 0
        %2166 = vmatpush1.bf16.xpose.msra.mxu0 0
        %2167 = vmatprep.subr.bf16.mxu0 0
        %2168 = vmatpush1.bf16.xpose.msra.mxu0 0
        %2169 = vmatprep.subr.bf16.mxu0 0
        %2170 = vmatpush1.bf16.xpose.msra.mxu0 0
        %2171 = vmatprep.mubr.bf16.mxu0 0
        %2172 = vmatmul.mubr.bf16.gmra.mrb[0].mxu0 %v2131
        %v2173 = vpop.f32.mrb[0].mxu0
        %v2174 = vadd.f32 0.0, %v2173
        %v2175 = vpop.f32.mrb[0].mxu0
        %v2176 = vpop.f32.mrb[0].mxu0
        %v2177 = vpop.f32.mrb[0].mxu0
        %2178 = vdwg.mxu0
        %v2179 = vadd.f32 %v2014, %v2174
        %2181 = vrot.lane.b32.xlu0 %v854, 64
        %v2182 = vpop.permute.xlu0 %2181
        %2184 = vrot.lane.b32.xlu0 %v1264, 64
        %v2185 = vpop.permute.xlu0 %2184
        %v2187 = vsel %vm1685, %v2182, 0
        %v2190 = vsel %vm1685, %v2185, 0
        %2192 = vmatprep.subr.bf16.mxu0 0
        %2193 = vmatpush1.bf16.xpose.msra.mxu0 %v2190
        %2194 = vmatprep.subr.bf16.mxu0 0
        %2195 = vmatpush1.bf16.xpose.msra.mxu0 0
        %2196 = vmatprep.subr.bf16.mxu0 0
        %2197 = vmatpush1.bf16.xpose.msra.mxu0 0
        %2198 = vmatprep.subr.bf16.mxu0 0
        %2199 = vmatpush1.bf16.xpose.msra.mxu0 0
        %2200 = vmatprep.subr.bf16.mxu0 0
        %2201 = vmatpush1.bf16.xpose.msra.mxu0 0
        %2202 = vmatprep.subr.bf16.mxu0 0
        %2203 = vmatpush1.bf16.xpose.msra.mxu0 0
        %2204 = vmatprep.subr.bf16.mxu0 0
        %2205 = vmatpush1.bf16.xpose.msra.mxu0 0
        %2206 = vmatprep.subr.bf16.mxu0 0
        %2207 = vmatpush1.bf16.xpose.msra.mxu0 0
        %2208 = vmatprep.subr.bf16.mxu0 0
        %2209 = vmatpush1.bf16.xpose.msra.mxu0 0
        %2210 = vmatprep.subr.bf16.mxu0 0
        %2211 = vmatpush1.bf16.xpose.msra.mxu0 0
        %2212 = vmatprep.subr.bf16.mxu0 0
        %2213 = vmatpush1.bf16.xpose.msra.mxu0 0
        %2214 = vmatprep.subr.bf16.mxu0 0
        %2215 = vmatpush1.bf16.xpose.msra.mxu0 0
        %2216 = vmatprep.subr.bf16.mxu0 0
        %2217 = vmatpush1.bf16.xpose.msra.mxu0 0
        %2218 = vmatprep.subr.bf16.mxu0 0
        %2219 = vmatpush1.bf16.xpose.msra.mxu0 0
        %2220 = vmatprep.subr.bf16.mxu0 0
        %2221 = vmatpush1.bf16.xpose.msra.mxu0 0
        %2222 = vmatprep.subr.bf16.mxu0 0
        %2223 = vmatpush1.bf16.xpose.msra.mxu0 0
        %2224 = vmatprep.mubr.bf16.mxu0 0
        %2225 = vmatmul.mubr.bf16.gmra.mrb[0].mxu0 %v2187
        %v2226 = vpop.f32.mrb[0].mxu0
        %v2227 = vadd.f32 0.0, %v2226
        %v2228 = vpop.f32.mrb[0].mxu0
        %v2229 = vpop.f32.mrb[0].mxu0
        %v2230 = vpop.f32.mrb[0].mxu0
        %2231 = vdwg.mxu0
        %v2232 = vsel %vm1732, %v2227, -inf
        %2233 = vmax.xlane.f32.xlu0 %v2232
        %v2234 = vpop.xlane.xlu0 %2233
        %v2235 = vsub.f32 %v2227, %v2234
        %v2236 = vmul.f32 %v2235, 1.442695
        %v2237 = vpow.pop %v2236
        %v2238 = vsel %vm1732, %v2237, 0.0
        %2239 = vadd.xlane.f32.xlu0 %v2238
        %v2240 = vpop.xlane.xlu0 %2239
        %v2241 = vrcp.pop %v2240
        %v2242 = vmul.f32 %v2237, %v2241
        %v2243 = vpack.c.bf16 %v2242, %v2242
        %2245 = vrot.lane.b32.xlu0 %v1674, 64
        %v2246 = vpop.permute.xlu0 %2245
        %v2248 = vsel %vm1732, %v2243, 0
        %v2251 = vsel %vm1748, %v2246, 0
        %2253 = vmatprep.subr.bf16.mxu0 0
        %2254 = vmatpush1.bf16.msra.mxu0 %v2251
        %2255 = vmatprep.subr.bf16.mxu0 0
        %2256 = vmatpush1.bf16.msra.mxu0 0
        %2257 = vmatprep.subr.bf16.mxu0 0
        %2258 = vmatpush1.bf16.msra.mxu0 0
        %2259 = vmatprep.subr.bf16.mxu0 0
        %2260 = vmatpush1.bf16.msra.mxu0 0
        %2261 = vmatprep.subr.bf16.mxu0 0
        %2262 = vmatpush1.bf16.msra.mxu0 0
        %2263 = vmatprep.subr.bf16.mxu0 0
        %2264 = vmatpush1.bf16.msra.mxu0 0
        %2265 = vmatprep.subr.bf16.mxu0 0
        %2266 = vmatpush1.bf16.msra.mxu0 0
        %2267 = vmatprep.subr.bf16.mxu0 0
        %2268 = vmatpush1.bf16.msra.mxu0 0
        %2269 = vmatprep.subr.bf16.mxu0 0
        %2270 = vmatpush1.bf16.msra.mxu0 0
        %2271 = vmatprep.subr.bf16.mxu0 0
        %2272 = vmatpush1.bf16.msra.mxu0 0
        %2273 = vmatprep.subr.bf16.mxu0 0
        %2274 = vmatpush1.bf16.msra.mxu0 0
        %2275 = vmatprep.subr.bf16.mxu0 0
        %2276 = vmatpush1.bf16.msra.mxu0 0
        %2277 = vmatprep.subr.bf16.mxu0 0
        %2278 = vmatpush1.bf16.msra.mxu0 0
        %2279 = vmatprep.subr.bf16.mxu0 0
        %2280 = vmatpush1.bf16.msra.mxu0 0
        %2281 = vmatprep.subr.bf16.mxu0 0
        %2282 = vmatpush1.bf16.msra.mxu0 0
        %2283 = vmatprep.subr.bf16.mxu0 0
        %2284 = vmatpush1.bf16.msra.mxu0 0
        %2285 = vmatprep.mubr.bf16.mxu0 0
        %2286 = vmatmul.mubr.bf16.gmra.mrb[0].mxu0 %v2248
        %v2287 = vpop.f32.mrb[0].mxu0
        %v2288 = vadd.f32 0.0, %v2287
        %v2289 = vpop.f32.mrb[0].mxu0
        %v2290 = vpop.f32.mrb[0].mxu0
        %v2291 = vpop.f32.mrb[0].mxu0
        %2292 = vdwg.mxu0
        %v2293 = vpack.c.bf16 %v2288, %v2288
        %2294 = vrot.lane.b32.xlu0 %v2128, 64
        %v2295 = vpop.permute.xlu0 %2294
        %2296 = vrot.lane.b32.xlu0 %v2129, 64
        %v2297 = vpop.permute.xlu0 %2296
        %v2299 = vsel %vm1685, %v2293, 0
        %v2302 = vsel %vm1685, %v2295, 0
        %v2305 = vsel %vm1685, %v2297, 0
        %2307 = vmatprep.subr.bf16.mxu0 0
        %2308 = vmatpush1.bf16.xpose.msra.mxu0 %v2302
        %2309 = vmatprep.subr.bf16.mxu0 0
        %2310 = vmatpush1.bf16.xpose.msra.mxu0 %v2305
        %2311 = vmatprep.subr.bf16.mxu0 0
        %2312 = vmatpush1.bf16.xpose.msra.mxu0 0
        %2313 = vmatprep.subr.bf16.mxu0 0
        %2314 = vmatpush1.bf16.xpose.msra.mxu0 0
        %2315 = vmatprep.subr.bf16.mxu0 0
        %2316 = vmatpush1.bf16.xpose.msra.mxu0 0
        %2317 = vmatprep.subr.bf16.mxu0 0
        %2318 = vmatpush1.bf16.xpose.msra.mxu0 0
        %2319 = vmatprep.subr.bf16.mxu0 0
        %2320 = vmatpush1.bf16.xpose.msra.mxu0 0
        %2321 = vmatprep.subr.bf16.mxu0 0
        %2322 = vmatpush1.bf16.xpose.msra.mxu0 0
        %2323 = vmatprep.subr.bf16.mxu0 0
        %2324 = vmatpush1.bf16.xpose.msra.mxu0 0
        %2325 = vmatprep.subr.bf16.mxu0 0
        %2326 = vmatpush1.bf16.xpose.msra.mxu0 0
        %2327 = vmatprep.subr.bf16.mxu0 0
        %2328 = vmatpush1.bf16.xpose.msra.mxu0 0
        %2329 = vmatprep.subr.bf16.mxu0 0
        %2330 = vmatpush1.bf16.xpose.msra.mxu0 0
        %2331 = vmatprep.subr.bf16.mxu0 0
        %2332 = vmatpush1.bf16.xpose.msra.mxu0 0
        %2333 = vmatprep.subr.bf16.mxu0 0
        %2334 = vmatpush1.bf16.xpose.msra.mxu0 0
        %2335 = vmatprep.subr.bf16.mxu0 0
        %2336 = vmatpush1.bf16.xpose.msra.mxu0 0
        %2337 = vmatprep.subr.bf16.mxu0 0
        %2338 = vmatpush1.bf16.xpose.msra.mxu0 0
        %2339 = vmatprep.mubr.bf16.mxu0 0
        %2340 = vmatmul.mubr.bf16.gmra.mrb[0].mxu0 %v2299
        %v2341 = vpop.f32.mrb[0].mxu0
        %v2342 = vadd.f32 0.0, %v2341
        %v2343 = vpop.f32.mrb[0].mxu0
        %v2344 = vpop.f32.mrb[0].mxu0
        %v2345 = vpop.f32.mrb[0].mxu0
        %2346 = vdwg.mxu0
        %v2347 = vadd.f32 %v2179, %v2342
        %v2349 = vsel %vm1685, %v855, 0
        %v2352 = vsel %vm1685, %v1265, 0
        %2354 = vmatprep.subr.bf16.mxu0 0
        %2355 = vmatpush1.bf16.xpose.msra.mxu0 %v2352
        %2356 = vmatprep.subr.bf16.mxu0 0
        %2357 = vmatpush1.bf16.xpose.msra.mxu0 0
        %2358 = vmatprep.subr.bf16.mxu0 0
        %2359 = vmatpush1.bf16.xpose.msra.mxu0 0
        %2360 = vmatprep.subr.bf16.mxu0 0
        %2361 = vmatpush1.bf16.xpose.msra.mxu0 0
        %2362 = vmatprep.subr.bf16.mxu0 0
        %2363 = vmatpush1.bf16.xpose.msra.mxu0 0
        %2364 = vmatprep.subr.bf16.mxu0 0
        %2365 = vmatpush1.bf16.xpose.msra.mxu0 0
        %2366 = vmatprep.subr.bf16.mxu0 0
        %2367 = vmatpush1.bf16.xpose.msra.mxu0 0
        %2368 = vmatprep.subr.bf16.mxu0 0
        %2369 = vmatpush1.bf16.xpose.msra.mxu0 0
        %2370 = vmatprep.subr.bf16.mxu0 0
        %2371 = vmatpush1.bf16.xpose.msra.mxu0 0
        %2372 = vmatprep.subr.bf16.mxu0 0
        %2373 = vmatpush1.bf16.xpose.msra.mxu0 0
        %2374 = vmatprep.subr.bf16.mxu0 0
        %2375 = vmatpush1.bf16.xpose.msra.mxu0 0
        %2376 = vmatprep.subr.bf16.mxu0 0
        %2377 = vmatpush1.bf16.xpose.msra.mxu0 0
        %2378 = vmatprep.subr.bf16.mxu0 0
        %2379 = vmatpush1.bf16.xpose.msra.mxu0 0
        %2380 = vmatprep.subr.bf16.mxu0 0
        %2381 = vmatpush1.bf16.xpose.msra.mxu0 0
        %2382 = vmatprep.subr.bf16.mxu0 0
        %2383 = vmatpush1.bf16.xpose.msra.mxu0 0
        %2384 = vmatprep.subr.bf16.mxu0 0
        %2385 = vmatpush1.bf16.xpose.msra.mxu0 0
        %2386 = vmatprep.mubr.bf16.mxu0 0
        %2387 = vmatmul.mubr.bf16.gmra.mrb[0].mxu0 %v2349
        %v2388 = vpop.f32.mrb[0].mxu0
        %v2389 = vadd.f32 0.0, %v2388
        %v2390 = vpop.f32.mrb[0].mxu0
        %v2391 = vpop.f32.mrb[0].mxu0
        %v2392 = vpop.f32.mrb[0].mxu0
        %2393 = vdwg.mxu0
        %v2394 = vsel %vm1732, %v2389, -inf
        %2395 = vmax.xlane.f32.xlu0 %v2394
        %v2396 = vpop.xlane.xlu0 %2395
        %v2397 = vsub.f32 %v2389, %v2396
        %v2398 = vmul.f32 %v2397, 1.442695
        %v2399 = vpow.pop %v2398
        %v2400 = vsel %vm1732, %v2399, 0.0
        %2401 = vadd.xlane.f32.xlu0 %v2400
        %v2402 = vpop.xlane.xlu0 %2401
        %v2403 = vrcp.pop %v2402
        %v2404 = vmul.f32 %v2399, %v2403
        %v2405 = vpack.c.bf16 %v2404, %v2404
        %v2407 = vsel %vm1732, %v2405, 0
        %v2410 = vsel %vm1748, %v1675, 0
        %2412 = vmatprep.subr.bf16.mxu0 0
        %2413 = vmatpush1.bf16.msra.mxu0 %v2410
        %2414 = vmatprep.subr.bf16.mxu0 0
        %2415 = vmatpush1.bf16.msra.mxu0 0
        %2416 = vmatprep.subr.bf16.mxu0 0
        %2417 = vmatpush1.bf16.msra.mxu0 0
        %2418 = vmatprep.subr.bf16.mxu0 0
        %2419 = vmatpush1.bf16.msra.mxu0 0
        %2420 = vmatprep.subr.bf16.mxu0 0
        %2421 = vmatpush1.bf16.msra.mxu0 0
        %2422 = vmatprep.subr.bf16.mxu0 0
        %2423 = vmatpush1.bf16.msra.mxu0 0
        %2424 = vmatprep.subr.bf16.mxu0 0
        %2425 = vmatpush1.bf16.msra.mxu0 0
        %2426 = vmatprep.subr.bf16.mxu0 0
        %2427 = vmatpush1.bf16.msra.mxu0 0
        %2428 = vmatprep.subr.bf16.mxu0 0
        %2429 = vmatpush1.bf16.msra.mxu0 0
        %2430 = vmatprep.subr.bf16.mxu0 0
        %2431 = vmatpush1.bf16.msra.mxu0 0
        %2432 = vmatprep.subr.bf16.mxu0 0
        %2433 = vmatpush1.bf16.msra.mxu0 0
        %2434 = vmatprep.subr.bf16.mxu0 0
        %2435 = vmatpush1.bf16.msra.mxu0 0
        %2436 = vmatprep.subr.bf16.mxu0 0
        %2437 = vmatpush1.bf16.msra.mxu0 0
        %2438 = vmatprep.subr.bf16.mxu0 0
        %2439 = vmatpush1.bf16.msra.mxu0 0
        %2440 = vmatprep.subr.bf16.mxu0 0
        %2441 = vmatpush1.bf16.msra.mxu0 0
        %2442 = vmatprep.subr.bf16.mxu0 0
        %2443 = vmatpush1.bf16.msra.mxu0 0
        %2444 = vmatprep.mubr.bf16.mxu0 0
        %2445 = vmatmul.mubr.bf16.gmra.mrb[0].mxu0 %v2407
        %v2446 = vpop.f32.mrb[0].mxu0
        %v2447 = vadd.f32 0.0, %v2446
        %v2448 = vpop.f32.mrb[0].mxu0
        %v2449 = vpop.f32.mrb[0].mxu0
        %v2450 = vpop.f32.mrb[0].mxu0
        %2451 = vdwg.mxu0
        %v2452 = vpack.c.bf16 %v2447, %v2447
        %v2457 = vunpack.c.l.b16 %v1678
        %v2458 = vunpack.c.l.b16 %v1680
        %v2459 = vunpack.c.l.b16 %v1682
        %v2460 = vunpack.c.l.b16 %v1684
        %v2461 = vpack.c.b16 %v2458, %v2457
        %v2462 = vpack.c.b16 %v2460, %v2459
        %v2464 = vsel %vm1685, %v2452, 0
        %v2467 = vsel %vm1685, %v2461, 0
        %v2470 = vsel %vm1685, %v2462, 0
        %2472 = vmatprep.subr.bf16.mxu0 0
        %2473 = vmatpush1.bf16.xpose.msra.mxu0 %v2467
        %2474 = vmatprep.subr.bf16.mxu0 0
        %2475 = vmatpush1.bf16.xpose.msra.mxu0 %v2470
        %2476 = vmatprep.subr.bf16.mxu0 0
        %2477 = vmatpush1.bf16.xpose.msra.mxu0 0
        %2478 = vmatprep.subr.bf16.mxu0 0
        %2479 = vmatpush1.bf16.xpose.msra.mxu0 0
        %2480 = vmatprep.subr.bf16.mxu0 0
        %2481 = vmatpush1.bf16.xpose.msra.mxu0 0
        %2482 = vmatprep.subr.bf16.mxu0 0
        %2483 = vmatpush1.bf16.xpose.msra.mxu0 0
        %2484 = vmatprep.subr.bf16.mxu0 0
        %2485 = vmatpush1.bf16.xpose.msra.mxu0 0
        %2486 = vmatprep.subr.bf16.mxu0 0
        %2487 = vmatpush1.bf16.xpose.msra.mxu0 0
        %2488 = vmatprep.subr.bf16.mxu0 0
        %2489 = vmatpush1.bf16.xpose.msra.mxu0 0
        %2490 = vmatprep.subr.bf16.mxu0 0
        %2491 = vmatpush1.bf16.xpose.msra.mxu0 0
        %2492 = vmatprep.subr.bf16.mxu0 0
        %2493 = vmatpush1.bf16.xpose.msra.mxu0 0
        %2494 = vmatprep.subr.bf16.mxu0 0
        %2495 = vmatpush1.bf16.xpose.msra.mxu0 0
        %2496 = vmatprep.subr.bf16.mxu0 0
        %2497 = vmatpush1.bf16.xpose.msra.mxu0 0
        %2498 = vmatprep.subr.bf16.mxu0 0
        %2499 = vmatpush1.bf16.xpose.msra.mxu0 0
        %2500 = vmatprep.subr.bf16.mxu0 0
        %2501 = vmatpush1.bf16.xpose.msra.mxu0 0
        %2502 = vmatprep.subr.bf16.mxu0 0
        %2503 = vmatpush1.bf16.xpose.msra.mxu0 0
        %2504 = vmatprep.mubr.bf16.mxu0 0
        %2505 = vmatmul.mubr.bf16.gmra.mrb[0].mxu0 %v2464
        %v2506 = vpop.f32.mrb[0].mxu0
        %v2507 = vadd.f32 0.0, %v2506
        %v2508 = vpop.f32.mrb[0].mxu0
        %v2509 = vpop.f32.mrb[0].mxu0
        %v2510 = vpop.f32.mrb[0].mxu0
        %2511 = vdwg.mxu0
        %v2512 = vadd.f32 %v2347, %v2507
        %2514 = vrot.lane.b32.xlu0 %v855, 64
        %v2515 = vpop.permute.xlu0 %2514
        %2517 = vrot.lane.b32.xlu0 %v1265, 64
        %v2518 = vpop.permute.xlu0 %2517
        %v2520 = vsel %vm1685, %v2515, 0
        %v2523 = vsel %vm1685, %v2518, 0
        %2525 = vmatprep.subr.bf16.mxu0 0
        %2526 = vmatpush1.bf16.xpose.msra.mxu0 %v2523
        %2527 = vmatprep.subr.bf16.mxu0 0
        %2528 = vmatpush1.bf16.xpose.msra.mxu0 0
        %2529 = vmatprep.subr.bf16.mxu0 0
        %2530 = vmatpush1.bf16.xpose.msra.mxu0 0
        %2531 = vmatprep.subr.bf16.mxu0 0
        %2532 = vmatpush1.bf16.xpose.msra.mxu0 0
        %2533 = vmatprep.subr.bf16.mxu0 0
        %2534 = vmatpush1.bf16.xpose.msra.mxu0 0
        %2535 = vmatprep.subr.bf16.mxu0 0
        %2536 = vmatpush1.bf16.xpose.msra.mxu0 0
        %2537 = vmatprep.subr.bf16.mxu0 0
        %2538 = vmatpush1.bf16.xpose.msra.mxu0 0
        %2539 = vmatprep.subr.bf16.mxu0 0
        %2540 = vmatpush1.bf16.xpose.msra.mxu0 0
        %2541 = vmatprep.subr.bf16.mxu0 0
        %2542 = vmatpush1.bf16.xpose.msra.mxu0 0
        %2543 = vmatprep.subr.bf16.mxu0 0
        %2544 = vmatpush1.bf16.xpose.msra.mxu0 0
        %2545 = vmatprep.subr.bf16.mxu0 0
        %2546 = vmatpush1.bf16.xpose.msra.mxu0 0
        %2547 = vmatprep.subr.bf16.mxu0 0
        %2548 = vmatpush1.bf16.xpose.msra.mxu0 0
        %2549 = vmatprep.subr.bf16.mxu0 0
        %2550 = vmatpush1.bf16.xpose.msra.mxu0 0
        %2551 = vmatprep.subr.bf16.mxu0 0
        %2552 = vmatpush1.bf16.xpose.msra.mxu0 0
        %2553 = vmatprep.subr.bf16.mxu0 0
        %2554 = vmatpush1.bf16.xpose.msra.mxu0 0
        %2555 = vmatprep.subr.bf16.mxu0 0
        %2556 = vmatpush1.bf16.xpose.msra.mxu0 0
        %2557 = vmatprep.mubr.bf16.mxu0 0
        %2558 = vmatmul.mubr.bf16.gmra.mrb[0].mxu0 %v2520
        %v2559 = vpop.f32.mrb[0].mxu0
        %v2560 = vadd.f32 0.0, %v2559
        %v2561 = vpop.f32.mrb[0].mxu0
        %v2562 = vpop.f32.mrb[0].mxu0
        %v2563 = vpop.f32.mrb[0].mxu0
        %2564 = vdwg.mxu0
        %v2565 = vsel %vm1732, %v2560, -inf
        %2566 = vmax.xlane.f32.xlu0 %v2565
        %v2567 = vpop.xlane.xlu0 %2566
        %v2568 = vsub.f32 %v2560, %v2567
        %v2569 = vmul.f32 %v2568, 1.442695
        %v2570 = vpow.pop %v2569
        %v2571 = vsel %vm1732, %v2570, 0.0
        %2572 = vadd.xlane.f32.xlu0 %v2571
        %v2573 = vpop.xlane.xlu0 %2572
        %v2574 = vrcp.pop %v2573
        %v2575 = vmul.f32 %v2570, %v2574
        %v2576 = vpack.c.bf16 %v2575, %v2575
        %2578 = vrot.lane.b32.xlu0 %v1675, 64
        %v2579 = vpop.permute.xlu0 %2578
        %v2581 = vsel %vm1732, %v2576, 0
        %v2584 = vsel %vm1748, %v2579, 0
        %2586 = vmatprep.subr.bf16.mxu0 0
        %2587 = vmatpush1.bf16.msra.mxu0 %v2584
        %2588 = vmatprep.subr.bf16.mxu0 0
        %2589 = vmatpush1.bf16.msra.mxu0 0
        %2590 = vmatprep.subr.bf16.mxu0 0
        %2591 = vmatpush1.bf16.msra.mxu0 0
        %2592 = vmatprep.subr.bf16.mxu0 0
        %2593 = vmatpush1.bf16.msra.mxu0 0
        %2594 = vmatprep.subr.bf16.mxu0 0
        %2595 = vmatpush1.bf16.msra.mxu0 0
        %2596 = vmatprep.subr.bf16.mxu0 0
        %2597 = vmatpush1.bf16.msra.mxu0 0
        %2598 = vmatprep.subr.bf16.mxu0 0
        %2599 = vmatpush1.bf16.msra.mxu0 0
        %2600 = vmatprep.subr.bf16.mxu0 0
        %2601 = vmatpush1.bf16.msra.mxu0 0
        %2602 = vmatprep.subr.bf16.mxu0 0
        %2603 = vmatpush1.bf16.msra.mxu0 0
        %2604 = vmatprep.subr.bf16.mxu0 0
        %2605 = vmatpush1.bf16.msra.mxu0 0
        %2606 = vmatprep.subr.bf16.mxu0 0
        %2607 = vmatpush1.bf16.msra.mxu0 0
        %2608 = vmatprep.subr.bf16.mxu0 0
        %2609 = vmatpush1.bf16.msra.mxu0 0
        %2610 = vmatprep.subr.bf16.mxu0 0
        %2611 = vmatpush1.bf16.msra.mxu0 0
        %2612 = vmatprep.subr.bf16.mxu0 0
        %2613 = vmatpush1.bf16.msra.mxu0 0
        %2614 = vmatprep.subr.bf16.mxu0 0
        %2615 = vmatpush1.bf16.msra.mxu0 0
        %2616 = vmatprep.subr.bf16.mxu0 0
        %2617 = vmatpush1.bf16.msra.mxu0 0
        %2618 = vmatprep.mubr.bf16.mxu0 0
        %2619 = vmatmul.mubr.bf16.gmra.mrb[0].mxu0 %v2581
        %v2620 = vpop.f32.mrb[0].mxu0
        %v2621 = vadd.f32 0.0, %v2620
        %v2622 = vpop.f32.mrb[0].mxu0
        %v2623 = vpop.f32.mrb[0].mxu0
        %v2624 = vpop.f32.mrb[0].mxu0
        %2625 = vdwg.mxu0
        %v2626 = vpack.c.bf16 %v2621, %v2621
        %2627 = vrot.lane.b32.xlu0 %v2461, 64
        %v2628 = vpop.permute.xlu0 %2627
        %2629 = vrot.lane.b32.xlu0 %v2462, 64
        %v2630 = vpop.permute.xlu0 %2629
        %v2632 = vsel %vm1685, %v2626, 0
        %v2635 = vsel %vm1685, %v2628, 0
        %v2638 = vsel %vm1685, %v2630, 0
        %2640 = vmatprep.subr.bf16.mxu0 0
        %2641 = vmatpush1.bf16.xpose.msra.mxu0 %v2635
        %2642 = vmatprep.subr.bf16.mxu0 0
        %2643 = vmatpush1.bf16.xpose.msra.mxu0 %v2638
        %2644 = vmatprep.subr.bf16.mxu0 0
        %2645 = vmatpush1.bf16.xpose.msra.mxu0 0
        %2646 = vmatprep.subr.bf16.mxu0 0
        %2647 = vmatpush1.bf16.xpose.msra.mxu0 0
        %2648 = vmatprep.subr.bf16.mxu0 0
        %2649 = vmatpush1.bf16.xpose.msra.mxu0 0
        %2650 = vmatprep.subr.bf16.mxu0 0
        %2651 = vmatpush1.bf16.xpose.msra.mxu0 0
        %2652 = vmatprep.subr.bf16.mxu0 0
        %2653 = vmatpush1.bf16.xpose.msra.mxu0 0
        %2654 = vmatprep.subr.bf16.mxu0 0
        %2655 = vmatpush1.bf16.xpose.msra.mxu0 0
        %2656 = vmatprep.subr.bf16.mxu0 0
        %2657 = vmatpush1.bf16.xpose.msra.mxu0 0
        %2658 = vmatprep.subr.bf16.mxu0 0
        %2659 = vmatpush1.bf16.xpose.msra.mxu0 0
        %2660 = vmatprep.subr.bf16.mxu0 0
        %2661 = vmatpush1.bf16.xpose.msra.mxu0 0
        %2662 = vmatprep.subr.bf16.mxu0 0
        %2663 = vmatpush1.bf16.xpose.msra.mxu0 0
        %2664 = vmatprep.subr.bf16.mxu0 0
        %2665 = vmatpush1.bf16.xpose.msra.mxu0 0
        %2666 = vmatprep.subr.bf16.mxu0 0
        %2667 = vmatpush1.bf16.xpose.msra.mxu0 0
        %2668 = vmatprep.subr.bf16.mxu0 0
        %2669 = vmatpush1.bf16.xpose.msra.mxu0 0
        %2670 = vmatprep.subr.bf16.mxu0 0
        %2671 = vmatpush1.bf16.xpose.msra.mxu0 0
        %2672 = vmatprep.mubr.bf16.mxu0 0
        %2673 = vmatmul.mubr.bf16.gmra.mrb[0].mxu0 %v2632
        %v2674 = vpop.f32.mrb[0].mxu0
        %v2675 = vadd.f32 0.0, %v2674
        %v2676 = vpop.f32.mrb[0].mxu0
        %v2677 = vpop.f32.mrb[0].mxu0
        %v2678 = vpop.f32.mrb[0].mxu0
        %2679 = vdwg.mxu0
        %v2680 = vadd.f32 %v2512, %v2675
        %v2682 = vsel %vm1685, %v856, 0
        %v2685 = vsel %vm1685, %v1266, 0
        %2687 = vmatprep.subr.bf16.mxu0 0
        %2688 = vmatpush1.bf16.xpose.msra.mxu0 %v2685
        %2689 = vmatprep.subr.bf16.mxu0 0
        %2690 = vmatpush1.bf16.xpose.msra.mxu0 0
        %2691 = vmatprep.subr.bf16.mxu0 0
        %2692 = vmatpush1.bf16.xpose.msra.mxu0 0
        %2693 = vmatprep.subr.bf16.mxu0 0
        %2694 = vmatpush1.bf16.xpose.msra.mxu0 0
        %2695 = vmatprep.subr.bf16.mxu0 0
        %2696 = vmatpush1.bf16.xpose.msra.mxu0 0
        %2697 = vmatprep.subr.bf16.mxu0 0
        %2698 = vmatpush1.bf16.xpose.msra.mxu0 0
        %2699 = vmatprep.subr.bf16.mxu0 0
        %2700 = vmatpush1.bf16.xpose.msra.mxu0 0
        %2701 = vmatprep.subr.bf16.mxu0 0
        %2702 = vmatpush1.bf16.xpose.msra.mxu0 0
        %2703 = vmatprep.subr.bf16.mxu0 0
        %2704 = vmatpush1.bf16.xpose.msra.mxu0 0
        %2705 = vmatprep.subr.bf16.mxu0 0
        %2706 = vmatpush1.bf16.xpose.msra.mxu0 0
        %2707 = vmatprep.subr.bf16.mxu0 0
        %2708 = vmatpush1.bf16.xpose.msra.mxu0 0
        %2709 = vmatprep.subr.bf16.mxu0 0
        %2710 = vmatpush1.bf16.xpose.msra.mxu0 0
        %2711 = vmatprep.subr.bf16.mxu0 0
        %2712 = vmatpush1.bf16.xpose.msra.mxu0 0
        %2713 = vmatprep.subr.bf16.mxu0 0
        %2714 = vmatpush1.bf16.xpose.msra.mxu0 0
        %2715 = vmatprep.subr.bf16.mxu0 0
        %2716 = vmatpush1.bf16.xpose.msra.mxu0 0
        %2717 = vmatprep.subr.bf16.mxu0 0
        %2718 = vmatpush1.bf16.xpose.msra.mxu0 0
        %2719 = vmatprep.mubr.bf16.mxu0 0
        %2720 = vmatmul.mubr.bf16.gmra.mrb[0].mxu0 %v2682
        %v2721 = vpop.f32.mrb[0].mxu0
        %v2722 = vadd.f32 0.0, %v2721
        %v2723 = vpop.f32.mrb[0].mxu0
        %v2724 = vpop.f32.mrb[0].mxu0
        %v2725 = vpop.f32.mrb[0].mxu0
        %2726 = vdwg.mxu0
        %v2727 = vsel %vm1732, %v2722, -inf
        %2728 = vmax.xlane.f32.xlu0 %v2727
        %v2729 = vpop.xlane.xlu0 %2728
        %v2730 = vsub.f32 %v2722, %v2729
        %v2731 = vmul.f32 %v2730, 1.442695
        %v2732 = vpow.pop %v2731
        %v2733 = vsel %vm1732, %v2732, 0.0
        %2734 = vadd.xlane.f32.xlu0 %v2733
        %v2735 = vpop.xlane.xlu0 %2734
        %v2736 = vrcp.pop %v2735
        %v2737 = vmul.f32 %v2732, %v2736
        %v2738 = vpack.c.bf16 %v2737, %v2737
        %v2740 = vsel %vm1732, %v2738, 0
        %v2743 = vsel %vm1748, %v1676, 0
        %2745 = vmatprep.subr.bf16.mxu0 0
        %2746 = vmatpush1.bf16.msra.mxu0 %v2743
        %2747 = vmatprep.subr.bf16.mxu0 0
        %2748 = vmatpush1.bf16.msra.mxu0 0
        %2749 = vmatprep.subr.bf16.mxu0 0
        %2750 = vmatpush1.bf16.msra.mxu0 0
        %2751 = vmatprep.subr.bf16.mxu0 0
        %2752 = vmatpush1.bf16.msra.mxu0 0
        %2753 = vmatprep.subr.bf16.mxu0 0
        %2754 = vmatpush1.bf16.msra.mxu0 0
        %2755 = vmatprep.subr.bf16.mxu0 0
        %2756 = vmatpush1.bf16.msra.mxu0 0
        %2757 = vmatprep.subr.bf16.mxu0 0
        %2758 = vmatpush1.bf16.msra.mxu0 0
        %2759 = vmatprep.subr.bf16.mxu0 0
        %2760 = vmatpush1.bf16.msra.mxu0 0
        %2761 = vmatprep.subr.bf16.mxu0 0
        %2762 = vmatpush1.bf16.msra.mxu0 0
        %2763 = vmatprep.subr.bf16.mxu0 0
        %2764 = vmatpush1.bf16.msra.mxu0 0
        %2765 = vmatprep.subr.bf16.mxu0 0
        %2766 = vmatpush1.bf16.msra.mxu0 0
        %2767 = vmatprep.subr.bf16.mxu0 0
        %2768 = vmatpush1.bf16.msra.mxu0 0
        %2769 = vmatprep.subr.bf16.mxu0 0
        %2770 = vmatpush1.bf16.msra.mxu0 0
        %2771 = vmatprep.subr.bf16.mxu0 0
        %2772 = vmatpush1.bf16.msra.mxu0 0
        %2773 = vmatprep.subr.bf16.mxu0 0
        %2774 = vmatpush1.bf16.msra.mxu0 0
        %2775 = vmatprep.subr.bf16.mxu0 0
        %2776 = vmatpush1.bf16.msra.mxu0 0
        %2777 = vmatprep.mubr.bf16.mxu0 0
        %2778 = vmatmul.mubr.bf16.gmra.mrb[0].mxu0 %v2740
        %v2779 = vpop.f32.mrb[0].mxu0
        %v2780 = vadd.f32 0.0, %v2779
        %v2781 = vpop.f32.mrb[0].mxu0
        %v2782 = vpop.f32.mrb[0].mxu0
        %v2783 = vpop.f32.mrb[0].mxu0
        %2784 = vdwg.mxu0
        %v2785 = vpack.c.bf16 %v2780, %v2780
        %v2786 = vunpack.c.h.b16 %v1678
        %v2787 = vunpack.c.h.b16 %v1680
        %v2788 = vunpack.c.h.b16 %v1682
        %v2789 = vunpack.c.h.b16 %v1684
        %v2790 = vpack.c.b16 %v2787, %v2786
        %v2791 = vpack.c.b16 %v2789, %v2788
        %v2793 = vsel %vm1685, %v2785, 0
        %v2796 = vsel %vm1685, %v2790, 0
        %v2799 = vsel %vm1685, %v2791, 0
        %2801 = vmatprep.subr.bf16.mxu0 0
        %2802 = vmatpush1.bf16.xpose.msra.mxu0 %v2796
        %2803 = vmatprep.subr.bf16.mxu0 0
        %2804 = vmatpush1.bf16.xpose.msra.mxu0 %v2799
        %2805 = vmatprep.subr.bf16.mxu0 0
        %2806 = vmatpush1.bf16.xpose.msra.mxu0 0
        %2807 = vmatprep.subr.bf16.mxu0 0
        %2808 = vmatpush1.bf16.xpose.msra.mxu0 0
        %2809 = vmatprep.subr.bf16.mxu0 0
        %2810 = vmatpush1.bf16.xpose.msra.mxu0 0
        %2811 = vmatprep.subr.bf16.mxu0 0
        %2812 = vmatpush1.bf16.xpose.msra.mxu0 0
        %2813 = vmatprep.subr.bf16.mxu0 0
        %2814 = vmatpush1.bf16.xpose.msra.mxu0 0
        %2815 = vmatprep.subr.bf16.mxu0 0
        %2816 = vmatpush1.bf16.xpose.msra.mxu0 0
        %2817 = vmatprep.subr.bf16.mxu0 0
        %2818 = vmatpush1.bf16.xpose.msra.mxu0 0
        %2819 = vmatprep.subr.bf16.mxu0 0
        %2820 = vmatpush1.bf16.xpose.msra.mxu0 0
        %2821 = vmatprep.subr.bf16.mxu0 0
        %2822 = vmatpush1.bf16.xpose.msra.mxu0 0
        %2823 = vmatprep.subr.bf16.mxu0 0
        %2824 = vmatpush1.bf16.xpose.msra.mxu0 0
        %2825 = vmatprep.subr.bf16.mxu0 0
        %2826 = vmatpush1.bf16.xpose.msra.mxu0 0
        %2827 = vmatprep.subr.bf16.mxu0 0
        %2828 = vmatpush1.bf16.xpose.msra.mxu0 0
        %2829 = vmatprep.subr.bf16.mxu0 0
        %2830 = vmatpush1.bf16.xpose.msra.mxu0 0
        %2831 = vmatprep.subr.bf16.mxu0 0
        %2832 = vmatpush1.bf16.xpose.msra.mxu0 0
        %2833 = vmatprep.mubr.bf16.mxu0 0
        %2834 = vmatmul.mubr.bf16.gmra.mrb[0].mxu0 %v2793
        %v2835 = vpop.f32.mrb[0].mxu0
        %v2836 = vadd.f32 0.0, %v2835
        %v2837 = vpop.f32.mrb[0].mxu0
        %v2838 = vpop.f32.mrb[0].mxu0
        %v2839 = vpop.f32.mrb[0].mxu0
        %2840 = vdwg.mxu0
        %v2841 = vadd.f32 %v2680, %v2836
        %2843 = vrot.lane.b32.xlu0 %v856, 64
        %v2844 = vpop.permute.xlu0 %2843
        %2846 = vrot.lane.b32.xlu0 %v1266, 64
        %v2847 = vpop.permute.xlu0 %2846
        %v2849 = vsel %vm1685, %v2844, 0
        %v2852 = vsel %vm1685, %v2847, 0
        %2854 = vmatprep.subr.bf16.mxu0 0
        %2855 = vmatpush1.bf16.xpose.msra.mxu0 %v2852
        %2856 = vmatprep.subr.bf16.mxu0 0
        %2857 = vmatpush1.bf16.xpose.msra.mxu0 0
        %2858 = vmatprep.subr.bf16.mxu0 0
        %2859 = vmatpush1.bf16.xpose.msra.mxu0 0
        %2860 = vmatprep.subr.bf16.mxu0 0
        %2861 = vmatpush1.bf16.xpose.msra.mxu0 0
        %2862 = vmatprep.subr.bf16.mxu0 0
        %2863 = vmatpush1.bf16.xpose.msra.mxu0 0
        %2864 = vmatprep.subr.bf16.mxu0 0
        %2865 = vmatpush1.bf16.xpose.msra.mxu0 0
        %2866 = vmatprep.subr.bf16.mxu0 0
        %2867 = vmatpush1.bf16.xpose.msra.mxu0 0
        %2868 = vmatprep.subr.bf16.mxu0 0
        %2869 = vmatpush1.bf16.xpose.msra.mxu0 0
        %2870 = vmatprep.subr.bf16.mxu0 0
        %2871 = vmatpush1.bf16.xpose.msra.mxu0 0
        %2872 = vmatprep.subr.bf16.mxu0 0
        %2873 = vmatpush1.bf16.xpose.msra.mxu0 0
        %2874 = vmatprep.subr.bf16.mxu0 0
        %2875 = vmatpush1.bf16.xpose.msra.mxu0 0
        %2876 = vmatprep.subr.bf16.mxu0 0
        %2877 = vmatpush1.bf16.xpose.msra.mxu0 0
        %2878 = vmatprep.subr.bf16.mxu0 0
        %2879 = vmatpush1.bf16.xpose.msra.mxu0 0
        %2880 = vmatprep.subr.bf16.mxu0 0
        %2881 = vmatpush1.bf16.xpose.msra.mxu0 0
        %2882 = vmatprep.subr.bf16.mxu0 0
        %2883 = vmatpush1.bf16.xpose.msra.mxu0 0
        %2884 = vmatprep.subr.bf16.mxu0 0
        %2885 = vmatpush1.bf16.xpose.msra.mxu0 0
        %2886 = vmatprep.mubr.bf16.mxu0 0
        %2887 = vmatmul.mubr.bf16.gmra.mrb[0].mxu0 %v2849
        %v2888 = vpop.f32.mrb[0].mxu0
        %v2889 = vadd.f32 0.0, %v2888
        %v2890 = vpop.f32.mrb[0].mxu0
        %v2891 = vpop.f32.mrb[0].mxu0
        %v2892 = vpop.f32.mrb[0].mxu0
        %2893 = vdwg.mxu0
        %v2894 = vsel %vm1732, %v2889, -inf
        %2895 = vmax.xlane.f32.xlu0 %v2894
        %v2896 = vpop.xlane.xlu0 %2895
        %v2897 = vsub.f32 %v2889, %v2896
        %v2898 = vmul.f32 %v2897, 1.442695
        %v2899 = vpow.pop %v2898
        %v2900 = vsel %vm1732, %v2899, 0.0
        %2901 = vadd.xlane.f32.xlu0 %v2900
        %v2902 = vpop.xlane.xlu0 %2901
        %v2903 = vrcp.pop %v2902
        %v2904 = vmul.f32 %v2899, %v2903
        %v2905 = vpack.c.bf16 %v2904, %v2904
        %2907 = vrot.lane.b32.xlu0 %v1676, 64
        %v2908 = vpop.permute.xlu0 %2907
        %v2910 = vsel %vm1732, %v2905, 0
        %v2913 = vsel %vm1748, %v2908, 0
        %2915 = vmatprep.subr.bf16.mxu0 0
        %2916 = vmatpush1.bf16.msra.mxu0 %v2913
        %2917 = vmatprep.subr.bf16.mxu0 0
        %2918 = vmatpush1.bf16.msra.mxu0 0
        %2919 = vmatprep.subr.bf16.mxu0 0
        %2920 = vmatpush1.bf16.msra.mxu0 0
        %2921 = vmatprep.subr.bf16.mxu0 0
        %2922 = vmatpush1.bf16.msra.mxu0 0
        %2923 = vmatprep.subr.bf16.mxu0 0
        %2924 = vmatpush1.bf16.msra.mxu0 0
        %2925 = vmatprep.subr.bf16.mxu0 0
        %2926 = vmatpush1.bf16.msra.mxu0 0
        %2927 = vmatprep.subr.bf16.mxu0 0
        %2928 = vmatpush1.bf16.msra.mxu0 0
        %2929 = vmatprep.subr.bf16.mxu0 0
        %2930 = vmatpush1.bf16.msra.mxu0 0
        %2931 = vmatprep.subr.bf16.mxu0 0
        %2932 = vmatpush1.bf16.msra.mxu0 0
        %2933 = vmatprep.subr.bf16.mxu0 0
        %2934 = vmatpush1.bf16.msra.mxu0 0
        %2935 = vmatprep.subr.bf16.mxu0 0
        %2936 = vmatpush1.bf16.msra.mxu0 0
        %2937 = vmatprep.subr.bf16.mxu0 0
        %2938 = vmatpush1.bf16.msra.mxu0 0
        %2939 = vmatprep.subr.bf16.mxu0 0
        %2940 = vmatpush1.bf16.msra.mxu0 0
        %2941 = vmatprep.subr.bf16.mxu0 0
        %2942 = vmatpush1.bf16.msra.mxu0 0
        %2943 = vmatprep.subr.bf16.mxu0 0
        %2944 = vmatpush1.bf16.msra.mxu0 0
        %2945 = vmatprep.subr.bf16.mxu0 0
        %2946 = vmatpush1.bf16.msra.mxu0 0
        %2947 = vmatprep.mubr.bf16.mxu0 0
        %2948 = vmatmul.mubr.bf16.gmra.mrb[0].mxu0 %v2910
        %v2949 = vpop.f32.mrb[0].mxu0
        %v2950 = vadd.f32 0.0, %v2949
        %v2951 = vpop.f32.mrb[0].mxu0
        %v2952 = vpop.f32.mrb[0].mxu0
        %v2953 = vpop.f32.mrb[0].mxu0
        %2954 = vdwg.mxu0
        %v2955 = vpack.c.bf16 %v2950, %v2950
        %2956 = vrot.lane.b32.xlu0 %v2790, 64
        %v2957 = vpop.permute.xlu0 %2956
        %2958 = vrot.lane.b32.xlu0 %v2791, 64
        %v2959 = vpop.permute.xlu0 %2958
        %v2961 = vsel %vm1685, %v2955, 0
        %v2964 = vsel %vm1685, %v2957, 0
        %v2967 = vsel %vm1685, %v2959, 0
        %2969 = vmatprep.subr.bf16.mxu0 0
        %2970 = vmatpush1.bf16.xpose.msra.mxu0 %v2964
        %2971 = vmatprep.subr.bf16.mxu0 0
        %2972 = vmatpush1.bf16.xpose.msra.mxu0 %v2967
        %2973 = vmatprep.subr.bf16.mxu0 0
        %2974 = vmatpush1.bf16.xpose.msra.mxu0 0
        %2975 = vmatprep.subr.bf16.mxu0 0
        %2976 = vmatpush1.bf16.xpose.msra.mxu0 0
        %2977 = vmatprep.subr.bf16.mxu0 0
        %2978 = vmatpush1.bf16.xpose.msra.mxu0 0
        %2979 = vmatprep.subr.bf16.mxu0 0
        %2980 = vmatpush1.bf16.xpose.msra.mxu0 0
        %2981 = vmatprep.subr.bf16.mxu0 0
        %2982 = vmatpush1.bf16.xpose.msra.mxu0 0
        %2983 = vmatprep.subr.bf16.mxu0 0
        %2984 = vmatpush1.bf16.xpose.msra.mxu0 0
        %2985 = vmatprep.subr.bf16.mxu0 0
        %2986 = vmatpush1.bf16.xpose.msra.mxu0 0
        %2987 = vmatprep.subr.bf16.mxu0 0
        %2988 = vmatpush1.bf16.xpose.msra.mxu0 0
        %2989 = vmatprep.subr.bf16.mxu0 0
        %2990 = vmatpush1.bf16.xpose.msra.mxu0 0
        %2991 = vmatprep.subr.bf16.mxu0 0
        %2992 = vmatpush1.bf16.xpose.msra.mxu0 0
        %2993 = vmatprep.subr.bf16.mxu0 0
        %2994 = vmatpush1.bf16.xpose.msra.mxu0 0
        %2995 = vmatprep.subr.bf16.mxu0 0
        %2996 = vmatpush1.bf16.xpose.msra.mxu0 0
        %2997 = vmatprep.subr.bf16.mxu0 0
        %2998 = vmatpush1.bf16.xpose.msra.mxu0 0
        %2999 = vmatprep.subr.bf16.mxu0 0
        %3000 = vmatpush1.bf16.xpose.msra.mxu0 0
        %3001 = vmatprep.mubr.bf16.mxu0 0
        %3002 = vmatmul.mubr.bf16.gmra.mrb[0].mxu0 %v2961
        %v3003 = vpop.f32.mrb[0].mxu0
        %v3004 = vadd.f32 0.0, %v3003
        %v3005 = vpop.f32.mrb[0].mxu0
        %v3006 = vpop.f32.mrb[0].mxu0
        %v3007 = vpop.f32.mrb[0].mxu0
        %3008 = vdwg.mxu0
        %v3009 = vadd.f32 %v2841, %v3004
        %v3010 = vld [vmem:[#allocation2] sm:$0xff]
        %v3011 = vadd.f32 %v3010, %v3009
        %3012 = vst.msk [vmem:[#allocation2] sm:$0xff] %vm667, %v3011
        // Predicated region
        $region57: #{custom_attention_forward.1} parent=51 // pred_check
          %p3013 = pneg %p436
        $region58: #{custom_attention_forward.1} parent=51 // pred_check_branch
          %3015 = sbr.rel (%p3013) target = $region60
        $region59: #{custom_attention_forward.1} parent=51 // pred_region
          %v3016 = vld [vmem:[#allocation2] sm:$0xff]
          %v3017 = vld [vmem:[%s7] sm:$0x1]
          %v3019 = vlaneseq
          %v3020 = vshrl.u32 %v3019, 7
          %v3021 = vsub.s32 0, %v3020
          %v3022 = vrot.slane %v3017, %v3021
          %v3024 = vadd.f32 %v3016, %v3022
          %3025 = vst.msk [vmem:[%s398] sm:$0xff] %vm667, %v3024
        $region60: #{custom_attention_forward.1} parent=51 // pred_fallthru
          _
        %s3026 = sand.u32 %s245, 1
        %s3027 = scalar_lea.sflag [#allocation4], %s3026
        %s3028 = sand.u32 %s245, 1
        %s3029 = smul.addr %s3028, 8
        %s3030 = scalar_lea.vmem [#allocation3], %s3029
        // Predicated region
        $region61: #{custom_attention_forward.1} parent=51 // pred_check
          %p3031 = pneg %p255
        $region62: #{custom_attention_forward.1} parent=51 // pred_check_branch
          %3033 = sbr.rel (%p3031) target = $region64
        $region63: #{custom_attention_forward.1} parent=51 // pred_region
          %s3035 = ssub.s32 128, 128
          %3036 = vsyncadd %s3027, %s3035
          %s3037 = smul.addr %s26, 128
          %s3038 = scalar_lea.hbm %s8, %s3037
          %s3040 = sshll.u32 %s3030, 4
          %s3041 = int_to_ptr.vmem [resolvable:$true] %s3040
          %3043 = dma.vmem_to_hbm [thread:$0]  %s3041, 128, %s3038, %s3027
        $region64: #{custom_attention_forward.1} parent=51 // pred_fallthru
          _
      $region52: #{custom_attention_forward.1} parent=5 // pred_fallthru
        _
      %p3044 = scmp.le.s32.totalorder 2, %s17
      // Predicated region
      $region65: #{custom_attention_forward.1} parent=5 // pred_check
        %p3045 = pneg %p3044
      $region66: #{custom_attention_forward.1} parent=5 // pred_check_branch
        %3047 = sbr.rel (%p3045) target = $region68
      $region67: #{custom_attention_forward.1} parent=5 // pred_region
        %s3048 = ssub.s32 %s17, 2
        // Predicated region
        $region69: #{custom_attention_forward.1} parent=67 // pred_check
          %p3049 = pneg %p261
        $region70: #{custom_attention_forward.1} parent=67 // pred_check_branch
          %3051 = sbr.rel (%p3049) target = $region72
        $region71: #{custom_attention_forward.1} parent=67 // pred_region
          %s3052 = sand.u32 %s246, 1
          %s3053 = scalar_lea.sflag [#allocation4], %s3052
          %s3054 = sand.u32 %s246, 1
          %s3055 = smul.addr %s3054, 8
          %s3056 = scalar_lea.vmem [#allocation3], %s3055
          %3057 = dma.done %s3053, 128
        $region72: #{custom_attention_forward.1} parent=67 // pred_fallthru
          _
      $region68: #{custom_attention_forward.1} parent=5 // pred_fallthru
        _
    $region6: #{custom_attention_forward.1} parent=1 // loop_footer
      %s21 = sadd.s32 1, %s17
    $region7: #{custom_attention_forward.1} parent=1 // loop_footer_branch
      %16 = sbr.rel target = $region3
    $region8: #{custom_attention_forward.1} parent=1 // loop_exit
      _
    %3058 = vsyncpa [#allocation4], 1
    %s3059 = scalar_lea.sflag [#allocation4], 1
    %3060 = vsyncpa %s3059, 1

</llo_original>
